<compile_context>
chip_gen: v6e
topology: v6e:2x2x1
jax: 0.10.0
libtpu: 0.0.40
codegen_flags: <defaults>
</compile_context>

<pallas_src>
import functools

import jax
import jax.numpy as jnp
from jax.experimental import pallas as pl
from jax.experimental.pallas import tpu as pltpu


def _round_up(x, m):
    return ((x + m - 1) // m) * m


# ---------------------------------------------------------------------------
# Kernel 1: per-tile partial sum / sum-of-squares (BatchNorm statistics)
# Each grid step writes its own partial -> no serial resident accumulator, the
# grid axis is "parallel" (v7x: both TensorCores work on the reduction).
# ---------------------------------------------------------------------------
def _bn_stats_kernel(x_ref, sum_ref, sq_ref):
    x = x_ref[...].astype(jnp.float32)
    sum_ref[0] = jnp.sum(x, axis=0, keepdims=True)
    sq_ref[0] = jnp.sum(x * x, axis=0, keepdims=True)


def bn_stats(x2d, tile_rows=512):
    """x2d: (M, C). Returns per-channel (sum, sum_sq), each shape (C,).

    Zero rows added by padding contribute 0 to both sums, so callers divide by
    the *true* element count.
    """
    m, c = x2d.shape
    tile = min(tile_rows, _round_up(m, 8))
    m_pad = _round_up(m, tile)
    if m_pad != m:
        x2d = jnp.pad(x2d, ((0, m_pad - m), (0, 0)))
    g = m_pad // tile

    part_s, part_q = pl.pallas_call(
        _bn_stats_kernel,
        grid=(g,),
        in_specs=[pl.BlockSpec((tile, c), lambda i: (i, 0))],
        out_specs=[
            pl.BlockSpec((1, 1, c), lambda i: (i, 0, 0)),
            pl.BlockSpec((1, 1, c), lambda i: (i, 0, 0)),
        ],
        out_shape=(
            jax.ShapeDtypeStruct((g, 1, c), jnp.float32),
            jax.ShapeDtypeStruct((g, 1, c), jnp.float32),
        ),
        compiler_params=pltpu.CompilerParams(dimension_semantics=("parallel",)),
    )(x2d)
    return jnp.sum(part_s, axis=0)[0], jnp.sum(part_q, axis=0)[0]


# ---------------------------------------------------------------------------
# Kernel 2: fused BN-apply + direct conv (shifted-tap matmuls) + ReLU
# One grid step = one image; the whole padded NHWC image lives in VMEM.
# ---------------------------------------------------------------------------
def _bn_conv_relu_kernel(x_ref, scale_ref, shiftmap_ref, w_ref, o_ref, *,
                         kh, kw, stride, oh, ow, c_in):
    # x_ref:        (1, Hp, Wp, C_in)  zero-padded raw input (NHWC)
    # scale_ref:    (1, 1, C_in)       gamma * inv_std
    # shiftmap_ref: (Hp, Wp, C_in)     (beta - mean*scale), zeroed on padding ring
    # w_ref:        (KH*KW, C_in, C_out_pad)  bf16
    # o_ref:        (1, OH*OW, C_out_pad)     lane-dense output slab
    x = x_ref[0].astype(jnp.float32)                       # (Hp, Wp, C_in)
    x_bn = x * scale_ref[...] + shiftmap_ref[...]          # BN; padding stays 0

    c_out_pad = o_ref.shape[-1]
    acc = jnp.zeros((oh * ow, c_out_pad), jnp.float32)
    t = 0
    for dh in range(kh):
        for dw in range(kw):
            patch = x_bn[dh:dh + (oh - 1) * stride + 1:stride,
                         dw:dw + (ow - 1) * stride + 1:stride, :]   # (OH, OW, C_in)
            patch2d = patch.reshape(oh * ow, c_in).astype(jnp.bfloat16)
            acc = acc + jnp.dot(patch2d, w_ref[t],
                                preferred_element_type=jnp.float32)
            t += 1

    o_ref[0] = jnp.maximum(acc, 0.0).astype(o_ref.dtype)


def bn_conv_relu(x_pad, scale3, shift_map, w_r, *, kh, kw, stride, oh, ow):
    n, hp, wp, c_in = x_pad.shape
    c_out_pad = w_r.shape[-1]
    kernel = functools.partial(_bn_conv_relu_kernel, kh=kh, kw=kw, stride=stride,
                               oh=oh, ow=ow, c_in=c_in)
    # TODO(synk): add spatial (halo) tiling for images too large to hold one
    # padded image per grid step in VMEM (cap against v7x's 64 MiB).
    return pl.pallas_call(
        kernel,
        grid=(n,),
        in_specs=[
            pl.BlockSpec((1, hp, wp, c_in), lambda i: (i, 0, 0, 0)),
            pl.BlockSpec((1, 1, c_in), lambda i: (0, 0, 0)),
            pl.BlockSpec((hp, wp, c_in), lambda i: (0, 0, 0)),
            pl.BlockSpec((kh * kw, c_in, c_out_pad), lambda i: (0, 0, 0)),
        ],
        out_specs=pl.BlockSpec((1, oh * ow, c_out_pad), lambda i: (i, 0, 0)),
        out_shape=jax.ShapeDtypeStruct((n, oh * ow, c_out_pad), jnp.float32),
        compiler_params=pltpu.CompilerParams(dimension_semantics=("parallel",)),
    )(x_pad, scale3, shift_map, w_r)


# ---------------------------------------------------------------------------
# Full forward pass
# ---------------------------------------------------------------------------
@functools.partial(jax.jit, static_argnames=("stride", "padding"))
def relu_conv_bn(x_nchw, conv_w, gamma, beta, *, stride, padding, eps=1e-5):
    """Forward of ReLUConvBN: BatchNorm2d(train-mode) -> Conv2d(bias=False) -> ReLU.

    x_nchw : (N, C_in, H, W)       conv_w : (C_out, C_in, KH, KW)
    gamma, beta : (C_in,)          returns (N, C_out, OH, OW)
    """
    n, c_in, h, w = x_nchw.shape
    c_out, _, kh, kw = conv_w.shape
    hp, wp = h + 2 * padding, w + 2 * padding
    oh = (hp - kh) // stride + 1
    ow = (wp - kw) // stride + 1
    c_out_pad = _round_up(c_out, 128)

    # --- one XLA copy: NCHW -> NHWC + conv zero padding ---
    # TODO(synk): accept NHWC input / fold this transpose+pad into the Pallas
    # index_maps to drop the remaining XLA copy pass.
    x_nhwc = jnp.transpose(x_nchw, (0, 2, 3, 1)).astype(jnp.float32)
    x_pad = jnp.pad(x_nhwc,
                    ((0, 0), (padding, padding), (padding, padding), (0, 0)))

    # --- BatchNorm statistics (Pallas reduction over the padded slab; the zero
    #     padding adds 0 to both sums, so dividing by the true count is exact) ---
    m_true = n * h * w
    s, sq = bn_stats(x_pad.reshape(n * hp * wp, c_in))
    mean = s / m_true
    var = sq / m_true - mean * mean                 # biased variance (PyTorch BN)
    inv_std = jax.lax.rsqrt(var + eps)
    scale = gamma * inv_std
    shift = beta - mean * scale

    # Shift map is zero on the conv padding ring: padded pixels are 0 before BN,
    # and x*scale + shift*mask keeps them exactly 0 (the scale can be applied
    # everywhere, only the shift must not leak into the zero padding).
    scale3 = scale.reshape(1, 1, c_in).astype(jnp.float32)
    interior = jnp.zeros((hp, wp, 1), jnp.float32)
    interior = interior.at[padding:padding + h, padding:padding + w, :].set(1.0)
    shift_map = (interior * shift.reshape(1, 1, c_in)).astype(jnp.float32)

    # weights: (C_out, C_in, KH, KW) -> (KH*KW, C_in, C_out_pad), bf16 operands
    w_r = jnp.transpose(conv_w, (2, 3, 1, 0)).reshape(kh * kw, c_in, c_out)
    w_r = jnp.pad(w_r, ((0, 0), (0, 0), (0, c_out_pad - c_out))).astype(jnp.bfloat16)

    # --- fused BN-apply + conv + ReLU (single Pallas pass over the activation) ---
    out3 = bn_conv_relu(x_pad, scale3, shift_map, w_r,
                        kh=kh, kw=kw, stride=stride, oh=oh, ow=ow)
    out = out3[:, :, :c_out].reshape(n, oh, ow, c_out)
    return jnp.transpose(out, (0, 3, 1, 2))         # back to NCHW


# ---------------------------------------------------------------------------
# Pure-JAX reference (for a sanity check)
# ---------------------------------------------------------------------------
def relu_conv_bn_ref(x, conv_w, gamma, beta, *, stride, padding, eps=1e-5):
    mean = jnp.mean(x, axis=(0, 2, 3), keepdims=True)
    var = jnp.mean((x - mean) ** 2, axis=(0, 2, 3), keepdims=True)
    x_bn = (x - mean) * jax.lax.rsqrt(var + eps)
    x_bn = x_bn * gamma[None, :, None, None] + beta[None, :, None, None]
    y = jax.lax.conv_general_dilated(
        x_bn, conv_w, window_strides=(stride, stride),
        padding=[(padding, padding), (padding, padding)],
        dimension_numbers=("NCHW", "OIHW", "NCHW"),
    )
    return jnp.maximum(y, 0.0)


if __name__ == "__main__":
    # Module config: ReLUConvBN(C_in=4, C_out=8, kernel_size=3, stride=1, padding=1)
    N, C_IN, H, W = 2, 4, 16, 16
    C_OUT, K, STRIDE, PADDING = 8, 3, 1, 1

    key = jax.random.PRNGKey(0)
    kx, kw_, kg, kb = jax.random.split(key, 4)
    x = jax.random.normal(kx, (N, C_IN, H, W), dtype=jnp.float32)
    conv_w = 0.1 * jax.random.normal(kw_, (C_OUT, C_IN, K, K), dtype=jnp.float32)
    gamma = 1.0 + 0.1 * jax.random.normal(kg, (C_IN,), dtype=jnp.float32)
    beta = 0.1 * jax.random.normal(kb, (C_IN,), dtype=jnp.float32)

    out = relu_conv_bn(x, conv_w, gamma, beta, stride=STRIDE, padding=PADDING)
    out = jax.block_until_ready(out)

    ref = relu_conv_bn_ref(x, conv_w, gamma, beta, stride=STRIDE, padding=PADDING)
    assert out.shape == (N, C_OUT, H, W)
    # bf16 MXU operands with f32 accumulation -> allow a slightly looser tolerance
    assert jnp.max(jnp.abs(out - ref)) < 3e-2

    print("KERNEL_OK")
</pallas_src>

<mosaic_0001>
module attributes {stable_mosaic.version = 11 : i64} {
  func.func @_bn_stats_kernel(%arg0: i32, %arg1: memref<512x4xf32, #tpu.memory_space<vmem>>, %arg2: memref<1x1x4xf32, #tpu.memory_space<vmem>>, %arg3: memref<1x1x4xf32, #tpu.memory_space<vmem>>) attributes {dimension_semantics = [#tpu.dimension_semantics<parallel>], iteration_bounds = array<i64: 2>, scalar_prefetch = 0 : i64, scratch_operands = 0 : i64, tpu.core_type = #tpu.core_type<tc>, window_params = [{transform_indices = @transform_0, window_bounds = array<i64: 512, 4>}, {transform_indices = @transform_1, window_bounds = array<i64: 1, 1, 4>}, {transform_indices = @transform_2, window_bounds = array<i64: 1, 1, 4>}]} {
    %c0 = arith.constant 0 : index
    %c0_0 = arith.constant 0 : index
    %0 = vector.load %arg1[%c0, %c0_0] : memref<512x4xf32, #tpu.memory_space<vmem>>, vector<512x4xf32>
    %cst = arith.constant dense<0.000000e+00> : vector<4xf32>
    %1 = vector.multi_reduction <add>, %0, %cst [0] : vector<512x4xf32> to vector<4xf32>
    %2 = vector.shape_cast %1 : vector<4xf32> to vector<1x4xf32>
    %c0_1 = arith.constant 0 : index
    %c0_2 = arith.constant 0 : index
    %c0_3 = arith.constant 0 : index
    %3 = vector.load %arg2[%c0_1, %c0_2, %c0_3] : memref<1x1x4xf32, #tpu.memory_space<vmem>>, vector<1x1x4xf32>
    %4 = vector.shape_cast %3 : vector<1x1x4xf32> to vector<1x4xf32>
    %5 = vector.shape_cast %2 : vector<1x4xf32> to vector<1x1x4xf32>
    tpu.vector_store %arg2[%c0_1, %c0_2, %c0_3], %5 {strides = array<i32>} : memref<1x1x4xf32, #tpu.memory_space<vmem>>, vector<1x1x4xf32>,
    %6 = arith.mulf %0, %0 : vector<512x4xf32>
    %cst_4 = arith.constant dense<0.000000e+00> : vector<4xf32>
    %7 = vector.multi_reduction <add>, %6, %cst_4 [0] : vector<512x4xf32> to vector<4xf32>
    %8 = vector.shape_cast %7 : vector<4xf32> to vector<1x4xf32>
    %c0_5 = arith.constant 0 : index
    %c0_6 = arith.constant 0 : index
    %c0_7 = arith.constant 0 : index
    %9 = vector.load %arg3[%c0_5, %c0_6, %c0_7] : memref<1x1x4xf32, #tpu.memory_space<vmem>>, vector<1x1x4xf32>
    %10 = vector.shape_cast %9 : vector<1x1x4xf32> to vector<1x4xf32>
    %11 = vector.shape_cast %8 : vector<1x4xf32> to vector<1x1x4xf32>
    tpu.vector_store %arg3[%c0_5, %c0_6, %c0_7], %11 {strides = array<i32>} : memref<1x1x4xf32, #tpu.memory_space<vmem>>, vector<1x1x4xf32>,
    return
  }
  func.func @transform_0(%arg0: i32) -> (i32, i32) {
    %c0_i32 = arith.constant 0 : i32
    %c0_i32_0 = arith.constant 0 : i32
    return %arg0, %c0_i32 : i32, i32
  }
  func.func @transform_1(%arg0: i32) -> (i32, i32, i32) {
    %c0_i32 = arith.constant 0 : i32
    %c0_i32_0 = arith.constant 0 : i32
    %c0_i32_1 = arith.constant 0 : i32
    return %arg0, %c0_i32, %c0_i32_0 : i32, i32, i32
  }
  func.func @transform_2(%arg0: i32) -> (i32, i32, i32) {
    %c0_i32 = arith.constant 0 : i32
    %c0_i32_0 = arith.constant 0 : i32
    %c0_i32_1 = arith.constant 0 : i32
    return %arg0, %c0_i32, %c0_i32_0 : i32, i32, i32
  }
}

module attributes {stable_mosaic.version = 11 : i64} {
  func.func @_bn_conv_relu_kernel(%arg0: i32, %arg1: memref<1x18x18x4xf32, #tpu.memory_space<vmem>>, %arg2: memref<1x1x4xf32, #tpu.memory_space<vmem>>, %arg3: memref<18x18x4xf32, #tpu.memory_space<vmem>>, %arg4: memref<9x4x128xbf16, #tpu.memory_space<vmem>>, %arg5: memref<1x256x128xf32, #tpu.memory_space<vmem>>) attributes {dimension_semantics = [#tpu.dimension_semantics<parallel>], iteration_bounds = array<i64: 2>, scalar_prefetch = 0 : i64, scratch_operands = 0 : i64, tpu.core_type = #tpu.core_type<tc>, window_params = [{transform_indices = @transform_0, window_bounds = array<i64: 1, 18, 18, 4>}, {pipeline_mode = #tpu.pipeline_mode<synchronous>, transform_indices = @transform_1, window_bounds = array<i64: 1, 1, 4>}, {pipeline_mode = #tpu.pipeline_mode<synchronous>, transform_indices = @transform_2, window_bounds = array<i64: 18, 18, 4>}, {pipeline_mode = #tpu.pipeline_mode<synchronous>, transform_indices = @transform_3, window_bounds = array<i64: 9, 4, 128>}, {transform_indices = @transform_4, window_bounds = array<i64: 1, 256, 128>}]} {
    %c0 = arith.constant 0 : index
    %c0_0 = arith.constant 0 : index
    %c0_1 = arith.constant 0 : index
    %c0_2 = arith.constant 0 : index
    %0 = vector.load %arg1[%c0, %c0_0, %c0_1, %c0_2] : memref<1x18x18x4xf32, #tpu.memory_space<vmem>>, vector<1x18x18x4xf32>
    %1 = vector.shape_cast %0 : vector<1x18x18x4xf32> to vector<18x18x4xf32>
    %c0_3 = arith.constant 0 : index
    %c0_4 = arith.constant 0 : index
    %c0_5 = arith.constant 0 : index
    %2 = vector.load %arg2[%c0_3, %c0_4, %c0_5] : memref<1x1x4xf32, #tpu.memory_space<vmem>>, vector<1x1x4xf32>
    %3 = vector.broadcast %2 : vector<1x1x4xf32> to vector<18x18x4xf32>
    %4 = arith.mulf %1, %3 : vector<18x18x4xf32>
    %c0_6 = arith.constant 0 : index
    %c0_7 = arith.constant 0 : index
    %c0_8 = arith.constant 0 : index
    %5 = vector.load %arg3[%c0_6, %c0_7, %c0_8] : memref<18x18x4xf32, #tpu.memory_space<vmem>>, vector<18x18x4xf32>
    %6 = arith.addf %4, %5 : vector<18x18x4xf32>
    %cst = arith.constant 0.000000e+00 : f32
    %7 = vector.broadcast %cst : f32 to vector<256x128xf32>
    %8 = vector.extract_strided_slice %6 {offsets = [0, 0, 0], sizes = [16, 16, 4], strides = [1, 1, 1]} : vector<18x18x4xf32> to vector<16x16x4xf32>
    %9 = vector.shape_cast %8 : vector<16x16x4xf32> to vector<256x4xf32>
    %10 = arith.truncf %9 : vector<256x4xf32> to vector<256x4xbf16>
    %c0_9 = arith.constant 0 : index
    %c0_10 = arith.constant 0 : index
    %c0_11 = arith.constant 0 : index
    %11 = vector.load %arg4[%c0_9, %c0_10, %c0_11] : memref<9x4x128xbf16, #tpu.memory_space<vmem>>, vector<1x4x128xbf16>
    %12 = vector.shape_cast %11 : vector<1x4x128xbf16> to vector<4x128xbf16>
    %cst_12 = arith.constant dense<0.000000e+00> : vector<256x128xf32>
    %13 = tpu.matmul %10, %12, %cst_12 {dimension_numbers = #tpu.dot_dimension_numbers<[1], [0], [0], [1], [0, 0, 1, 1], [], []>} : vector<256x4xbf16>, vector<4x128xbf16>, vector<256x128xf32> -> vector<256x128xf32>
    %14 = arith.addf %7, %13 : vector<256x128xf32>
    %15 = vector.extract_strided_slice %6 {offsets = [0, 1, 0], sizes = [16, 16, 4], strides = [1, 1, 1]} : vector<18x18x4xf32> to vector<16x16x4xf32>
    %16 = vector.shape_cast %15 : vector<16x16x4xf32> to vector<256x4xf32>
    %17 = arith.truncf %16 : vector<256x4xf32> to vector<256x4xbf16>
    %c1 = arith.constant 1 : index
    %c0_13 = arith.constant 0 : index
    %c0_14 = arith.constant 0 : index
    %18 = vector.load %arg4[%c1, %c0_13, %c0_14] : memref<9x4x128xbf16, #tpu.memory_space<vmem>>, vector<1x4x128xbf16>
    %19 = vector.shape_cast %18 : vector<1x4x128xbf16> to vector<4x128xbf16>
    %cst_15 = arith.constant dense<0.000000e+00> : vector<256x128xf32>
    %20 = tpu.matmul %17, %19, %cst_15 {dimension_numbers = #tpu.dot_dimension_numbers<[1], [0], [0], [1], [0, 0, 1, 1], [], []>} : vector<256x4xbf16>, vector<4x128xbf16>, vector<256x128xf32> -> vector<256x128xf32>
    %21 = arith.addf %14, %20 : vector<256x128xf32>
    %22 = vector.extract_strided_slice %6 {offsets = [0, 2, 0], sizes = [16, 16, 4], strides = [1, 1, 1]} : vector<18x18x4xf32> to vector<16x16x4xf32>
    %23 = vector.shape_cast %22 : vector<16x16x4xf32> to vector<256x4xf32>
    %24 = arith.truncf %23 : vector<256x4xf32> to vector<256x4xbf16>
    %c2 = arith.constant 2 : index
    %c0_16 = arith.constant 0 : index
    %c0_17 = arith.constant 0 : index
    %25 = vector.load %arg4[%c2, %c0_16, %c0_17] : memref<9x4x128xbf16, #tpu.memory_space<vmem>>, vector<1x4x128xbf16>
    %26 = vector.shape_cast %25 : vector<1x4x128xbf16> to vector<4x128xbf16>
    %cst_18 = arith.constant dense<0.000000e+00> : vector<256x128xf32>
    %27 = tpu.matmul %24, %26, %cst_18 {dimension_numbers = #tpu.dot_dimension_numbers<[1], [0], [0], [1], [0, 0, 1, 1], [], []>} : vector<256x4xbf16>, vector<4x128xbf16>, vector<256x128xf32> -> vector<256x128xf32>
    %28 = arith.addf %21, %27 : vector<256x128xf32>
    %29 = vector.extract_strided_slice %6 {offsets = [1, 0, 0], sizes = [16, 16, 4], strides = [1, 1, 1]} : vector<18x18x4xf32> to vector<16x16x4xf32>
    %30 = vector.shape_cast %29 : vector<16x16x4xf32> to vector<256x4xf32>
    %31 = arith.truncf %30 : vector<256x4xf32> to vector<256x4xbf16>
    %c3 = arith.constant 3 : index
    %c0_19 = arith.constant 0 : index
    %c0_20 = arith.constant 0 : index
    %32 = vector.load %arg4[%c3, %c0_19, %c0_20] : memref<9x4x128xbf16, #tpu.memory_space<vmem>>, vector<1x4x128xbf16>
    %33 = vector.shape_cast %32 : vector<1x4x128xbf16> to vector<4x128xbf16>
    %cst_21 = arith.constant dense<0.000000e+00> : vector<256x128xf32>
    %34 = tpu.matmul %31, %33, %cst_21 {dimension_numbers = #tpu.dot_dimension_numbers<[1], [0], [0], [1], [0, 0, 1, 1], [], []>} : vector<256x4xbf16>, vector<4x128xbf16>, vector<256x128xf32> -> vector<256x128xf32>
    %35 = arith.addf %28, %34 : vector<256x128xf32>
    %36 = vector.extract_strided_slice %6 {offsets = [1, 1, 0], sizes = [16, 16, 4], strides = [1, 1, 1]} : vector<18x18x4xf32> to vector<16x16x4xf32>
    %37 = vector.shape_cast %36 : vector<16x16x4xf32> to vector<256x4xf32>
    %38 = arith.truncf %37 : vector<256x4xf32> to vector<256x4xbf16>
    %c4 = arith.constant 4 : index
    %c0_22 = arith.constant 0 : index
    %c0_23 = arith.constant 0 : index
    %39 = vector.load %arg4[%c4, %c0_22, %c0_23] : memref<9x4x128xbf16, #tpu.memory_space<vmem>>, vector<1x4x128xbf16>
    %40 = vector.shape_cast %39 : vector<1x4x128xbf16> to vector<4x128xbf16>
    %cst_24 = arith.constant dense<0.000000e+00> : vector<256x128xf32>
    %41 = tpu.matmul %38, %40, %cst_24 {dimension_numbers = #tpu.dot_dimension_numbers<[1], [0], [0], [1], [0, 0, 1, 1], [], []>} : vector<256x4xbf16>, vector<4x128xbf16>, vector<256x128xf32> -> vector<256x128xf32>
    %42 = arith.addf %35, %41 : vector<256x128xf32>
    %43 = vector.extract_strided_slice %6 {offsets = [1, 2, 0], sizes = [16, 16, 4], strides = [1, 1, 1]} : vector<18x18x4xf32> to vector<16x16x4xf32>
    %44 = vector.shape_cast %43 : vector<16x16x4xf32> to vector<256x4xf32>
    %45 = arith.truncf %44 : vector<256x4xf32> to vector<256x4xbf16>
    %c5 = arith.constant 5 : index
    %c0_25 = arith.constant 0 : index
    %c0_26 = arith.constant 0 : index
    %46 = vector.load %arg4[%c5, %c0_25, %c0_26] : memref<9x4x128xbf16, #tpu.memory_space<vmem>>, vector<1x4x128xbf16>
    %47 = vector.shape_cast %46 : vector<1x4x128xbf16> to vector<4x128xbf16>
    %cst_27 = arith.constant dense<0.000000e+00> : vector<256x128xf32>
    %48 = tpu.matmul %45, %47, %cst_27 {dimension_numbers = #tpu.dot_dimension_numbers<[1], [0], [0], [1], [0, 0, 1, 1], [], []>} : vector<256x4xbf16>, vector<4x128xbf16>, vector<256x128xf32> -> vector<256x128xf32>
    %49 = arith.addf %42, %48 : vector<256x128xf32>
    %50 = vector.extract_strided_slice %6 {offsets = [2, 0, 0], sizes = [16, 16, 4], strides = [1, 1, 1]} : vector<18x18x4xf32> to vector<16x16x4xf32>
    %51 = vector.shape_cast %50 : vector<16x16x4xf32> to vector<256x4xf32>
    %52 = arith.truncf %51 : vector<256x4xf32> to vector<256x4xbf16>
    %c6 = arith.constant 6 : index
    %c0_28 = arith.constant 0 : index
    %c0_29 = arith.constant 0 : index
    %53 = vector.load %arg4[%c6, %c0_28, %c0_29] : memref<9x4x128xbf16, #tpu.memory_space<vmem>>, vector<1x4x128xbf16>
    %54 = vector.shape_cast %53 : vector<1x4x128xbf16> to vector<4x128xbf16>
    %cst_30 = arith.constant dense<0.000000e+00> : vector<256x128xf32>
    %55 = tpu.matmul %52, %54, %cst_30 {dimension_numbers = #tpu.dot_dimension_numbers<[1], [0], [0], [1], [0, 0, 1, 1], [], []>} : vector<256x4xbf16>, vector<4x128xbf16>, vector<256x128xf32> -> vector<256x128xf32>
    %56 = arith.addf %49, %55 : vector<256x128xf32>
    %57 = vector.extract_strided_slice %6 {offsets = [2, 1, 0], sizes = [16, 16, 4], strides = [1, 1, 1]} : vector<18x18x4xf32> to vector<16x16x4xf32>
    %58 = vector.shape_cast %57 : vector<16x16x4xf32> to vector<256x4xf32>
    %59 = arith.truncf %58 : vector<256x4xf32> to vector<256x4xbf16>
    %c7 = arith.constant 7 : index
    %c0_31 = arith.constant 0 : index
    %c0_32 = arith.constant 0 : index
    %60 = vector.load %arg4[%c7, %c0_31, %c0_32] : memref<9x4x128xbf16, #tpu.memory_space<vmem>>, vector<1x4x128xbf16>
    %61 = vector.shape_cast %60 : vector<1x4x128xbf16> to vector<4x128xbf16>
    %cst_33 = arith.constant dense<0.000000e+00> : vector<256x128xf32>
    %62 = tpu.matmul %59, %61, %cst_33 {dimension_numbers = #tpu.dot_dimension_numbers<[1], [0], [0], [1], [0, 0, 1, 1], [], []>} : vector<256x4xbf16>, vector<4x128xbf16>, vector<256x128xf32> -> vector<256x128xf32>
    %63 = arith.addf %56, %62 : vector<256x128xf32>
    %64 = vector.extract_strided_slice %6 {offsets = [2, 2, 0], sizes = [16, 16, 4], strides = [1, 1, 1]} : vector<18x18x4xf32> to vector<16x16x4xf32>
    %65 = vector.shape_cast %64 : vector<16x16x4xf32> to vector<256x4xf32>
    %66 = arith.truncf %65 : vector<256x4xf32> to vector<256x4xbf16>
    %c8 = arith.constant 8 : index
    %c0_34 = arith.constant 0 : index
    %c0_35 = arith.constant 0 : index
    %67 = vector.load %arg4[%c8, %c0_34, %c0_35] : memref<9x4x128xbf16, #tpu.memory_space<vmem>>, vector<1x4x128xbf16>
    %68 = vector.shape_cast %67 : vector<1x4x128xbf16> to vector<4x128xbf16>
    %cst_36 = arith.constant dense<0.000000e+00> : vector<256x128xf32>
    %69 = tpu.matmul %66, %68, %cst_36 {dimension_numbers = #tpu.dot_dimension_numbers<[1], [0], [0], [1], [0, 0, 1, 1], [], []>} : vector<256x4xbf16>, vector<4x128xbf16>, vector<256x128xf32> -> vector<256x128xf32>
    %70 = arith.addf %63, %69 : vector<256x128xf32>
    %cst_37 = arith.constant 0.000000e+00 : f32
    %71 = vector.broadcast %cst_37 : f32 to vector<256x128xf32>
    %72 = arith.maximumf %70, %71 : vector<256x128xf32>
    %c0_38 = arith.constant 0 : index
    %c0_39 = arith.constant 0 : index
    %c0_40 = arith.constant 0 : index
    %73 = vector.load %arg5[%c0_38, %c0_39, %c0_40] : memref<1x256x128xf32, #tpu.memory_space<vmem>>, vector<1x256x128xf32>
    %74 = vector.shape_cast %73 : vector<1x256x128xf32> to vector<256x128xf32>
    %75 = vector.shape_cast %72 : vector<256x128xf32> to vector<1x256x128xf32>
    tpu.vector_store %arg5[%c0_38, %c0_39, %c0_40], %75 {strides = array<i32>} : memref<1x256x128xf32, #tpu.memory_space<vmem>>, vector<1x256x128xf32>,
    return
  }
  func.func @transform_0(%arg0: i32) -> (i32, i32, i32, i32) {
    %c0_i32 = arith.constant 0 : i32
    %c0_i32_0 = arith.constant 0 : i32
    %c0_i32_1 = arith.constant 0 : i32
    %c0_i32_2 = arith.constant 0 : i32
    return %arg0, %c0_i32, %c0_i32_0, %c0_i32_1 : i32, i32, i32, i32
  }
  func.func @transform_1(%arg0: i32) -> (i32, i32, i32) {
    %c0_i32 = arith.constant 0 : i32
    %c0_i32_0 = arith.constant 0 : i32
    %c0_i32_1 = arith.constant 0 : i32
    %c0_i32_2 = arith.constant 0 : i32
    return %c0_i32, %c0_i32_0, %c0_i32_1 : i32, i32, i32
  }
  func.func @transform_2(%arg0: i32) -> (i32, i32, i32) {
    %c0_i32 = arith.constant 0 : i32
    %c0_i32_0 = arith.constant 0 : i32
    %c0_i32_1 = arith.constant 0 : i32
    %c0_i32_2 = arith.constant 0 : i32
    return %c0_i32, %c0_i32_0, %c0_i32_1 : i32, i32, i32
  }
  func.func @transform_3(%arg0: i32) -> (i32, i32, i32) {
    %c0_i32 = arith.constant 0 : i32
    %c0_i32_0 = arith.constant 0 : i32
    %c0_i32_1 = arith.constant 0 : i32
    %c0_i32_2 = arith.constant 0 : i32
    return %c0_i32, %c0_i32_0, %c0_i32_1 : i32, i32, i32
  }
  func.func @transform_4(%arg0: i32) -> (i32, i32, i32) {
    %c0_i32 = arith.constant 0 : i32
    %c0_i32_0 = arith.constant 0 : i32
    %c0_i32_1 = arith.constant 0 : i32
    return %arg0, %c0_i32, %c0_i32_0 : i32, i32, i32
  }
}

</mosaic_0001>

<llo_original>
// kernel: relu_conv_bn.2
$region0: #{relu_conv_bn.2}
  #allocation0 [shape = 'u32[]', space=smem, size = 0x4, offset = 0x4, fixed_abs, tag = 'smem constant byte address 0x4 - core index']
  #allocation1 [shape = 'u32[144,128]{1,0:T(1,128)}', space=vmem, size = 0x12000, scoped, tag = 'internal scratch']
  %s0 = inlined_call_operand.vmem [shape: f32[1024,4], index: 0, kind: input, shape index: {}]
  %s1 = inlined_call_operand.vmem [shape: f32[2,1,4], index: 1, kind: output, shape index: {0}]
  %s2 = inlined_call_operand.vmem [shape: f32[2,1,4], index: 2, kind: output, shape index: {1}]
  %3 = xla_tuple %s1, %s2
  %s4 = sld [smem:[#allocation0]]
  $region45: #{relu_conv_bn.2} parent=0
    _
  %s6 = ssub.s32 1, %s4
  %s7 = scalar_select 0, %s6, %s4
  loop: start=0, step=1, limit=4
  $region2: #{relu_conv_bn.2} parent=0 // loop_pre_header
    _
  $region3: #{relu_conv_bn.2} parent=0 // loop_header
    %s9 = sphi 0, %s13
    %p10 = scmp.ge.s32.totalorder %s9, 4
    %s19 = sphi 0, %s21
    %s22 = sphi 0, %s19
    %s23 = sphi 0, %s22
    %s39 = sphi 0, %s23
    %s45 = sphi 0, %s47
    %s48 = sphi 0, %s45
    %s49 = sphi 0, %s48
    %s65 = sphi 0, %s49
    %s71 = sphi 0, %s73
    %s74 = sphi 0, %s71
    %s75 = sphi 0, %s74
    %s91 = sphi 0, %s75
  $region4: #{relu_conv_bn.2} parent=0 // loop_header_branch
    %12 = sbr.rel (%p10) target = $region8
  $region5: #{relu_conv_bn.2} parent=0 // loop_body
    %s14 = ssub.s32 %s9, 1
    %s15 = ssub.s32 %s9, 2
    %s16 = sadd.s32 %s9, 1
    %s17 = ssub.s32 %s9, %s16
    %p18 = scmp.eq.s32.totalorder %s17, 0
    %s20 = sadd.s32 %s19, 1
    %s21 = scalar_select %p18, %s19, %s20
    %p24 = pneg %p18
    %p25 = scmp.eq.s32.totalorder %s9, 1
    %p26 = por %p24, %p25
    %p27 = scmp.ne.s32.totalorder %s19, %s22
    %p28 = scmp.eq.s32.totalorder %s9, 0
    %p29 = por %p27, %p28
    %p30 = scmp.ne.s32.totalorder %s19, %s22
    %p31 = scmp.eq.s32.totalorder %s14, 1
    %p32 = por %p30, %p31
    %p33 = scmp.ne.s32.totalorder %s22, %s23
    %p34 = scmp.eq.s32.totalorder %s14, 0
    %p35 = por %p33, %p34
    %p36 = scmp.ne.s32.totalorder %s22, %s23
    %p37 = scmp.eq.s32.totalorder %s15, 1
    %p38 = por %p36, %p37
    %p40 = scmp.ne.s32.totalorder %s23, %s39
    %p41 = scmp.eq.s32.totalorder %s15, 0
    %p42 = por %p40, %p41
    %s43 = ssub.s32 %s9, %s16
    %p44 = scmp.eq.s32.totalorder %s43, 0
    %s46 = sadd.s32 %s45, 1
    %s47 = scalar_select %p44, %s45, %s46
    %p50 = pneg %p44
    %p51 = scmp.eq.s32.totalorder %s9, 1
    %p52 = por %p50, %p51
    %p53 = scmp.ne.s32.totalorder %s45, %s48
    %p54 = scmp.eq.s32.totalorder %s9, 0
    %p55 = por %p53, %p54
    %p56 = scmp.ne.s32.totalorder %s45, %s48
    %p57 = scmp.eq.s32.totalorder %s14, 1
    %p58 = por %p56, %p57
    %p59 = scmp.ne.s32.totalorder %s48, %s49
    %p60 = scmp.eq.s32.totalorder %s14, 0
    %p61 = por %p59, %p60
    %p62 = scmp.ne.s32.totalorder %s48, %s49
    %p63 = scmp.eq.s32.totalorder %s15, 1
    %p64 = por %p62, %p63
    %p66 = scmp.ne.s32.totalorder %s49, %s65
    %p67 = scmp.eq.s32.totalorder %s15, 0
    %p68 = por %p66, %p67
    %s69 = ssub.s32 %s9, %s16
    %p70 = scmp.eq.s32.totalorder %s69, 0
    %s72 = sadd.s32 %s71, 1
    %s73 = scalar_select %p70, %s71, %s72
    %p76 = pneg %p70
    %p77 = scmp.eq.s32.totalorder %s9, 1
    %p78 = por %p76, %p77
    %p79 = scmp.ne.s32.totalorder %s71, %s74
    %p80 = scmp.eq.s32.totalorder %s9, 0
    %p81 = por %p79, %p80
    %p82 = scmp.ne.s32.totalorder %s71, %s74
    %p83 = scmp.eq.s32.totalorder %s14, 1
    %p84 = por %p82, %p83
    %p85 = scmp.ne.s32.totalorder %s74, %s75
    %p86 = scmp.eq.s32.totalorder %s14, 0
    %p87 = por %p85, %p86
    %p88 = scmp.ne.s32.totalorder %s74, %s75
    %p89 = scmp.eq.s32.totalorder %s15, 1
    %p90 = por %p88, %p89
    %p92 = scmp.ne.s32.totalorder %s75, %s91
    %p93 = scmp.eq.s32.totalorder %s15, 0
    %p94 = por %p92, %p93
    %p95 = scmp.le.s32.totalorder 1, %s9
    %p96 = scmp.lt.s32.totalorder %s9, 3
    %p97 = pnand %p95, %p96
    %p98 = pneg %p97
    // Predicated region
    $region9: #{relu_conv_bn.2} parent=5 // pred_check
      _
    $region10: #{relu_conv_bn.2} parent=5 // pred_check_branch
      %100 = sbr.rel (%p97) target = $region12
    $region11: #{relu_conv_bn.2} parent=5 // pred_region
      %s101 = ssub.s32 %s9, 1
    $region12: #{relu_conv_bn.2} parent=5 // pred_fallthru
      _
    %p102 = scmp.lt.s32.totalorder %s9, 2
    // Predicated region
    $region13: #{relu_conv_bn.2} parent=5 // pred_check
      %p103 = pneg %p102
    $region14: #{relu_conv_bn.2} parent=5 // pred_check_branch
      %105 = sbr.rel (%p103) target = $region16
    $region15: #{relu_conv_bn.2} parent=5 // pred_region
      // Predicated region
      $region17: #{relu_conv_bn.2} parent=15 // pred_check
        %p106 = pneg %p29
      $region18: #{relu_conv_bn.2} parent=15 // pred_check_branch
        %108 = sbr.rel (%p106) target = $region20
      $region19: #{relu_conv_bn.2} parent=15 // pred_region
        %s109 = smul.u32 64, %s9
        %p110 = scmp.lt.s32.totalorder %s109, 127
        %s111 = scalar_select %p110, %s109, 127
        %s112 = smul.addr %s111, 8
        %s113 = scalar_lea.vmem %s0, %s112
        %s114 = smul.u32 64, %s9
      $region20: #{relu_conv_bn.2} parent=15 // pred_fallthru
        _
    $region16: #{relu_conv_bn.2} parent=5 // pred_fallthru
      _
    %p115 = scmp.le.s32.totalorder 1, %s9
    %p116 = scmp.lt.s32.totalorder %s9, 3
    %p117 = pnand %p115, %p116
    %p118 = pneg %p117
    // Predicated region
    $region21: #{relu_conv_bn.2} parent=5 // pred_check
      _
    $region22: #{relu_conv_bn.2} parent=5 // pred_check_branch
      %120 = sbr.rel (%p117) target = $region24
    $region23: #{relu_conv_bn.2} parent=5 // pred_region
      %s121 = ssub.s32 %s9, 1
      %s122 = smul.u32 64, %s14
      %p123 = scmp.lt.s32.totalorder %s122, 127
      %s124 = scalar_select %p123, %s122, 127
      %s125 = smul.addr %s124, 8
      %s126 = scalar_lea.vmem %s0, %s125
      %p127 = pneg %p35
      %p128 = pneg %p32
      %p129 = pneg %p61
      %p130 = pneg %p58
      %p131 = scmp.lt.s32.totalorder %s14, 1
      %s132 = scalar_select %p131, %s14, 1
      %s133 = scalar_lea.vmem %s1, %s132
      %p134 = pneg %p87
      %p135 = pneg %p84
      %p136 = scmp.lt.s32.totalorder %s14, 1
      %s137 = scalar_select %p136, %s14, 1
      %s138 = scalar_lea.vmem %s2, %s137
      %s139 = smul.u32 64, %s14
      %p140 = scmp.lt.s32.totalorder %s139, 127
      %s141 = scalar_select %p140, %s139, 127
      %s142 = smul.addr %s141, 8
      %s143 = scalar_lea.vmem %s0, %s142
      %s144 = smul.u32 64, %s14
      %p145 = scmp.lt.s32.totalorder %s14, 1
      %s146 = scalar_select %p145, %s14, 1
      %s147 = scalar_lea.vmem %s1, %s146
      %p148 = scmp.lt.s32.totalorder %s14, 1
      %s149 = scalar_select %p148, %s14, 1
      %s150 = scalar_lea.vmem %s2, %s149
      %v151 = vld [vmem:[%s143] sm:$0xff]
      %v152 = vld [vmem:[%s143 + $0x8] sm:$0xff]
      %v153 = vld [vmem:[%s143 + $0x10] sm:$0xff]
      %v154 = vld [vmem:[%s143 + $0x18] sm:$0xff]
      %v155 = vld [vmem:[%s143 + $0x20] sm:$0xff]
      %v156 = vld [vmem:[%s143 + $0x28] sm:$0xff]
      %v157 = vld [vmem:[%s143 + $0x30] sm:$0xff]
      %v158 = vld [vmem:[%s143 + $0x38] sm:$0xff]
      %v159 = vld [vmem:[%s143 + $0x40] sm:$0xff]
      %v160 = vld [vmem:[%s143 + $0x48] sm:$0xff]
      %v161 = vld [vmem:[%s143 + $0x50] sm:$0xff]
      %v162 = vld [vmem:[%s143 + $0x58] sm:$0xff]
      %v163 = vld [vmem:[%s143 + $0x60] sm:$0xff]
      %v164 = vld [vmem:[%s143 + $0x68] sm:$0xff]
      %v165 = vld [vmem:[%s143 + $0x70] sm:$0xff]
      %v166 = vld [vmem:[%s143 + $0x78] sm:$0xff]
      %v167 = vld [vmem:[%s143 + $0x80] sm:$0xff]
      %v168 = vld [vmem:[%s143 + $0x88] sm:$0xff]
      %v169 = vld [vmem:[%s143 + $0x90] sm:$0xff]
      %v170 = vld [vmem:[%s143 + $0x98] sm:$0xff]
      %v171 = vld [vmem:[%s143 + $0xa0] sm:$0xff]
      %v172 = vld [vmem:[%s143 + $0xa8] sm:$0xff]
      %v173 = vld [vmem:[%s143 + $0xb0] sm:$0xff]
      %v174 = vld [vmem:[%s143 + $0xb8] sm:$0xff]
      %v175 = vld [vmem:[%s143 + $0xc0] sm:$0xff]
      %v176 = vld [vmem:[%s143 + $0xc8] sm:$0xff]
      %v177 = vld [vmem:[%s143 + $0xd0] sm:$0xff]
      %v178 = vld [vmem:[%s143 + $0xd8] sm:$0xff]
      %v179 = vld [vmem:[%s143 + $0xe0] sm:$0xff]
      %v180 = vld [vmem:[%s143 + $0xe8] sm:$0xff]
      %v181 = vld [vmem:[%s143 + $0xf0] sm:$0xff]
      %v182 = vld [vmem:[%s143 + $0xf8] sm:$0xff]
      %v183 = vld [vmem:[%s143 + $0x100] sm:$0xff]
      %v184 = vld [vmem:[%s143 + $0x108] sm:$0xff]
      %v185 = vld [vmem:[%s143 + $0x110] sm:$0xff]
      %v186 = vld [vmem:[%s143 + $0x118] sm:$0xff]
      %v187 = vld [vmem:[%s143 + $0x120] sm:$0xff]
      %v188 = vld [vmem:[%s143 + $0x128] sm:$0xff]
      %v189 = vld [vmem:[%s143 + $0x130] sm:$0xff]
      %v190 = vld [vmem:[%s143 + $0x138] sm:$0xff]
      %v191 = vld [vmem:[%s143 + $0x140] sm:$0xff]
      %v192 = vld [vmem:[%s143 + $0x148] sm:$0xff]
      %v193 = vld [vmem:[%s143 + $0x150] sm:$0xff]
      %v194 = vld [vmem:[%s143 + $0x158] sm:$0xff]
      %v195 = vld [vmem:[%s143 + $0x160] sm:$0xff]
      %v196 = vld [vmem:[%s143 + $0x168] sm:$0xff]
      %v197 = vld [vmem:[%s143 + $0x170] sm:$0xff]
      %v198 = vld [vmem:[%s143 + $0x178] sm:$0xff]
      %v199 = vld [vmem:[%s143 + $0x180] sm:$0xff]
      %v200 = vld [vmem:[%s143 + $0x188] sm:$0xff]
      %v201 = vld [vmem:[%s143 + $0x190] sm:$0xff]
      %v202 = vld [vmem:[%s143 + $0x198] sm:$0xff]
      %v203 = vld [vmem:[%s143 + $0x1a0] sm:$0xff]
      %v204 = vld [vmem:[%s143 + $0x1a8] sm:$0xff]
      %v205 = vld [vmem:[%s143 + $0x1b0] sm:$0xff]
      %v206 = vld [vmem:[%s143 + $0x1b8] sm:$0xff]
      %v207 = vld [vmem:[%s143 + $0x1c0] sm:$0xff]
      %v208 = vld [vmem:[%s143 + $0x1c8] sm:$0xff]
      %v209 = vld [vmem:[%s143 + $0x1d0] sm:$0xff]
      %v210 = vld [vmem:[%s143 + $0x1d8] sm:$0xff]
      %v211 = vld [vmem:[%s143 + $0x1e0] sm:$0xff]
      %v212 = vld [vmem:[%s143 + $0x1e8] sm:$0xff]
      %v213 = vld [vmem:[%s143 + $0x1f0] sm:$0xff]
      %v214 = vld [vmem:[%s143 + $0x1f8] sm:$0xff]
      %vm215 = vcmask 31744
      %v216 = vsel %vm215, %v151, 0.0
      %v217 = vsel %vm215, %v152, 0.0
      %v218 = vadd.f32 %v216, %v217
      %v219 = vsel %vm215, %v153, 0.0
      %v220 = vadd.f32 %v218, %v219
      %v221 = vsel %vm215, %v154, 0.0
      %v222 = vadd.f32 %v220, %v221
      %v223 = vsel %vm215, %v155, 0.0
      %v224 = vadd.f32 %v222, %v223
      %v225 = vsel %vm215, %v156, 0.0
      %v226 = vadd.f32 %v224, %v225
      %v227 = vsel %vm215, %v157, 0.0
      %v228 = vadd.f32 %v226, %v227
      %v229 = vsel %vm215, %v158, 0.0
      %v230 = vadd.f32 %v228, %v229
      %v231 = vsel %vm215, %v159, 0.0
      %v232 = vadd.f32 %v230, %v231
      %v233 = vsel %vm215, %v160, 0.0
      %v234 = vadd.f32 %v232, %v233
      %v235 = vsel %vm215, %v161, 0.0
      %v236 = vadd.f32 %v234, %v235
      %v237 = vsel %vm215, %v162, 0.0
      %v238 = vadd.f32 %v236, %v237
      %v239 = vsel %vm215, %v163, 0.0
      %v240 = vadd.f32 %v238, %v239
      %v241 = vsel %vm215, %v164, 0.0
      %v242 = vadd.f32 %v240, %v241
      %v243 = vsel %vm215, %v165, 0.0
      %v244 = vadd.f32 %v242, %v243
      %v245 = vsel %vm215, %v166, 0.0
      %v246 = vadd.f32 %v244, %v245
      %v247 = vsel %vm215, %v167, 0.0
      %v248 = vadd.f32 %v246, %v247
      %v249 = vsel %vm215, %v168, 0.0
      %v250 = vadd.f32 %v248, %v249
      %v251 = vsel %vm215, %v169, 0.0
      %v252 = vadd.f32 %v250, %v251
      %v253 = vsel %vm215, %v170, 0.0
      %v254 = vadd.f32 %v252, %v253
      %v255 = vsel %vm215, %v171, 0.0
      %v256 = vadd.f32 %v254, %v255
      %v257 = vsel %vm215, %v172, 0.0
      %v258 = vadd.f32 %v256, %v257
      %v259 = vsel %vm215, %v173, 0.0
      %v260 = vadd.f32 %v258, %v259
      %v261 = vsel %vm215, %v174, 0.0
      %v262 = vadd.f32 %v260, %v261
      %v263 = vsel %vm215, %v175, 0.0
      %v264 = vadd.f32 %v262, %v263
      %v265 = vsel %vm215, %v176, 0.0
      %v266 = vadd.f32 %v264, %v265
      %v267 = vsel %vm215, %v177, 0.0
      %v268 = vadd.f32 %v266, %v267
      %v269 = vsel %vm215, %v178, 0.0
      %v270 = vadd.f32 %v268, %v269
      %v271 = vsel %vm215, %v179, 0.0
      %v272 = vadd.f32 %v270, %v271
      %v273 = vsel %vm215, %v180, 0.0
      %v274 = vadd.f32 %v272, %v273
      %v275 = vsel %vm215, %v181, 0.0
      %v276 = vadd.f32 %v274, %v275
      %v277 = vsel %vm215, %v182, 0.0
      %v278 = vadd.f32 %v276, %v277
      %v279 = vsel %vm215, %v183, 0.0
      %v280 = vadd.f32 %v278, %v279
      %v281 = vsel %vm215, %v184, 0.0
      %v282 = vadd.f32 %v280, %v281
      %v283 = vsel %vm215, %v185, 0.0
      %v284 = vadd.f32 %v282, %v283
      %v285 = vsel %vm215, %v186, 0.0
      %v286 = vadd.f32 %v284, %v285
      %v287 = vsel %vm215, %v187, 0.0
      %v288 = vadd.f32 %v286, %v287
      %v289 = vsel %vm215, %v188, 0.0
      %v290 = vadd.f32 %v288, %v289
      %v291 = vsel %vm215, %v189, 0.0
      %v292 = vadd.f32 %v290, %v291
      %v293 = vsel %vm215, %v190, 0.0
      %v294 = vadd.f32 %v292, %v293
      %v295 = vsel %vm215, %v191, 0.0
      %v296 = vadd.f32 %v294, %v295
      %v297 = vsel %vm215, %v192, 0.0
      %v298 = vadd.f32 %v296, %v297
      %v299 = vsel %vm215, %v193, 0.0
      %v300 = vadd.f32 %v298, %v299
      %v301 = vsel %vm215, %v194, 0.0
      %v302 = vadd.f32 %v300, %v301
      %v303 = vsel %vm215, %v195, 0.0
      %v304 = vadd.f32 %v302, %v303
      %v305 = vsel %vm215, %v196, 0.0
      %v306 = vadd.f32 %v304, %v305
      %v307 = vsel %vm215, %v197, 0.0
      %v308 = vadd.f32 %v306, %v307
      %v309 = vsel %vm215, %v198, 0.0
      %v310 = vadd.f32 %v308, %v309
      %v311 = vsel %vm215, %v199, 0.0
      %v312 = vadd.f32 %v310, %v311
      %v313 = vsel %vm215, %v200, 0.0
      %v314 = vadd.f32 %v312, %v313
      %v315 = vsel %vm215, %v201, 0.0
      %v316 = vadd.f32 %v314, %v315
      %v317 = vsel %vm215, %v202, 0.0
      %v318 = vadd.f32 %v316, %v317
      %v319 = vsel %vm215, %v203, 0.0
      %v320 = vadd.f32 %v318, %v319
      %v321 = vsel %vm215, %v204, 0.0
      %v322 = vadd.f32 %v320, %v321
      %v323 = vsel %vm215, %v205, 0.0
      %v324 = vadd.f32 %v322, %v323
      %v325 = vsel %vm215, %v206, 0.0
      %v326 = vadd.f32 %v324, %v325
      %v327 = vsel %vm215, %v207, 0.0
      %v328 = vadd.f32 %v326, %v327
      %v329 = vsel %vm215, %v208, 0.0
      %v330 = vadd.f32 %v328, %v329
      %v331 = vsel %vm215, %v209, 0.0
      %v332 = vadd.f32 %v330, %v331
      %v333 = vsel %vm215, %v210, 0.0
      %v334 = vadd.f32 %v332, %v333
      %v335 = vsel %vm215, %v211, 0.0
      %v336 = vadd.f32 %v334, %v335
      %v337 = vsel %vm215, %v212, 0.0
      %v338 = vadd.f32 %v336, %v337
      %v339 = vsel %vm215, %v213, 0.0
      %v340 = vadd.f32 %v338, %v339
      %v341 = vsel %vm215, %v214, 0.0
      %v342 = vadd.f32 %v340, %v341
      %v343 = vrot.slane %v342, 4
      %v344 = vadd.f32 %v342, %v343
      %v345 = vrot.slane %v344, 2
      %v346 = vadd.f32 %v344, %v345
      %v347 = vrot.slane %v346, 1
      %v348 = vadd.f32 %v346, %v347
      %vm349 = vcmask 24576
      %350 = vst.msk [vmem:[%s147] sm:$0x1] %vm349, %v348
      %v351 = vmul.f32 %v151, %v151
      %v352 = vmul.f32 %v152, %v152
      %v353 = vmul.f32 %v153, %v153
      %v354 = vmul.f32 %v154, %v154
      %v355 = vmul.f32 %v155, %v155
      %v356 = vmul.f32 %v156, %v156
      %v357 = vmul.f32 %v157, %v157
      %v358 = vmul.f32 %v158, %v158
      %v359 = vmul.f32 %v159, %v159
      %v360 = vmul.f32 %v160, %v160
      %v361 = vmul.f32 %v161, %v161
      %v362 = vmul.f32 %v162, %v162
      %v363 = vmul.f32 %v163, %v163
      %v364 = vmul.f32 %v164, %v164
      %v365 = vmul.f32 %v165, %v165
      %v366 = vmul.f32 %v166, %v166
      %v367 = vmul.f32 %v167, %v167
      %v368 = vmul.f32 %v168, %v168
      %v369 = vmul.f32 %v169, %v169
      %v370 = vmul.f32 %v170, %v170
      %v371 = vmul.f32 %v171, %v171
      %v372 = vmul.f32 %v172, %v172
      %v373 = vmul.f32 %v173, %v173
      %v374 = vmul.f32 %v174, %v174
      %v375 = vmul.f32 %v175, %v175
      %v376 = vmul.f32 %v176, %v176
      %v377 = vmul.f32 %v177, %v177
      %v378 = vmul.f32 %v178, %v178
      %v379 = vmul.f32 %v179, %v179
      %v380 = vmul.f32 %v180, %v180
      %v381 = vmul.f32 %v181, %v181
      %v382 = vmul.f32 %v182, %v182
      %v383 = vmul.f32 %v183, %v183
      %v384 = vmul.f32 %v184, %v184
      %v385 = vmul.f32 %v185, %v185
      %v386 = vmul.f32 %v186, %v186
      %v387 = vmul.f32 %v187, %v187
      %v388 = vmul.f32 %v188, %v188
      %v389 = vmul.f32 %v189, %v189
      %v390 = vmul.f32 %v190, %v190
      %v391 = vmul.f32 %v191, %v191
      %v392 = vmul.f32 %v192, %v192
      %v393 = vmul.f32 %v193, %v193
      %v394 = vmul.f32 %v194, %v194
      %v395 = vmul.f32 %v195, %v195
      %v396 = vmul.f32 %v196, %v196
      %v397 = vmul.f32 %v197, %v197
      %v398 = vmul.f32 %v198, %v198
      %v399 = vmul.f32 %v199, %v199
      %v400 = vmul.f32 %v200, %v200
      %v401 = vmul.f32 %v201, %v201
      %v402 = vmul.f32 %v202, %v202
      %v403 = vmul.f32 %v203, %v203
      %v404 = vmul.f32 %v204, %v204
      %v405 = vmul.f32 %v205, %v205
      %v406 = vmul.f32 %v206, %v206
      %v407 = vmul.f32 %v207, %v207
      %v408 = vmul.f32 %v208, %v208
      %v409 = vmul.f32 %v209, %v209
      %v410 = vmul.f32 %v210, %v210
      %v411 = vmul.f32 %v211, %v211
      %v412 = vmul.f32 %v212, %v212
      %v413 = vmul.f32 %v213, %v213
      %v414 = vmul.f32 %v214, %v214
      %v415 = vsel %vm215, %v351, 0.0
      %v416 = vsel %vm215, %v352, 0.0
      %v417 = vadd.f32 %v415, %v416
      %v418 = vsel %vm215, %v353, 0.0
      %v419 = vadd.f32 %v417, %v418
      %v420 = vsel %vm215, %v354, 0.0
      %v421 = vadd.f32 %v419, %v420
      %v422 = vsel %vm215, %v355, 0.0
      %v423 = vadd.f32 %v421, %v422
      %v424 = vsel %vm215, %v356, 0.0
      %v425 = vadd.f32 %v423, %v424
      %v426 = vsel %vm215, %v357, 0.0
      %v427 = vadd.f32 %v425, %v426
      %v428 = vsel %vm215, %v358, 0.0
      %v429 = vadd.f32 %v427, %v428
      %v430 = vsel %vm215, %v359, 0.0
      %v431 = vadd.f32 %v429, %v430
      %v432 = vsel %vm215, %v360, 0.0
      %v433 = vadd.f32 %v431, %v432
      %v434 = vsel %vm215, %v361, 0.0
      %v435 = vadd.f32 %v433, %v434
      %v436 = vsel %vm215, %v362, 0.0
      %v437 = vadd.f32 %v435, %v436
      %v438 = vsel %vm215, %v363, 0.0
      %v439 = vadd.f32 %v437, %v438
      %v440 = vsel %vm215, %v364, 0.0
      %v441 = vadd.f32 %v439, %v440
      %v442 = vsel %vm215, %v365, 0.0
      %v443 = vadd.f32 %v441, %v442
      %v444 = vsel %vm215, %v366, 0.0
      %v445 = vadd.f32 %v443, %v444
      %v446 = vsel %vm215, %v367, 0.0
      %v447 = vadd.f32 %v445, %v446
      %v448 = vsel %vm215, %v368, 0.0
      %v449 = vadd.f32 %v447, %v448
      %v450 = vsel %vm215, %v369, 0.0
      %v451 = vadd.f32 %v449, %v450
      %v452 = vsel %vm215, %v370, 0.0
      %v453 = vadd.f32 %v451, %v452
      %v454 = vsel %vm215, %v371, 0.0
      %v455 = vadd.f32 %v453, %v454
      %v456 = vsel %vm215, %v372, 0.0
      %v457 = vadd.f32 %v455, %v456
      %v458 = vsel %vm215, %v373, 0.0
      %v459 = vadd.f32 %v457, %v458
      %v460 = vsel %vm215, %v374, 0.0
      %v461 = vadd.f32 %v459, %v460
      %v462 = vsel %vm215, %v375, 0.0
      %v463 = vadd.f32 %v461, %v462
      %v464 = vsel %vm215, %v376, 0.0
      %v465 = vadd.f32 %v463, %v464
      %v466 = vsel %vm215, %v377, 0.0
      %v467 = vadd.f32 %v465, %v466
      %v468 = vsel %vm215, %v378, 0.0
      %v469 = vadd.f32 %v467, %v468
      %v470 = vsel %vm215, %v379, 0.0
      %v471 = vadd.f32 %v469, %v470
      %v472 = vsel %vm215, %v380, 0.0
      %v473 = vadd.f32 %v471, %v472
      %v474 = vsel %vm215, %v381, 0.0
      %v475 = vadd.f32 %v473, %v474
      %v476 = vsel %vm215, %v382, 0.0
      %v477 = vadd.f32 %v475, %v476
      %v478 = vsel %vm215, %v383, 0.0
      %v479 = vadd.f32 %v477, %v478
      %v480 = vsel %vm215, %v384, 0.0
      %v481 = vadd.f32 %v479, %v480
      %v482 = vsel %vm215, %v385, 0.0
      %v483 = vadd.f32 %v481, %v482
      %v484 = vsel %vm215, %v386, 0.0
      %v485 = vadd.f32 %v483, %v484
      %v486 = vsel %vm215, %v387, 0.0
      %v487 = vadd.f32 %v485, %v486
      %v488 = vsel %vm215, %v388, 0.0
      %v489 = vadd.f32 %v487, %v488
      %v490 = vsel %vm215, %v389, 0.0
      %v491 = vadd.f32 %v489, %v490
      %v492 = vsel %vm215, %v390, 0.0
      %v493 = vadd.f32 %v491, %v492
      %v494 = vsel %vm215, %v391, 0.0
      %v495 = vadd.f32 %v493, %v494
      %v496 = vsel %vm215, %v392, 0.0
      %v497 = vadd.f32 %v495, %v496
      %v498 = vsel %vm215, %v393, 0.0
      %v499 = vadd.f32 %v497, %v498
      %v500 = vsel %vm215, %v394, 0.0
      %v501 = vadd.f32 %v499, %v500
      %v502 = vsel %vm215, %v395, 0.0
      %v503 = vadd.f32 %v501, %v502
      %v504 = vsel %vm215, %v396, 0.0
      %v505 = vadd.f32 %v503, %v504
      %v506 = vsel %vm215, %v397, 0.0
      %v507 = vadd.f32 %v505, %v506
      %v508 = vsel %vm215, %v398, 0.0
      %v509 = vadd.f32 %v507, %v508
      %v510 = vsel %vm215, %v399, 0.0
      %v511 = vadd.f32 %v509, %v510
      %v512 = vsel %vm215, %v400, 0.0
      %v513 = vadd.f32 %v511, %v512
      %v514 = vsel %vm215, %v401, 0.0
      %v515 = vadd.f32 %v513, %v514
      %v516 = vsel %vm215, %v402, 0.0
      %v517 = vadd.f32 %v515, %v516
      %v518 = vsel %vm215, %v403, 0.0
      %v519 = vadd.f32 %v517, %v518
      %v520 = vsel %vm215, %v404, 0.0
      %v521 = vadd.f32 %v519, %v520
      %v522 = vsel %vm215, %v405, 0.0
      %v523 = vadd.f32 %v521, %v522
      %v524 = vsel %vm215, %v406, 0.0
      %v525 = vadd.f32 %v523, %v524
      %v526 = vsel %vm215, %v407, 0.0
      %v527 = vadd.f32 %v525, %v526
      %v528 = vsel %vm215, %v408, 0.0
      %v529 = vadd.f32 %v527, %v528
      %v530 = vsel %vm215, %v409, 0.0
      %v531 = vadd.f32 %v529, %v530
      %v532 = vsel %vm215, %v410, 0.0
      %v533 = vadd.f32 %v531, %v532
      %v534 = vsel %vm215, %v411, 0.0
      %v535 = vadd.f32 %v533, %v534
      %v536 = vsel %vm215, %v412, 0.0
      %v537 = vadd.f32 %v535, %v536
      %v538 = vsel %vm215, %v413, 0.0
      %v539 = vadd.f32 %v537, %v538
      %v540 = vsel %vm215, %v414, 0.0
      %v541 = vadd.f32 %v539, %v540
      %v542 = vrot.slane %v541, 4
      %v543 = vadd.f32 %v541, %v542
      %v544 = vrot.slane %v543, 2
      %v545 = vadd.f32 %v543, %v544
      %v546 = vrot.slane %v545, 1
      %v547 = vadd.f32 %v545, %v546
      %548 = vst.msk [vmem:[%s150] sm:$0x1] %vm349, %v547
      %p549 = scmp.lt.s32.totalorder %s14, 1
      %s550 = scalar_select %p549, %s14, 1
      %s551 = scalar_lea.vmem %s1, %s550
      %p552 = scmp.lt.s32.totalorder %s14, 1
      %s553 = scalar_select %p552, %s14, 1
      %s554 = scalar_lea.vmem %s2, %s553
      // Predicated region
      $region25: #{relu_conv_bn.2} parent=23 // pred_check
        %p555 = pneg %p58
      $region26: #{relu_conv_bn.2} parent=23 // pred_check_branch
        %557 = sbr.rel (%p555) target = $region28
      $region27: #{relu_conv_bn.2} parent=23 // pred_region
        _
      $region28: #{relu_conv_bn.2} parent=23 // pred_fallthru
        _
      // Predicated region
      $region29: #{relu_conv_bn.2} parent=23 // pred_check
        %p558 = pneg %p84
      $region30: #{relu_conv_bn.2} parent=23 // pred_check_branch
        %560 = sbr.rel (%p558) target = $region32
      $region31: #{relu_conv_bn.2} parent=23 // pred_region
        _
      $region32: #{relu_conv_bn.2} parent=23 // pred_fallthru
        _
    $region24: #{relu_conv_bn.2} parent=5 // pred_fallthru
      _
    %p561 = scmp.le.s32.totalorder 2, %s9
    // Predicated region
    $region33: #{relu_conv_bn.2} parent=5 // pred_check
      %p562 = pneg %p561
    $region34: #{relu_conv_bn.2} parent=5 // pred_check_branch
      %564 = sbr.rel (%p562) target = $region36
    $region35: #{relu_conv_bn.2} parent=5 // pred_region
      %s565 = ssub.s32 %s9, 2
      // Predicated region
      $region37: #{relu_conv_bn.2} parent=35 // pred_check
        %p566 = pneg %p64
      $region38: #{relu_conv_bn.2} parent=35 // pred_check_branch
        %568 = sbr.rel (%p566) target = $region40
      $region39: #{relu_conv_bn.2} parent=35 // pred_region
        %p569 = scmp.lt.s32.totalorder %s15, 1
        %s570 = scalar_select %p569, %s15, 1
        %s571 = scalar_lea.vmem %s1, %s570
      $region40: #{relu_conv_bn.2} parent=35 // pred_fallthru
        _
      // Predicated region
      $region41: #{relu_conv_bn.2} parent=35 // pred_check
        %p572 = pneg %p90
      $region42: #{relu_conv_bn.2} parent=35 // pred_check_branch
        %574 = sbr.rel (%p572) target = $region44
      $region43: #{relu_conv_bn.2} parent=35 // pred_region
        %p575 = scmp.lt.s32.totalorder %s15, 1
        %s576 = scalar_select %p575, %s15, 1
        %s577 = scalar_lea.vmem %s2, %s576
      $region44: #{relu_conv_bn.2} parent=35 // pred_fallthru
        _
    $region36: #{relu_conv_bn.2} parent=5 // pred_fallthru
      _
  $region6: #{relu_conv_bn.2} parent=0 // loop_footer
    %s13 = sadd.s32 1, %s9
  $region7: #{relu_conv_bn.2} parent=0 // loop_footer_branch
    %8 = sbr.rel target = $region3
  $region8: #{relu_conv_bn.2} parent=0 // loop_exit
    _

// kernel: relu_conv_bn.3
$region0: #{relu_conv_bn.3}
  #allocation0 [shape = 'u32[]', space=smem, size = 0x4, offset = 0x4, fixed_abs, tag = 'smem constant byte address 0x4 - core index']
  #allocation1 [shape = 'u32[144,128]{1,0:T(1,128)}', space=vmem, size = 0x12000, scoped, tag = 'internal scratch']
  %s0 = inlined_call_operand.vmem [shape: f32[2,18,18,4], index: 0, kind: input, shape index: {}]
  %s1 = inlined_call_operand.vmem [shape: f32[1,1,4], index: 1, kind: input, shape index: {}]
  %s2 = inlined_call_operand.vmem [shape: f32[18,18,4], index: 2, kind: input, shape index: {}]
  %s3 = inlined_call_operand.vmem [shape: bf16[9,4,128], index: 3, kind: input, shape index: {}]
  %s4 = inlined_call_operand.vmem [shape: f32[2,256,128], index: 4, kind: output, shape index: {}]
  %s5 = sld [smem:[#allocation0]]
  $region49: #{relu_conv_bn.3} parent=0
    _
  %s7 = ssub.s32 1, %s5
  %s8 = scalar_select 0, %s7, %s5
  loop: start=0, step=1, limit=4
  $region2: #{relu_conv_bn.3} parent=0 // loop_pre_header
    _
  $region3: #{relu_conv_bn.3} parent=0 // loop_header
    %s10 = sphi 0, %s14
    %p11 = scmp.ge.s32.totalorder %s10, 4
    %s20 = sphi 0, %s22
    %s23 = sphi 0, %s20
    %s24 = sphi 0, %s23
    %s40 = sphi 0, %s24
    %s44 = sphi 0, %s44
    %s46 = sphi 0, %s44
    %s47 = sphi 0, %s46
    %s61 = sphi 0, %s47
    %s65 = sphi 0, %s65
    %s67 = sphi 0, %s65
    %s68 = sphi 0, %s67
    %s82 = sphi 0, %s68
    %s86 = sphi 0, %s86
    %s88 = sphi 0, %s86
    %s89 = sphi 0, %s88
    %s103 = sphi 0, %s89
    %s109 = sphi 0, %s111
    %s112 = sphi 0, %s109
    %s113 = sphi 0, %s112
    %s129 = sphi 0, %s113
  $region4: #{relu_conv_bn.3} parent=0 // loop_header_branch
    %13 = sbr.rel (%p11) target = $region8
  $region5: #{relu_conv_bn.3} parent=0 // loop_body
    %s15 = ssub.s32 %s10, 1
    %s16 = ssub.s32 %s10, 2
    %s17 = sadd.s32 %s10, 1
    %s18 = ssub.s32 %s10, %s17
    %p19 = scmp.eq.s32.totalorder %s18, 0
    %s21 = sadd.s32 %s20, 1
    %s22 = scalar_select %p19, %s20, %s21
    %p25 = pneg %p19
    %p26 = scmp.eq.s32.totalorder %s10, 1
    %p27 = por %p25, %p26
    %p28 = scmp.ne.s32.totalorder %s20, %s23
    %p29 = scmp.eq.s32.totalorder %s10, 0
    %p30 = por %p28, %p29
    %p31 = scmp.ne.s32.totalorder %s20, %s23
    %p32 = scmp.eq.s32.totalorder %s15, 1
    %p33 = por %p31, %p32
    %p34 = scmp.ne.s32.totalorder %s23, %s24
    %p35 = scmp.eq.s32.totalorder %s15, 0
    %p36 = por %p34, %p35
    %p37 = scmp.ne.s32.totalorder %s23, %s24
    %p38 = scmp.eq.s32.totalorder %s16, 1
    %p39 = por %p37, %p38
    %p41 = scmp.ne.s32.totalorder %s24, %s40
    %p42 = scmp.eq.s32.totalorder %s16, 0
    %p43 = por %p41, %p42
    %s45 = sadd.s32 %s44, 1
    %p48 = scmp.eq.s32.totalorder %s10, 1
    %p49 = scmp.ne.s32.totalorder %s44, %s46
    %p50 = scmp.eq.s32.totalorder %s10, 0
    %p51 = por %p49, %p50
    %p52 = scmp.ne.s32.totalorder %s44, %s46
    %p53 = scmp.eq.s32.totalorder %s15, 1
    %p54 = por %p52, %p53
    %p55 = scmp.ne.s32.totalorder %s46, %s47
    %p56 = scmp.eq.s32.totalorder %s15, 0
    %p57 = por %p55, %p56
    %p58 = scmp.ne.s32.totalorder %s46, %s47
    %p59 = scmp.eq.s32.totalorder %s16, 1
    %p60 = por %p58, %p59
    %p62 = scmp.ne.s32.totalorder %s47, %s61
    %p63 = scmp.eq.s32.totalorder %s16, 0
    %p64 = por %p62, %p63
    %s66 = sadd.s32 %s65, 1
    %p69 = scmp.eq.s32.totalorder %s10, 1
    %p70 = scmp.ne.s32.totalorder %s65, %s67
    %p71 = scmp.eq.s32.totalorder %s10, 0
    %p72 = por %p70, %p71
    %p73 = scmp.ne.s32.totalorder %s65, %s67
    %p74 = scmp.eq.s32.totalorder %s15, 1
    %p75 = por %p73, %p74
    %p76 = scmp.ne.s32.totalorder %s67, %s68
    %p77 = scmp.eq.s32.totalorder %s15, 0
    %p78 = por %p76, %p77
    %p79 = scmp.ne.s32.totalorder %s67, %s68
    %p80 = scmp.eq.s32.totalorder %s16, 1
    %p81 = por %p79, %p80
    %p83 = scmp.ne.s32.totalorder %s68, %s82
    %p84 = scmp.eq.s32.totalorder %s16, 0
    %p85 = por %p83, %p84
    %s87 = sadd.s32 %s86, 1
    %p90 = scmp.eq.s32.totalorder %s10, 1
    %p91 = scmp.ne.s32.totalorder %s86, %s88
    %p92 = scmp.eq.s32.totalorder %s10, 0
    %p93 = por %p91, %p92
    %p94 = scmp.ne.s32.totalorder %s86, %s88
    %p95 = scmp.eq.s32.totalorder %s15, 1
    %p96 = por %p94, %p95
    %p97 = scmp.ne.s32.totalorder %s88, %s89
    %p98 = scmp.eq.s32.totalorder %s15, 0
    %p99 = por %p97, %p98
    %p100 = scmp.ne.s32.totalorder %s88, %s89
    %p101 = scmp.eq.s32.totalorder %s16, 1
    %p102 = por %p100, %p101
    %p104 = scmp.ne.s32.totalorder %s89, %s103
    %p105 = scmp.eq.s32.totalorder %s16, 0
    %p106 = por %p104, %p105
    %s107 = ssub.s32 %s10, %s17
    %p108 = scmp.eq.s32.totalorder %s107, 0
    %s110 = sadd.s32 %s109, 1
    %s111 = scalar_select %p108, %s109, %s110
    %p114 = pneg %p108
    %p115 = scmp.eq.s32.totalorder %s10, 1
    %p116 = por %p114, %p115
    %p117 = scmp.ne.s32.totalorder %s109, %s112
    %p118 = scmp.eq.s32.totalorder %s10, 0
    %p119 = por %p117, %p118
    %p120 = scmp.ne.s32.totalorder %s109, %s112
    %p121 = scmp.eq.s32.totalorder %s15, 1
    %p122 = por %p120, %p121
    %p123 = scmp.ne.s32.totalorder %s112, %s113
    %p124 = scmp.eq.s32.totalorder %s15, 0
    %p125 = por %p123, %p124
    %p126 = scmp.ne.s32.totalorder %s112, %s113
    %p127 = scmp.eq.s32.totalorder %s16, 1
    %p128 = por %p126, %p127
    %p130 = scmp.ne.s32.totalorder %s113, %s129
    %p131 = scmp.eq.s32.totalorder %s16, 0
    %p132 = por %p130, %p131
    %p133 = scmp.le.s32.totalorder 1, %s10
    %p134 = scmp.lt.s32.totalorder %s10, 3
    %p135 = pnand %p133, %p134
    %p136 = pneg %p135
    // Predicated region
    $region9: #{relu_conv_bn.3} parent=5 // pred_check
      _
    $region10: #{relu_conv_bn.3} parent=5 // pred_check_branch
      %138 = sbr.rel (%p135) target = $region12
    $region11: #{relu_conv_bn.3} parent=5 // pred_region
      %s139 = ssub.s32 %s10, 1
      // Predicated region
      $region13: #{relu_conv_bn.3} parent=11 // pred_check
        %p140 = pneg %p57
      $region14: #{relu_conv_bn.3} parent=11 // pred_check_branch
        %142 = sbr.rel (%p140) target = $region16
      $region15: #{relu_conv_bn.3} parent=11 // pred_region
        _
      $region16: #{relu_conv_bn.3} parent=11 // pred_fallthru
        _
      // Predicated region
      $region17: #{relu_conv_bn.3} parent=11 // pred_check
        %p143 = pneg %p78
      $region18: #{relu_conv_bn.3} parent=11 // pred_check_branch
        %145 = sbr.rel (%p143) target = $region20
      $region19: #{relu_conv_bn.3} parent=11 // pred_region
        _
      $region20: #{relu_conv_bn.3} parent=11 // pred_fallthru
        _
      // Predicated region
      $region21: #{relu_conv_bn.3} parent=11 // pred_check
        %p146 = pneg %p99
      $region22: #{relu_conv_bn.3} parent=11 // pred_check_branch
        %148 = sbr.rel (%p146) target = $region24
      $region23: #{relu_conv_bn.3} parent=11 // pred_region
        _
      $region24: #{relu_conv_bn.3} parent=11 // pred_fallthru
        _
    $region12: #{relu_conv_bn.3} parent=5 // pred_fallthru
      _
    %p149 = scmp.lt.s32.totalorder %s10, 2
    // Predicated region
    $region25: #{relu_conv_bn.3} parent=5 // pred_check
      %p150 = pneg %p149
    $region26: #{relu_conv_bn.3} parent=5 // pred_check_branch
      %152 = sbr.rel (%p150) target = $region28
    $region27: #{relu_conv_bn.3} parent=5 // pred_region
      // Predicated region
      $region29: #{relu_conv_bn.3} parent=27 // pred_check
        %p153 = pneg %p30
      $region30: #{relu_conv_bn.3} parent=27 // pred_check_branch
        %155 = sbr.rel (%p153) target = $region32
      $region31: #{relu_conv_bn.3} parent=27 // pred_region
        %p156 = scmp.lt.s32.totalorder %s10, 1
        %s157 = scalar_select %p156, %s10, 1
        %s158 = smul.addr %s157, 54
        %s159 = smul.addr %s158, 8
        %s160 = scalar_lea.vmem %s0, %s159
      $region32: #{relu_conv_bn.3} parent=27 // pred_fallthru
        _
    $region28: #{relu_conv_bn.3} parent=5 // pred_fallthru
      _
    %p161 = scmp.le.s32.totalorder 1, %s10
    %p162 = scmp.lt.s32.totalorder %s10, 3
    %p163 = pnand %p161, %p162
    %p164 = pneg %p163
    // Predicated region
    $region33: #{relu_conv_bn.3} parent=5 // pred_check
      _
    $region34: #{relu_conv_bn.3} parent=5 // pred_check_branch
      %166 = sbr.rel (%p163) target = $region36
    $region35: #{relu_conv_bn.3} parent=5 // pred_region
      %s167 = ssub.s32 %s10, 1
      %p168 = scmp.lt.s32.totalorder %s15, 1
      %s169 = scalar_select %p168, %s15, 1
      %s170 = smul.addr %s169, 54
      %s171 = smul.addr %s170, 8
      %s172 = scalar_lea.vmem %s0, %s171
      %p173 = pneg %p36
      %p174 = pneg %p33
      %p175 = pneg %p57
      %p176 = pneg %p54
      %p177 = pneg %p78
      %p178 = pneg %p75
      %p179 = pneg %p99
      %p180 = pneg %p96
      %p181 = pneg %p125
      %p182 = pneg %p122
      %p183 = scmp.lt.s32.totalorder %s15, 1
      %s184 = scalar_select %p183, %s15, 1
      %s185 = smul.addr %s184, 32
      %s186 = smul.addr %s185, 8
      %s187 = scalar_lea.vmem %s4, %s186
      %p188 = scmp.lt.s32.totalorder %s15, 1
      %s189 = scalar_select %p188, %s15, 1
      %s190 = smul.addr %s189, 54
      %s191 = smul.addr %s190, 8
      %s192 = scalar_lea.vmem %s0, %s191
      %p193 = scmp.lt.s32.totalorder %s15, 1
      %s194 = scalar_select %p193, %s15, 1
      %s195 = smul.addr %s194, 32
      %s196 = smul.addr %s195, 8
      %s197 = scalar_lea.vmem %s4, %s196
      %v199 = vld [vmem:[%s192] sm:$0xff]
      %v200 = vld [vmem:[%s192 + $0x8] sm:$0xff]
      %v201 = vld [vmem:[%s192 + $0x10] sm:$0x3]
      %v202 = vld [vmem:[%s192 + $0x18] sm:$0xff]
      %v203 = vld [vmem:[%s192 + $0x20] sm:$0xff]
      %v204 = vld [vmem:[%s192 + $0x28] sm:$0x3]
      %v205 = vld [vmem:[%s192 + $0x30] sm:$0xff]
      %v206 = vld [vmem:[%s192 + $0x38] sm:$0xff]
      %v207 = vld [vmem:[%s192 + $0x40] sm:$0x3]
      %v208 = vld [vmem:[%s192 + $0x48] sm:$0xff]
      %v209 = vld [vmem:[%s192 + $0x50] sm:$0xff]
      %v210 = vld [vmem:[%s192 + $0x58] sm:$0x3]
      %v211 = vld [vmem:[%s192 + $0x60] sm:$0xff]
      %v212 = vld [vmem:[%s192 + $0x68] sm:$0xff]
      %v213 = vld [vmem:[%s192 + $0x70] sm:$0x3]
      %v214 = vld [vmem:[%s192 + $0x78] sm:$0xff]
      %v215 = vld [vmem:[%s192 + $0x80] sm:$0xff]
      %v216 = vld [vmem:[%s192 + $0x88] sm:$0x3]
      %v217 = vld [vmem:[%s192 + $0x90] sm:$0xff]
      %v218 = vld [vmem:[%s192 + $0x98] sm:$0xff]
      %v219 = vld [vmem:[%s192 + $0xa0] sm:$0x3]
      %v220 = vld [vmem:[%s192 + $0xa8] sm:$0xff]
      %v221 = vld [vmem:[%s192 + $0xb0] sm:$0xff]
      %v222 = vld [vmem:[%s192 + $0xb8] sm:$0x3]
      %v223 = vld [vmem:[%s192 + $0xc0] sm:$0xff]
      %v224 = vld [vmem:[%s192 + $0xc8] sm:$0xff]
      %v225 = vld [vmem:[%s192 + $0xd0] sm:$0x3]
      %v226 = vld [vmem:[%s192 + $0xd8] sm:$0xff]
      %v227 = vld [vmem:[%s192 + $0xe0] sm:$0xff]
      %v228 = vld [vmem:[%s192 + $0xe8] sm:$0x3]
      %v229 = vld [vmem:[%s192 + $0xf0] sm:$0xff]
      %v230 = vld [vmem:[%s192 + $0xf8] sm:$0xff]
      %v231 = vld [vmem:[%s192 + $0x100] sm:$0x3]
      %v232 = vld [vmem:[%s192 + $0x108] sm:$0xff]
      %v233 = vld [vmem:[%s192 + $0x110] sm:$0xff]
      %v234 = vld [vmem:[%s192 + $0x118] sm:$0x3]
      %v235 = vld [vmem:[%s192 + $0x120] sm:$0xff]
      %v236 = vld [vmem:[%s192 + $0x128] sm:$0xff]
      %v237 = vld [vmem:[%s192 + $0x130] sm:$0x3]
      %v238 = vld [vmem:[%s192 + $0x138] sm:$0xff]
      %v239 = vld [vmem:[%s192 + $0x140] sm:$0xff]
      %v240 = vld [vmem:[%s192 + $0x148] sm:$0x3]
      %v241 = vld [vmem:[%s192 + $0x150] sm:$0xff]
      %v242 = vld [vmem:[%s192 + $0x158] sm:$0xff]
      %v243 = vld [vmem:[%s192 + $0x160] sm:$0x3]
      %v244 = vld [vmem:[%s192 + $0x168] sm:$0xff]
      %v245 = vld [vmem:[%s192 + $0x170] sm:$0xff]
      %v246 = vld [vmem:[%s192 + $0x178] sm:$0x3]
      %v247 = vld [vmem:[%s192 + $0x180] sm:$0xff]
      %v248 = vld [vmem:[%s192 + $0x188] sm:$0xff]
      %v249 = vld [vmem:[%s192 + $0x190] sm:$0x3]
      %v250 = vld [vmem:[%s192 + $0x198] sm:$0xff]
      %v251 = vld [vmem:[%s192 + $0x1a0] sm:$0xff]
      %v252 = vld [vmem:[%s192 + $0x1a8] sm:$0x3]
      %v253 = vld [vmem:[%s1] sm:$0x1]
      %v255 = vlaneseq
      %v256 = vshrl.u32 %v255, 7
      %v257 = vsub.s32 0, %v256
      %v258 = vrot.slane %v253, %v257
      %v260 = vmul.f32 %v199, %v258
      %v261 = vmul.f32 %v200, %v258
      %v262 = vmul.f32 %v201, %v258
      %v263 = vmul.f32 %v202, %v258
      %v264 = vmul.f32 %v203, %v258
      %v265 = vmul.f32 %v204, %v258
      %v266 = vmul.f32 %v205, %v258
      %v267 = vmul.f32 %v206, %v258
      %v268 = vmul.f32 %v207, %v258
      %v269 = vmul.f32 %v208, %v258
      %v270 = vmul.f32 %v209, %v258
      %v271 = vmul.f32 %v210, %v258
      %v272 = vmul.f32 %v211, %v258
      %v273 = vmul.f32 %v212, %v258
      %v274 = vmul.f32 %v213, %v258
      %v275 = vmul.f32 %v214, %v258
      %v276 = vmul.f32 %v215, %v258
      %v277 = vmul.f32 %v216, %v258
      %v278 = vmul.f32 %v217, %v258
      %v279 = vmul.f32 %v218, %v258
      %v280 = vmul.f32 %v219, %v258
      %v281 = vmul.f32 %v220, %v258
      %v282 = vmul.f32 %v221, %v258
      %v283 = vmul.f32 %v222, %v258
      %v284 = vmul.f32 %v223, %v258
      %v285 = vmul.f32 %v224, %v258
      %v286 = vmul.f32 %v225, %v258
      %v287 = vmul.f32 %v226, %v258
      %v288 = vmul.f32 %v227, %v258
      %v289 = vmul.f32 %v228, %v258
      %v290 = vmul.f32 %v229, %v258
      %v291 = vmul.f32 %v230, %v258
      %v292 = vmul.f32 %v231, %v258
      %v293 = vmul.f32 %v232, %v258
      %v294 = vmul.f32 %v233, %v258
      %v295 = vmul.f32 %v234, %v258
      %v296 = vmul.f32 %v235, %v258
      %v297 = vmul.f32 %v236, %v258
      %v298 = vmul.f32 %v237, %v258
      %v299 = vmul.f32 %v238, %v258
      %v300 = vmul.f32 %v239, %v258
      %v301 = vmul.f32 %v240, %v258
      %v302 = vmul.f32 %v241, %v258
      %v303 = vmul.f32 %v242, %v258
      %v304 = vmul.f32 %v243, %v258
      %v305 = vmul.f32 %v244, %v258
      %v306 = vmul.f32 %v245, %v258
      %v307 = vmul.f32 %v246, %v258
      %v308 = vmul.f32 %v247, %v258
      %v309 = vmul.f32 %v248, %v258
      %v310 = vmul.f32 %v249, %v258
      %v311 = vmul.f32 %v250, %v258
      %v312 = vmul.f32 %v251, %v258
      %v313 = vmul.f32 %v252, %v258
      %v314 = vld [vmem:[%s2] sm:$0xff]
      %v315 = vld [vmem:[%s2 + $0x8] sm:$0xff]
      %v316 = vld [vmem:[%s2 + $0x10] sm:$0x3]
      %v317 = vld [vmem:[%s2 + $0x18] sm:$0xff]
      %v318 = vld [vmem:[%s2 + $0x20] sm:$0xff]
      %v319 = vld [vmem:[%s2 + $0x28] sm:$0x3]
      %v320 = vld [vmem:[%s2 + $0x30] sm:$0xff]
      %v321 = vld [vmem:[%s2 + $0x38] sm:$0xff]
      %v322 = vld [vmem:[%s2 + $0x40] sm:$0x3]
      %v323 = vld [vmem:[%s2 + $0x48] sm:$0xff]
      %v324 = vld [vmem:[%s2 + $0x50] sm:$0xff]
      %v325 = vld [vmem:[%s2 + $0x58] sm:$0x3]
      %v326 = vld [vmem:[%s2 + $0x60] sm:$0xff]
      %v327 = vld [vmem:[%s2 + $0x68] sm:$0xff]
      %v328 = vld [vmem:[%s2 + $0x70] sm:$0x3]
      %v329 = vld [vmem:[%s2 + $0x78] sm:$0xff]
      %v330 = vld [vmem:[%s2 + $0x80] sm:$0xff]
      %v331 = vld [vmem:[%s2 + $0x88] sm:$0x3]
      %v332 = vld [vmem:[%s2 + $0x90] sm:$0xff]
      %v333 = vld [vmem:[%s2 + $0x98] sm:$0xff]
      %v334 = vld [vmem:[%s2 + $0xa0] sm:$0x3]
      %v335 = vld [vmem:[%s2 + $0xa8] sm:$0xff]
      %v336 = vld [vmem:[%s2 + $0xb0] sm:$0xff]
      %v337 = vld [vmem:[%s2 + $0xb8] sm:$0x3]
      %v338 = vld [vmem:[%s2 + $0xc0] sm:$0xff]
      %v339 = vld [vmem:[%s2 + $0xc8] sm:$0xff]
      %v340 = vld [vmem:[%s2 + $0xd0] sm:$0x3]
      %v341 = vld [vmem:[%s2 + $0xd8] sm:$0xff]
      %v342 = vld [vmem:[%s2 + $0xe0] sm:$0xff]
      %v343 = vld [vmem:[%s2 + $0xe8] sm:$0x3]
      %v344 = vld [vmem:[%s2 + $0xf0] sm:$0xff]
      %v345 = vld [vmem:[%s2 + $0xf8] sm:$0xff]
      %v346 = vld [vmem:[%s2 + $0x100] sm:$0x3]
      %v347 = vld [vmem:[%s2 + $0x108] sm:$0xff]
      %v348 = vld [vmem:[%s2 + $0x110] sm:$0xff]
      %v349 = vld [vmem:[%s2 + $0x118] sm:$0x3]
      %v350 = vld [vmem:[%s2 + $0x120] sm:$0xff]
      %v351 = vld [vmem:[%s2 + $0x128] sm:$0xff]
      %v352 = vld [vmem:[%s2 + $0x130] sm:$0x3]
      %v353 = vld [vmem:[%s2 + $0x138] sm:$0xff]
      %v354 = vld [vmem:[%s2 + $0x140] sm:$0xff]
      %v355 = vld [vmem:[%s2 + $0x148] sm:$0x3]
      %v356 = vld [vmem:[%s2 + $0x150] sm:$0xff]
      %v357 = vld [vmem:[%s2 + $0x158] sm:$0xff]
      %v358 = vld [vmem:[%s2 + $0x160] sm:$0x3]
      %v359 = vld [vmem:[%s2 + $0x168] sm:$0xff]
      %v360 = vld [vmem:[%s2 + $0x170] sm:$0xff]
      %v361 = vld [vmem:[%s2 + $0x178] sm:$0x3]
      %v362 = vld [vmem:[%s2 + $0x180] sm:$0xff]
      %v363 = vld [vmem:[%s2 + $0x188] sm:$0xff]
      %v364 = vld [vmem:[%s2 + $0x190] sm:$0x3]
      %v365 = vld [vmem:[%s2 + $0x198] sm:$0xff]
      %v366 = vld [vmem:[%s2 + $0x1a0] sm:$0xff]
      %v367 = vld [vmem:[%s2 + $0x1a8] sm:$0x3]
      %v368 = vadd.f32 %v260, %v314
      %v369 = vadd.f32 %v261, %v315
      %v370 = vadd.f32 %v262, %v316
      %v371 = vadd.f32 %v263, %v317
      %v372 = vadd.f32 %v264, %v318
      %v373 = vadd.f32 %v265, %v319
      %v374 = vadd.f32 %v266, %v320
      %v375 = vadd.f32 %v267, %v321
      %v376 = vadd.f32 %v268, %v322
      %v377 = vadd.f32 %v269, %v323
      %v378 = vadd.f32 %v270, %v324
      %v379 = vadd.f32 %v271, %v325
      %v380 = vadd.f32 %v272, %v326
      %v381 = vadd.f32 %v273, %v327
      %v382 = vadd.f32 %v274, %v328
      %v383 = vadd.f32 %v275, %v329
      %v384 = vadd.f32 %v276, %v330
      %v385 = vadd.f32 %v277, %v331
      %v386 = vadd.f32 %v278, %v332
      %v387 = vadd.f32 %v279, %v333
      %v388 = vadd.f32 %v280, %v334
      %v389 = vadd.f32 %v281, %v335
      %v390 = vadd.f32 %v282, %v336
      %v391 = vadd.f32 %v283, %v337
      %v392 = vadd.f32 %v284, %v338
      %v393 = vadd.f32 %v285, %v339
      %v394 = vadd.f32 %v286, %v340
      %v395 = vadd.f32 %v287, %v341
      %v396 = vadd.f32 %v288, %v342
      %v397 = vadd.f32 %v289, %v343
      %v398 = vadd.f32 %v290, %v344
      %v399 = vadd.f32 %v291, %v345
      %v400 = vadd.f32 %v292, %v346
      %v401 = vadd.f32 %v293, %v347
      %v402 = vadd.f32 %v294, %v348
      %v403 = vadd.f32 %v295, %v349
      %v404 = vadd.f32 %v296, %v350
      %v405 = vadd.f32 %v297, %v351
      %v406 = vadd.f32 %v298, %v352
      %v407 = vadd.f32 %v299, %v353
      %v408 = vadd.f32 %v300, %v354
      %v409 = vadd.f32 %v301, %v355
      %v410 = vadd.f32 %v302, %v356
      %v411 = vadd.f32 %v303, %v357
      %v412 = vadd.f32 %v304, %v358
      %v413 = vadd.f32 %v305, %v359
      %v414 = vadd.f32 %v306, %v360
      %v415 = vadd.f32 %v307, %v361
      %v416 = vadd.f32 %v308, %v362
      %v417 = vadd.f32 %v309, %v363
      %v418 = vadd.f32 %v310, %v364
      %v419 = vadd.f32 %v311, %v365
      %v420 = vadd.f32 %v312, %v366
      %v421 = vadd.f32 %v313, %v367
      %v422 = vpack.c.bf16 %v369, %v368
      %v423 = vpack.c.bf16 %v372, %v371
      %v424 = vpack.c.bf16 %v375, %v374
      %v425 = vpack.c.bf16 %v378, %v377
      %v426 = vpack.c.bf16 %v381, %v380
      %v427 = vpack.c.bf16 %v384, %v383
      %v428 = vpack.c.bf16 %v387, %v386
      %v429 = vpack.c.bf16 %v390, %v389
      %v430 = vpack.c.bf16 %v393, %v392
      %v431 = vpack.c.bf16 %v396, %v395
      %v432 = vpack.c.bf16 %v399, %v398
      %v433 = vpack.c.bf16 %v402, %v401
      %v434 = vpack.c.bf16 %v405, %v404
      %v435 = vpack.c.bf16 %v408, %v407
      %v436 = vpack.c.bf16 %v411, %v410
      %v437 = vpack.c.bf16 %v414, %v413
      %v438 = vld [vmem:[%s3] sm:$0x3]
      %vm487 = vcmask 1046528
      %v488 = vrot.slane %v368, 1
      %v489 = vrot.slane %v369, 1
      %v490 = vsel %vm487, %v488, %v489
      %v491 = vrot.slane %v370, 1
      %v492 = vsel %vm487, %v489, %v491
      %v493 = vrot.slane %v371, 1
      %v494 = vrot.slane %v372, 1
      %v495 = vsel %vm487, %v493, %v494
      %v496 = vrot.slane %v373, 1
      %v497 = vsel %vm487, %v494, %v496
      %v498 = vrot.slane %v374, 1
      %v499 = vrot.slane %v375, 1
      %v500 = vsel %vm487, %v498, %v499
      %v501 = vrot.slane %v376, 1
      %v502 = vsel %vm487, %v499, %v501
      %v503 = vrot.slane %v377, 1
      %v504 = vrot.slane %v378, 1
      %v505 = vsel %vm487, %v503, %v504
      %v506 = vrot.slane %v379, 1
      %v507 = vsel %vm487, %v504, %v506
      %v508 = vrot.slane %v380, 1
      %v509 = vrot.slane %v381, 1
      %v510 = vsel %vm487, %v508, %v509
      %v511 = vrot.slane %v382, 1
      %v512 = vsel %vm487, %v509, %v511
      %v513 = vrot.slane %v383, 1
      %v514 = vrot.slane %v384, 1
      %v515 = vsel %vm487, %v513, %v514
      %v516 = vrot.slane %v385, 1
      %v517 = vsel %vm487, %v514, %v516
      %v518 = vrot.slane %v386, 1
      %v519 = vrot.slane %v387, 1
      %v520 = vsel %vm487, %v518, %v519
      %v521 = vrot.slane %v388, 1
      %v522 = vsel %vm487, %v519, %v521
      %v523 = vrot.slane %v389, 1
      %v524 = vrot.slane %v390, 1
      %v525 = vsel %vm487, %v523, %v524
      %v526 = vrot.slane %v391, 1
      %v527 = vsel %vm487, %v524, %v526
      %v528 = vrot.slane %v392, 1
      %v529 = vrot.slane %v393, 1
      %v530 = vsel %vm487, %v528, %v529
      %v531 = vrot.slane %v394, 1
      %v532 = vsel %vm487, %v529, %v531
      %v533 = vrot.slane %v395, 1
      %v534 = vrot.slane %v396, 1
      %v535 = vsel %vm487, %v533, %v534
      %v536 = vrot.slane %v397, 1
      %v537 = vsel %vm487, %v534, %v536
      %v538 = vrot.slane %v398, 1
      %v539 = vrot.slane %v399, 1
      %v540 = vsel %vm487, %v538, %v539
      %v541 = vrot.slane %v400, 1
      %v542 = vsel %vm487, %v539, %v541
      %v543 = vrot.slane %v401, 1
      %v544 = vrot.slane %v402, 1
      %v545 = vsel %vm487, %v543, %v544
      %v546 = vrot.slane %v403, 1
      %v547 = vsel %vm487, %v544, %v546
      %v548 = vrot.slane %v404, 1
      %v549 = vrot.slane %v405, 1
      %v550 = vsel %vm487, %v548, %v549
      %v551 = vrot.slane %v406, 1
      %v552 = vsel %vm487, %v549, %v551
      %v553 = vrot.slane %v407, 1
      %v554 = vrot.slane %v408, 1
      %v555 = vsel %vm487, %v553, %v554
      %v556 = vrot.slane %v409, 1
      %v557 = vsel %vm487, %v554, %v556
      %v558 = vrot.slane %v410, 1
      %v559 = vrot.slane %v411, 1
      %v560 = vsel %vm487, %v558, %v559
      %v561 = vrot.slane %v412, 1
      %v562 = vsel %vm487, %v559, %v561
      %v563 = vrot.slane %v413, 1
      %v564 = vrot.slane %v414, 1
      %v565 = vsel %vm487, %v563, %v564
      %v566 = vrot.slane %v415, 1
      %v567 = vsel %vm487, %v564, %v566
      %v600 = vpack.c.bf16 %v492, %v490
      %v601 = vpack.c.bf16 %v497, %v495
      %v602 = vpack.c.bf16 %v502, %v500
      %v603 = vpack.c.bf16 %v507, %v505
      %v604 = vpack.c.bf16 %v512, %v510
      %v605 = vpack.c.bf16 %v517, %v515
      %v606 = vpack.c.bf16 %v522, %v520
      %v607 = vpack.c.bf16 %v527, %v525
      %v608 = vpack.c.bf16 %v532, %v530
      %v609 = vpack.c.bf16 %v537, %v535
      %v610 = vpack.c.bf16 %v542, %v540
      %v611 = vpack.c.bf16 %v547, %v545
      %v612 = vpack.c.bf16 %v552, %v550
      %v613 = vpack.c.bf16 %v557, %v555
      %v614 = vpack.c.bf16 %v562, %v560
      %v615 = vpack.c.bf16 %v567, %v565
      %s616 = scalar_lea.vmem %s3, 2
      %v617 = vld [vmem:[%s616] sm:$0x3]
      %vm618 = vcmask 31744
      %v620 = vsel %vm618, %v600, 0
      %v623 = vsel %vm618, %v601, 0
      %v626 = vsel %vm618, %v602, 0
      %v629 = vsel %vm618, %v603, 0
      %v632 = vsel %vm618, %v604, 0
      %v635 = vsel %vm618, %v605, 0
      %v638 = vsel %vm618, %v606, 0
      %v641 = vsel %vm618, %v607, 0
      %v644 = vsel %vm618, %v608, 0
      %v647 = vsel %vm618, %v609, 0
      %v650 = vsel %vm618, %v610, 0
      %v653 = vsel %vm618, %v611, 0
      %v656 = vsel %vm618, %v612, 0
      %v659 = vsel %vm618, %v613, 0
      %v662 = vsel %vm618, %v614, 0
      %v665 = vsel %vm618, %v615, 0
      %vm667 = vcmask 1041408
      %v669 = vsel %vm667, %v617, 0
      %671 = vmatprep.subr.bf16.mxu0 0
      %672 = vmatpush1.bf16.msra.mxu0 0
      %673 = vmatprep.subr.bf16.mxu0 0
      %674 = vmatpush1.bf16.msra.mxu0 0
      %675 = vmatprep.subr.bf16.mxu0 0
      %676 = vmatpush1.bf16.msra.mxu0 0
      %677 = vmatprep.subr.bf16.mxu0 0
      %678 = vmatpush1.bf16.msra.mxu0 0
      %679 = vmatprep.subr.bf16.mxu0 0
      %680 = vmatpush1.bf16.msra.mxu0 0
      %681 = vmatprep.subr.bf16.mxu0 0
      %682 = vmatpush1.bf16.msra.mxu0 0
      %683 = vmatprep.subr.bf16.mxu0 0
      %684 = vmatpush1.bf16.msra.mxu0 0
      %685 = vmatprep.subr.bf16.mxu0 0
      %686 = vmatpush1.bf16.msra.mxu0 %v669
      %687 = vmatprep.subr.bf16.mxu0 0
      %688 = vmatpush2.bf16.msra.mxu0 0
      %689 = vmatprep.subr.bf16.mxu0 0
      %690 = vmatpush2.bf16.msra.mxu0 0
      %691 = vmatprep.subr.bf16.mxu0 0
      %692 = vmatpush2.bf16.msra.mxu0 0
      %693 = vmatprep.subr.bf16.mxu0 0
      %694 = vmatpush2.bf16.msra.mxu0 0
      %695 = vmatprep.subr.bf16.mxu0 0
      %696 = vmatpush2.bf16.msra.mxu0 0
      %697 = vmatprep.subr.bf16.mxu0 0
      %698 = vmatpush2.bf16.msra.mxu0 0
      %699 = vmatprep.subr.bf16.mxu0 0
      %700 = vmatpush2.bf16.msra.mxu0 0
      %701 = vmatprep.subr.bf16.mxu0 0
      %702 = vmatpush2.bf16.msra.mxu0 0
      %703 = vmatprep.mubr.bf16.mxu0 0
      %704 = vmatmul.mubr.bf16.gmra.mxu0 %v620
      %v705 = vpop.f32.mrf.mxu0
      %v706 = vadd.f32 0.0, %v705
      %v707 = vpop.f32.mrf.mxu0
      %v708 = vpop.f32.mrf.mxu0
      %v709 = vadd.f32 0.0, %v708
      %v710 = vpop.f32.mrf.mxu0
      %711 = vmatprep.mubr.bf16.mxu0 0
      %712 = vmatmul.mubr.bf16.gmra.mxu0 %v623
      %v713 = vpop.f32.mrf.mxu0
      %v714 = vadd.f32 0.0, %v713
      %v715 = vpop.f32.mrf.mxu0
      %v716 = vpop.f32.mrf.mxu0
      %v717 = vadd.f32 0.0, %v716
      %v718 = vpop.f32.mrf.mxu0
      %719 = vmatprep.mubr.bf16.mxu0 0
      %720 = vmatmul.mubr.bf16.gmra.mxu0 %v626
      %v721 = vpop.f32.mrf.mxu0
      %v722 = vadd.f32 0.0, %v721
      %v723 = vpop.f32.mrf.mxu0
      %v724 = vpop.f32.mrf.mxu0
      %v725 = vadd.f32 0.0, %v724
      %v726 = vpop.f32.mrf.mxu0
      %727 = vmatprep.mubr.bf16.mxu0 0
      %728 = vmatmul.mubr.bf16.gmra.mxu0 %v629
      %v729 = vpop.f32.mrf.mxu0
      %v730 = vadd.f32 0.0, %v729
      %v731 = vpop.f32.mrf.mxu0
      %v732 = vpop.f32.mrf.mxu0
      %v733 = vadd.f32 0.0, %v732
      %v734 = vpop.f32.mrf.mxu0
      %735 = vmatprep.mubr.bf16.mxu0 0
      %736 = vmatmul.mubr.bf16.gmra.mxu0 %v632
      %v737 = vpop.f32.mrf.mxu0
      %v738 = vadd.f32 0.0, %v737
      %v739 = vpop.f32.mrf.mxu0
      %v740 = vpop.f32.mrf.mxu0
      %v741 = vadd.f32 0.0, %v740
      %v742 = vpop.f32.mrf.mxu0
      %743 = vmatprep.mubr.bf16.mxu0 0
      %744 = vmatmul.mubr.bf16.gmra.mxu0 %v635
      %v745 = vpop.f32.mrf.mxu0
      %v746 = vadd.f32 0.0, %v745
      %v747 = vpop.f32.mrf.mxu0
      %v748 = vpop.f32.mrf.mxu0
      %v749 = vadd.f32 0.0, %v748
      %v750 = vpop.f32.mrf.mxu0
      %751 = vmatprep.mubr.bf16.mxu0 0
      %752 = vmatmul.mubr.bf16.gmra.mxu0 %v638
      %v753 = vpop.f32.mrf.mxu0
      %v754 = vadd.f32 0.0, %v753
      %v755 = vpop.f32.mrf.mxu0
      %v756 = vpop.f32.mrf.mxu0
      %v757 = vadd.f32 0.0, %v756
      %v758 = vpop.f32.mrf.mxu0
      %759 = vmatprep.mubr.bf16.mxu0 0
      %760 = vmatmul.mubr.bf16.gmra.mxu0 %v641
      %v761 = vpop.f32.mrf.mxu0
      %v762 = vadd.f32 0.0, %v761
      %v763 = vpop.f32.mrf.mxu0
      %v764 = vpop.f32.mrf.mxu0
      %v765 = vadd.f32 0.0, %v764
      %v766 = vpop.f32.mrf.mxu0
      %767 = vmatprep.mubr.bf16.mxu0 0
      %768 = vmatmul.mubr.bf16.gmra.mxu0 %v644
      %v769 = vpop.f32.mrf.mxu0
      %v770 = vadd.f32 0.0, %v769
      %v771 = vpop.f32.mrf.mxu0
      %v772 = vpop.f32.mrf.mxu0
      %v773 = vadd.f32 0.0, %v772
      %v774 = vpop.f32.mrf.mxu0
      %775 = vmatprep.mubr.bf16.mxu0 0
      %776 = vmatmul.mubr.bf16.gmra.mxu0 %v647
      %v777 = vpop.f32.mrf.mxu0
      %v778 = vadd.f32 0.0, %v777
      %v779 = vpop.f32.mrf.mxu0
      %v780 = vpop.f32.mrf.mxu0
      %v781 = vadd.f32 0.0, %v780
      %v782 = vpop.f32.mrf.mxu0
      %783 = vmatprep.mubr.bf16.mxu0 0
      %784 = vmatmul.mubr.bf16.gmra.mxu0 %v650
      %v785 = vpop.f32.mrf.mxu0
      %v786 = vadd.f32 0.0, %v785
      %v787 = vpop.f32.mrf.mxu0
      %v788 = vpop.f32.mrf.mxu0
      %v789 = vadd.f32 0.0, %v788
      %v790 = vpop.f32.mrf.mxu0
      %791 = vmatprep.mubr.bf16.mxu0 0
      %792 = vmatmul.mubr.bf16.gmra.mxu0 %v653
      %v793 = vpop.f32.mrf.mxu0
      %v794 = vadd.f32 0.0, %v793
      %v795 = vpop.f32.mrf.mxu0
      %v796 = vpop.f32.mrf.mxu0
      %v797 = vadd.f32 0.0, %v796
      %v798 = vpop.f32.mrf.mxu0
      %799 = vmatprep.mubr.bf16.mxu0 0
      %800 = vmatmul.mubr.bf16.gmra.mxu0 %v656
      %v801 = vpop.f32.mrf.mxu0
      %v802 = vadd.f32 0.0, %v801
      %v803 = vpop.f32.mrf.mxu0
      %v804 = vpop.f32.mrf.mxu0
      %v805 = vadd.f32 0.0, %v804
      %v806 = vpop.f32.mrf.mxu0
      %807 = vmatprep.mubr.bf16.mxu0 0
      %808 = vmatmul.mubr.bf16.gmra.mxu0 %v659
      %v809 = vpop.f32.mrf.mxu0
      %v810 = vadd.f32 0.0, %v809
      %v811 = vpop.f32.mrf.mxu0
      %v812 = vpop.f32.mrf.mxu0
      %v813 = vadd.f32 0.0, %v812
      %v814 = vpop.f32.mrf.mxu0
      %815 = vmatprep.mubr.bf16.mxu0 0
      %816 = vmatmul.mubr.bf16.gmra.mxu0 %v662
      %v817 = vpop.f32.mrf.mxu0
      %v818 = vadd.f32 0.0, %v817
      %v819 = vpop.f32.mrf.mxu0
      %v820 = vpop.f32.mrf.mxu0
      %v821 = vadd.f32 0.0, %v820
      %v822 = vpop.f32.mrf.mxu0
      %823 = vmatprep.mubr.bf16.mxu0 0
      %824 = vmatmul.mubr.bf16.gmra.mxu0 %v665
      %v825 = vpop.f32.mrf.mxu0
      %v826 = vadd.f32 0.0, %v825
      %v827 = vpop.f32.mrf.mxu0
      %v828 = vpop.f32.mrf.mxu0
      %v829 = vadd.f32 0.0, %v828
      %v830 = vpop.f32.mrf.mxu0
      %831 = vdwg.mxu0
      %v833 = vsel %vm618, %v422, 0
      %v836 = vsel %vm618, %v423, 0
      %v839 = vsel %vm618, %v424, 0
      %v842 = vsel %vm618, %v425, 0
      %v845 = vsel %vm618, %v426, 0
      %v848 = vsel %vm618, %v427, 0
      %v851 = vsel %vm618, %v428, 0
      %v854 = vsel %vm618, %v429, 0
      %v857 = vsel %vm618, %v430, 0
      %v860 = vsel %vm618, %v431, 0
      %v863 = vsel %vm618, %v432, 0
      %v866 = vsel %vm618, %v433, 0
      %v869 = vsel %vm618, %v434, 0
      %v872 = vsel %vm618, %v435, 0
      %v875 = vsel %vm618, %v436, 0
      %v878 = vsel %vm618, %v437, 0
      %v881 = vsel %vm667, %v438, 0
      %883 = vmatprep.subr.bf16.mxu0 0
      %884 = vmatpush1.bf16.msra.mxu0 0
      %885 = vmatprep.subr.bf16.mxu0 0
      %886 = vmatpush1.bf16.msra.mxu0 0
      %887 = vmatprep.subr.bf16.mxu0 0
      %888 = vmatpush1.bf16.msra.mxu0 0
      %889 = vmatprep.subr.bf16.mxu0 0
      %890 = vmatpush1.bf16.msra.mxu0 0
      %891 = vmatprep.subr.bf16.mxu0 0
      %892 = vmatpush1.bf16.msra.mxu0 0
      %893 = vmatprep.subr.bf16.mxu0 0
      %894 = vmatpush1.bf16.msra.mxu0 0
      %895 = vmatprep.subr.bf16.mxu0 0
      %896 = vmatpush1.bf16.msra.mxu0 0
      %897 = vmatprep.subr.bf16.mxu0 0
      %898 = vmatpush1.bf16.msra.mxu0 %v881
      %899 = vmatprep.subr.bf16.mxu0 0
      %900 = vmatpush2.bf16.msra.mxu0 0
      %901 = vmatprep.subr.bf16.mxu0 0
      %902 = vmatpush2.bf16.msra.mxu0 0
      %903 = vmatprep.subr.bf16.mxu0 0
      %904 = vmatpush2.bf16.msra.mxu0 0
      %905 = vmatprep.subr.bf16.mxu0 0
      %906 = vmatpush2.bf16.msra.mxu0 0
      %907 = vmatprep.subr.bf16.mxu0 0
      %908 = vmatpush2.bf16.msra.mxu0 0
      %909 = vmatprep.subr.bf16.mxu0 0
      %910 = vmatpush2.bf16.msra.mxu0 0
      %911 = vmatprep.subr.bf16.mxu0 0
      %912 = vmatpush2.bf16.msra.mxu0 0
      %913 = vmatprep.subr.bf16.mxu0 0
      %914 = vmatpush2.bf16.msra.mxu0 0
      %915 = vmatprep.mubr.bf16.mxu0 0
      %916 = vmatmul.mubr.bf16.gmra.mxu0 %v833
      %v917 = vpop.f32.mrf.mxu0
      %v918 = vadd.f32 %v706, %v917
      %v919 = vpop.f32.mrf.mxu0
      %v920 = vpop.f32.mrf.mxu0
      %v921 = vadd.f32 %v709, %v920
      %v922 = vpop.f32.mrf.mxu0
      %923 = vmatprep.mubr.bf16.mxu0 0
      %924 = vmatmul.mubr.bf16.gmra.mxu0 %v836
      %v925 = vpop.f32.mrf.mxu0
      %v926 = vadd.f32 %v714, %v925
      %v927 = vpop.f32.mrf.mxu0
      %v928 = vpop.f32.mrf.mxu0
      %v929 = vadd.f32 %v717, %v928
      %v930 = vpop.f32.mrf.mxu0
      %931 = vmatprep.mubr.bf16.mxu0 0
      %932 = vmatmul.mubr.bf16.gmra.mxu0 %v839
      %v933 = vpop.f32.mrf.mxu0
      %v934 = vadd.f32 %v722, %v933
      %v935 = vpop.f32.mrf.mxu0
      %v936 = vpop.f32.mrf.mxu0
      %v937 = vadd.f32 %v725, %v936
      %v938 = vpop.f32.mrf.mxu0
      %939 = vmatprep.mubr.bf16.mxu0 0
      %940 = vmatmul.mubr.bf16.gmra.mxu0 %v842
      %v941 = vpop.f32.mrf.mxu0
      %v942 = vadd.f32 %v730, %v941
      %v943 = vpop.f32.mrf.mxu0
      %v944 = vpop.f32.mrf.mxu0
      %v945 = vadd.f32 %v733, %v944
      %v946 = vpop.f32.mrf.mxu0
      %947 = vmatprep.mubr.bf16.mxu0 0
      %948 = vmatmul.mubr.bf16.gmra.mxu0 %v845
      %v949 = vpop.f32.mrf.mxu0
      %v950 = vadd.f32 %v738, %v949
      %v951 = vpop.f32.mrf.mxu0
      %v952 = vpop.f32.mrf.mxu0
      %v953 = vadd.f32 %v741, %v952
      %v954 = vpop.f32.mrf.mxu0
      %955 = vmatprep.mubr.bf16.mxu0 0
      %956 = vmatmul.mubr.bf16.gmra.mxu0 %v848
      %v957 = vpop.f32.mrf.mxu0
      %v958 = vadd.f32 %v746, %v957
      %v959 = vpop.f32.mrf.mxu0
      %v960 = vpop.f32.mrf.mxu0
      %v961 = vadd.f32 %v749, %v960
      %v962 = vpop.f32.mrf.mxu0
      %963 = vmatprep.mubr.bf16.mxu0 0
      %964 = vmatmul.mubr.bf16.gmra.mxu0 %v851
      %v965 = vpop.f32.mrf.mxu0
      %v966 = vadd.f32 %v754, %v965
      %v967 = vpop.f32.mrf.mxu0
      %v968 = vpop.f32.mrf.mxu0
      %v969 = vadd.f32 %v757, %v968
      %v970 = vpop.f32.mrf.mxu0
      %971 = vmatprep.mubr.bf16.mxu0 0
      %972 = vmatmul.mubr.bf16.gmra.mxu0 %v854
      %v973 = vpop.f32.mrf.mxu0
      %v974 = vadd.f32 %v762, %v973
      %v975 = vpop.f32.mrf.mxu0
      %v976 = vpop.f32.mrf.mxu0
      %v977 = vadd.f32 %v765, %v976
      %v978 = vpop.f32.mrf.mxu0
      %979 = vmatprep.mubr.bf16.mxu0 0
      %980 = vmatmul.mubr.bf16.gmra.mxu0 %v857
      %v981 = vpop.f32.mrf.mxu0
      %v982 = vadd.f32 %v770, %v981
      %v983 = vpop.f32.mrf.mxu0
      %v984 = vpop.f32.mrf.mxu0
      %v985 = vadd.f32 %v773, %v984
      %v986 = vpop.f32.mrf.mxu0
      %987 = vmatprep.mubr.bf16.mxu0 0
      %988 = vmatmul.mubr.bf16.gmra.mxu0 %v860
      %v989 = vpop.f32.mrf.mxu0
      %v990 = vadd.f32 %v778, %v989
      %v991 = vpop.f32.mrf.mxu0
      %v992 = vpop.f32.mrf.mxu0
      %v993 = vadd.f32 %v781, %v992
      %v994 = vpop.f32.mrf.mxu0
      %995 = vmatprep.mubr.bf16.mxu0 0
      %996 = vmatmul.mubr.bf16.gmra.mxu0 %v863
      %v997 = vpop.f32.mrf.mxu0
      %v998 = vadd.f32 %v786, %v997
      %v999 = vpop.f32.mrf.mxu0
      %v1000 = vpop.f32.mrf.mxu0
      %v1001 = vadd.f32 %v789, %v1000
      %v1002 = vpop.f32.mrf.mxu0
      %1003 = vmatprep.mubr.bf16.mxu0 0
      %1004 = vmatmul.mubr.bf16.gmra.mxu0 %v866
      %v1005 = vpop.f32.mrf.mxu0
      %v1006 = vadd.f32 %v794, %v1005
      %v1007 = vpop.f32.mrf.mxu0
      %v1008 = vpop.f32.mrf.mxu0
      %v1009 = vadd.f32 %v797, %v1008
      %v1010 = vpop.f32.mrf.mxu0
      %1011 = vmatprep.mubr.bf16.mxu0 0
      %1012 = vmatmul.mubr.bf16.gmra.mxu0 %v869
      %v1013 = vpop.f32.mrf.mxu0
      %v1014 = vadd.f32 %v802, %v1013
      %v1015 = vpop.f32.mrf.mxu0
      %v1016 = vpop.f32.mrf.mxu0
      %v1017 = vadd.f32 %v805, %v1016
      %v1018 = vpop.f32.mrf.mxu0
      %1019 = vmatprep.mubr.bf16.mxu0 0
      %1020 = vmatmul.mubr.bf16.gmra.mxu0 %v872
      %v1021 = vpop.f32.mrf.mxu0
      %v1022 = vadd.f32 %v810, %v1021
      %v1023 = vpop.f32.mrf.mxu0
      %v1024 = vpop.f32.mrf.mxu0
      %v1025 = vadd.f32 %v813, %v1024
      %v1026 = vpop.f32.mrf.mxu0
      %1027 = vmatprep.mubr.bf16.mxu0 0
      %1028 = vmatmul.mubr.bf16.gmra.mxu0 %v875
      %v1029 = vpop.f32.mrf.mxu0
      %v1030 = vadd.f32 %v818, %v1029
      %v1031 = vpop.f32.mrf.mxu0
      %v1032 = vpop.f32.mrf.mxu0
      %v1033 = vadd.f32 %v821, %v1032
      %v1034 = vpop.f32.mrf.mxu0
      %1035 = vmatprep.mubr.bf16.mxu0 0
      %1036 = vmatmul.mubr.bf16.gmra.mxu0 %v878
      %v1037 = vpop.f32.mrf.mxu0
      %v1038 = vadd.f32 %v826, %v1037
      %v1039 = vpop.f32.mrf.mxu0
      %v1040 = vpop.f32.mrf.mxu0
      %v1041 = vadd.f32 %v829, %v1040
      %v1042 = vpop.f32.mrf.mxu0
      %1043 = vdwg.mxu0
      %vm1044 = vcmask 1045504
      %v1045 = vrot.slane %v368, 2
      %v1046 = vrot.slane %v369, 2
      %v1047 = vsel %vm1044, %v1045, %v1046
      %v1048 = vrot.slane %v370, 2
      %v1049 = vsel %vm1044, %v1046, %v1048
      %v1050 = vrot.slane %v371, 2
      %v1051 = vrot.slane %v372, 2
      %v1052 = vsel %vm1044, %v1050, %v1051
      %v1053 = vrot.slane %v373, 2
      %v1054 = vsel %vm1044, %v1051, %v1053
      %v1055 = vrot.slane %v374, 2
      %v1056 = vrot.slane %v375, 2
      %v1057 = vsel %vm1044, %v1055, %v1056
      %v1058 = vrot.slane %v376, 2
      %v1059 = vsel %vm1044, %v1056, %v1058
      %v1060 = vrot.slane %v377, 2
      %v1061 = vrot.slane %v378, 2
      %v1062 = vsel %vm1044, %v1060, %v1061
      %v1063 = vrot.slane %v379, 2
      %v1064 = vsel %vm1044, %v1061, %v1063
      %v1065 = vrot.slane %v380, 2
      %v1066 = vrot.slane %v381, 2
      %v1067 = vsel %vm1044, %v1065, %v1066
      %v1068 = vrot.slane %v382, 2
      %v1069 = vsel %vm1044, %v1066, %v1068
      %v1070 = vrot.slane %v383, 2
      %v1071 = vrot.slane %v384, 2
      %v1072 = vsel %vm1044, %v1070, %v1071
      %v1073 = vrot.slane %v385, 2
      %v1074 = vsel %vm1044, %v1071, %v1073
      %v1075 = vrot.slane %v386, 2
      %v1076 = vrot.slane %v387, 2
      %v1077 = vsel %vm1044, %v1075, %v1076
      %v1078 = vrot.slane %v388, 2
      %v1079 = vsel %vm1044, %v1076, %v1078
      %v1080 = vrot.slane %v389, 2
      %v1081 = vrot.slane %v390, 2
      %v1082 = vsel %vm1044, %v1080, %v1081
      %v1083 = vrot.slane %v391, 2
      %v1084 = vsel %vm1044, %v1081, %v1083
      %v1085 = vrot.slane %v392, 2
      %v1086 = vrot.slane %v393, 2
      %v1087 = vsel %vm1044, %v1085, %v1086
      %v1088 = vrot.slane %v394, 2
      %v1089 = vsel %vm1044, %v1086, %v1088
      %v1090 = vrot.slane %v395, 2
      %v1091 = vrot.slane %v396, 2
      %v1092 = vsel %vm1044, %v1090, %v1091
      %v1093 = vrot.slane %v397, 2
      %v1094 = vsel %vm1044, %v1091, %v1093
      %v1095 = vrot.slane %v398, 2
      %v1096 = vrot.slane %v399, 2
      %v1097 = vsel %vm1044, %v1095, %v1096
      %v1098 = vrot.slane %v400, 2
      %v1099 = vsel %vm1044, %v1096, %v1098
      %v1100 = vrot.slane %v401, 2
      %v1101 = vrot.slane %v402, 2
      %v1102 = vsel %vm1044, %v1100, %v1101
      %v1103 = vrot.slane %v403, 2
      %v1104 = vsel %vm1044, %v1101, %v1103
      %v1105 = vrot.slane %v404, 2
      %v1106 = vrot.slane %v405, 2
      %v1107 = vsel %vm1044, %v1105, %v1106
      %v1108 = vrot.slane %v406, 2
      %v1109 = vsel %vm1044, %v1106, %v1108
      %v1110 = vrot.slane %v407, 2
      %v1111 = vrot.slane %v408, 2
      %v1112 = vsel %vm1044, %v1110, %v1111
      %v1113 = vrot.slane %v409, 2
      %v1114 = vsel %vm1044, %v1111, %v1113
      %v1115 = vrot.slane %v410, 2
      %v1116 = vrot.slane %v411, 2
      %v1117 = vsel %vm1044, %v1115, %v1116
      %v1118 = vrot.slane %v412, 2
      %v1119 = vsel %vm1044, %v1116, %v1118
      %v1120 = vrot.slane %v413, 2
      %v1121 = vrot.slane %v414, 2
      %v1122 = vsel %vm1044, %v1120, %v1121
      %v1123 = vrot.slane %v415, 2
      %v1124 = vsel %vm1044, %v1121, %v1123
      %v1157 = vpack.c.bf16 %v1049, %v1047
      %v1158 = vpack.c.bf16 %v1054, %v1052
      %v1159 = vpack.c.bf16 %v1059, %v1057
      %v1160 = vpack.c.bf16 %v1064, %v1062
      %v1161 = vpack.c.bf16 %v1069, %v1067
      %v1162 = vpack.c.bf16 %v1074, %v1072
      %v1163 = vpack.c.bf16 %v1079, %v1077
      %v1164 = vpack.c.bf16 %v1084, %v1082
      %v1165 = vpack.c.bf16 %v1089, %v1087
      %v1166 = vpack.c.bf16 %v1094, %v1092
      %v1167 = vpack.c.bf16 %v1099, %v1097
      %v1168 = vpack.c.bf16 %v1104, %v1102
      %v1169 = vpack.c.bf16 %v1109, %v1107
      %v1170 = vpack.c.bf16 %v1114, %v1112
      %v1171 = vpack.c.bf16 %v1119, %v1117
      %v1172 = vpack.c.bf16 %v1124, %v1122
      %s1173 = scalar_lea.vmem %s3, 4
      %v1174 = vld [vmem:[%s1173] sm:$0x3]
      %v1176 = vsel %vm618, %v1157, 0
      %v1179 = vsel %vm618, %v1158, 0
      %v1182 = vsel %vm618, %v1159, 0
      %v1185 = vsel %vm618, %v1160, 0
      %v1188 = vsel %vm618, %v1161, 0
      %v1191 = vsel %vm618, %v1162, 0
      %v1194 = vsel %vm618, %v1163, 0
      %v1197 = vsel %vm618, %v1164, 0
      %v1200 = vsel %vm618, %v1165, 0
      %v1203 = vsel %vm618, %v1166, 0
      %v1206 = vsel %vm618, %v1167, 0
      %v1209 = vsel %vm618, %v1168, 0
      %v1212 = vsel %vm618, %v1169, 0
      %v1215 = vsel %vm618, %v1170, 0
      %v1218 = vsel %vm618, %v1171, 0
      %v1221 = vsel %vm618, %v1172, 0
      %v1224 = vsel %vm667, %v1174, 0
      %1226 = vmatprep.subr.bf16.mxu0 0
      %1227 = vmatpush1.bf16.msra.mxu0 0
      %1228 = vmatprep.subr.bf16.mxu0 0
      %1229 = vmatpush1.bf16.msra.mxu0 0
      %1230 = vmatprep.subr.bf16.mxu0 0
      %1231 = vmatpush1.bf16.msra.mxu0 0
      %1232 = vmatprep.subr.bf16.mxu0 0
      %1233 = vmatpush1.bf16.msra.mxu0 0
      %1234 = vmatprep.subr.bf16.mxu0 0
      %1235 = vmatpush1.bf16.msra.mxu0 0
      %1236 = vmatprep.subr.bf16.mxu0 0
      %1237 = vmatpush1.bf16.msra.mxu0 0
      %1238 = vmatprep.subr.bf16.mxu0 0
      %1239 = vmatpush1.bf16.msra.mxu0 0
      %1240 = vmatprep.subr.bf16.mxu0 0
      %1241 = vmatpush1.bf16.msra.mxu0 %v1224
      %1242 = vmatprep.subr.bf16.mxu0 0
      %1243 = vmatpush2.bf16.msra.mxu0 0
      %1244 = vmatprep.subr.bf16.mxu0 0
      %1245 = vmatpush2.bf16.msra.mxu0 0
      %1246 = vmatprep.subr.bf16.mxu0 0
      %1247 = vmatpush2.bf16.msra.mxu0 0
      %1248 = vmatprep.subr.bf16.mxu0 0
      %1249 = vmatpush2.bf16.msra.mxu0 0
      %1250 = vmatprep.subr.bf16.mxu0 0
      %1251 = vmatpush2.bf16.msra.mxu0 0
      %1252 = vmatprep.subr.bf16.mxu0 0
      %1253 = vmatpush2.bf16.msra.mxu0 0
      %1254 = vmatprep.subr.bf16.mxu0 0
      %1255 = vmatpush2.bf16.msra.mxu0 0
      %1256 = vmatprep.subr.bf16.mxu0 0
      %1257 = vmatpush2.bf16.msra.mxu0 0
      %1258 = vmatprep.mubr.bf16.mxu0 0
      %1259 = vmatmul.mubr.bf16.gmra.mxu0 %v1176
      %v1260 = vpop.f32.mrf.mxu0
      %v1261 = vadd.f32 0.0, %v1260
      %v1262 = vpop.f32.mrf.mxu0
      %v1263 = vpop.f32.mrf.mxu0
      %v1264 = vadd.f32 0.0, %v1263
      %v1265 = vpop.f32.mrf.mxu0
      %1266 = vmatprep.mubr.bf16.mxu0 0
      %1267 = vmatmul.mubr.bf16.gmra.mxu0 %v1179
      %v1268 = vpop.f32.mrf.mxu0
      %v1269 = vadd.f32 0.0, %v1268
      %v1270 = vpop.f32.mrf.mxu0
      %v1271 = vpop.f32.mrf.mxu0
      %v1272 = vadd.f32 0.0, %v1271
      %v1273 = vpop.f32.mrf.mxu0
      %1274 = vmatprep.mubr.bf16.mxu0 0
      %1275 = vmatmul.mubr.bf16.gmra.mxu0 %v1182
      %v1276 = vpop.f32.mrf.mxu0
      %v1277 = vadd.f32 0.0, %v1276
      %v1278 = vpop.f32.mrf.mxu0
      %v1279 = vpop.f32.mrf.mxu0
      %v1280 = vadd.f32 0.0, %v1279
      %v1281 = vpop.f32.mrf.mxu0
      %1282 = vmatprep.mubr.bf16.mxu0 0
      %1283 = vmatmul.mubr.bf16.gmra.mxu0 %v1185
      %v1284 = vpop.f32.mrf.mxu0
      %v1285 = vadd.f32 0.0, %v1284
      %v1286 = vpop.f32.mrf.mxu0
      %v1287 = vpop.f32.mrf.mxu0
      %v1288 = vadd.f32 0.0, %v1287
      %v1289 = vpop.f32.mrf.mxu0
      %1290 = vmatprep.mubr.bf16.mxu0 0
      %1291 = vmatmul.mubr.bf16.gmra.mxu0 %v1188
      %v1292 = vpop.f32.mrf.mxu0
      %v1293 = vadd.f32 0.0, %v1292
      %v1294 = vpop.f32.mrf.mxu0
      %v1295 = vpop.f32.mrf.mxu0
      %v1296 = vadd.f32 0.0, %v1295
      %v1297 = vpop.f32.mrf.mxu0
      %1298 = vmatprep.mubr.bf16.mxu0 0
      %1299 = vmatmul.mubr.bf16.gmra.mxu0 %v1191
      %v1300 = vpop.f32.mrf.mxu0
      %v1301 = vadd.f32 0.0, %v1300
      %v1302 = vpop.f32.mrf.mxu0
      %v1303 = vpop.f32.mrf.mxu0
      %v1304 = vadd.f32 0.0, %v1303
      %v1305 = vpop.f32.mrf.mxu0
      %1306 = vmatprep.mubr.bf16.mxu0 0
      %1307 = vmatmul.mubr.bf16.gmra.mxu0 %v1194
      %v1308 = vpop.f32.mrf.mxu0
      %v1309 = vadd.f32 0.0, %v1308
      %v1310 = vpop.f32.mrf.mxu0
      %v1311 = vpop.f32.mrf.mxu0
      %v1312 = vadd.f32 0.0, %v1311
      %v1313 = vpop.f32.mrf.mxu0
      %1314 = vmatprep.mubr.bf16.mxu0 0
      %1315 = vmatmul.mubr.bf16.gmra.mxu0 %v1197
      %v1316 = vpop.f32.mrf.mxu0
      %v1317 = vadd.f32 0.0, %v1316
      %v1318 = vpop.f32.mrf.mxu0
      %v1319 = vpop.f32.mrf.mxu0
      %v1320 = vadd.f32 0.0, %v1319
      %v1321 = vpop.f32.mrf.mxu0
      %1322 = vmatprep.mubr.bf16.mxu0 0
      %1323 = vmatmul.mubr.bf16.gmra.mxu0 %v1200
      %v1324 = vpop.f32.mrf.mxu0
      %v1325 = vadd.f32 0.0, %v1324
      %v1326 = vpop.f32.mrf.mxu0
      %v1327 = vpop.f32.mrf.mxu0
      %v1328 = vadd.f32 0.0, %v1327
      %v1329 = vpop.f32.mrf.mxu0
      %1330 = vmatprep.mubr.bf16.mxu0 0
      %1331 = vmatmul.mubr.bf16.gmra.mxu0 %v1203
      %v1332 = vpop.f32.mrf.mxu0
      %v1333 = vadd.f32 0.0, %v1332
      %v1334 = vpop.f32.mrf.mxu0
      %v1335 = vpop.f32.mrf.mxu0
      %v1336 = vadd.f32 0.0, %v1335
      %v1337 = vpop.f32.mrf.mxu0
      %1338 = vmatprep.mubr.bf16.mxu0 0
      %1339 = vmatmul.mubr.bf16.gmra.mxu0 %v1206
      %v1340 = vpop.f32.mrf.mxu0
      %v1341 = vadd.f32 0.0, %v1340
      %v1342 = vpop.f32.mrf.mxu0
      %v1343 = vpop.f32.mrf.mxu0
      %v1344 = vadd.f32 0.0, %v1343
      %v1345 = vpop.f32.mrf.mxu0
      %1346 = vmatprep.mubr.bf16.mxu0 0
      %1347 = vmatmul.mubr.bf16.gmra.mxu0 %v1209
      %v1348 = vpop.f32.mrf.mxu0
      %v1349 = vadd.f32 0.0, %v1348
      %v1350 = vpop.f32.mrf.mxu0
      %v1351 = vpop.f32.mrf.mxu0
      %v1352 = vadd.f32 0.0, %v1351
      %v1353 = vpop.f32.mrf.mxu0
      %1354 = vmatprep.mubr.bf16.mxu0 0
      %1355 = vmatmul.mubr.bf16.gmra.mxu0 %v1212
      %v1356 = vpop.f32.mrf.mxu0
      %v1357 = vadd.f32 0.0, %v1356
      %v1358 = vpop.f32.mrf.mxu0
      %v1359 = vpop.f32.mrf.mxu0
      %v1360 = vadd.f32 0.0, %v1359
      %v1361 = vpop.f32.mrf.mxu0
      %1362 = vmatprep.mubr.bf16.mxu0 0
      %1363 = vmatmul.mubr.bf16.gmra.mxu0 %v1215
      %v1364 = vpop.f32.mrf.mxu0
      %v1365 = vadd.f32 0.0, %v1364
      %v1366 = vpop.f32.mrf.mxu0
      %v1367 = vpop.f32.mrf.mxu0
      %v1368 = vadd.f32 0.0, %v1367
      %v1369 = vpop.f32.mrf.mxu0
      %1370 = vmatprep.mubr.bf16.mxu0 0
      %1371 = vmatmul.mubr.bf16.gmra.mxu0 %v1218
      %v1372 = vpop.f32.mrf.mxu0
      %v1373 = vadd.f32 0.0, %v1372
      %v1374 = vpop.f32.mrf.mxu0
      %v1375 = vpop.f32.mrf.mxu0
      %v1376 = vadd.f32 0.0, %v1375
      %v1377 = vpop.f32.mrf.mxu0
      %1378 = vmatprep.mubr.bf16.mxu0 0
      %1379 = vmatmul.mubr.bf16.gmra.mxu0 %v1221
      %v1380 = vpop.f32.mrf.mxu0
      %v1381 = vadd.f32 0.0, %v1380
      %v1382 = vpop.f32.mrf.mxu0
      %v1383 = vpop.f32.mrf.mxu0
      %v1384 = vadd.f32 0.0, %v1383
      %v1385 = vpop.f32.mrf.mxu0
      %1386 = vdwg.mxu0
      %v1387 = vadd.f32 %v918, %v1261
      %v1388 = vadd.f32 %v921, %v1264
      %v1389 = vadd.f32 %v926, %v1269
      %v1390 = vadd.f32 %v929, %v1272
      %v1391 = vadd.f32 %v934, %v1277
      %v1392 = vadd.f32 %v937, %v1280
      %v1393 = vadd.f32 %v942, %v1285
      %v1394 = vadd.f32 %v945, %v1288
      %v1395 = vadd.f32 %v950, %v1293
      %v1396 = vadd.f32 %v953, %v1296
      %v1397 = vadd.f32 %v958, %v1301
      %v1398 = vadd.f32 %v961, %v1304
      %v1399 = vadd.f32 %v966, %v1309
      %v1400 = vadd.f32 %v969, %v1312
      %v1401 = vadd.f32 %v974, %v1317
      %v1402 = vadd.f32 %v977, %v1320
      %v1403 = vadd.f32 %v982, %v1325
      %v1404 = vadd.f32 %v985, %v1328
      %v1405 = vadd.f32 %v990, %v1333
      %v1406 = vadd.f32 %v993, %v1336
      %v1407 = vadd.f32 %v998, %v1341
      %v1408 = vadd.f32 %v1001, %v1344
      %v1409 = vadd.f32 %v1006, %v1349
      %v1410 = vadd.f32 %v1009, %v1352
      %v1411 = vadd.f32 %v1014, %v1357
      %v1412 = vadd.f32 %v1017, %v1360
      %v1413 = vadd.f32 %v1022, %v1365
      %v1414 = vadd.f32 %v1025, %v1368
      %v1415 = vadd.f32 %v1030, %v1373
      %v1416 = vadd.f32 %v1033, %v1376
      %v1417 = vadd.f32 %v1038, %v1381
      %v1418 = vadd.f32 %v1041, %v1384
      %v1419 = vpack.c.bf16 %v417, %v416
      %s1420 = scalar_lea.vmem %s3, 6
      %v1421 = vld [vmem:[%s1420] sm:$0x3]
      %v1423 = vsel %vm618, %v1419, 0
      %v1426 = vsel %vm667, %v1421, 0
      %1428 = vmatprep.subr.bf16.mxu0 0
      %1429 = vmatpush1.bf16.msra.mxu0 0
      %1430 = vmatprep.subr.bf16.mxu0 0
      %1431 = vmatpush1.bf16.msra.mxu0 0
      %1432 = vmatprep.subr.bf16.mxu0 0
      %1433 = vmatpush1.bf16.msra.mxu0 0
      %1434 = vmatprep.subr.bf16.mxu0 0
      %1435 = vmatpush1.bf16.msra.mxu0 0
      %1436 = vmatprep.subr.bf16.mxu0 0
      %1437 = vmatpush1.bf16.msra.mxu0 0
      %1438 = vmatprep.subr.bf16.mxu0 0
      %1439 = vmatpush1.bf16.msra.mxu0 0
      %1440 = vmatprep.subr.bf16.mxu0 0
      %1441 = vmatpush1.bf16.msra.mxu0 0
      %1442 = vmatprep.subr.bf16.mxu0 0
      %1443 = vmatpush1.bf16.msra.mxu0 %v1426
      %1444 = vmatprep.subr.bf16.mxu0 0
      %1445 = vmatpush2.bf16.msra.mxu0 0
      %1446 = vmatprep.subr.bf16.mxu0 0
      %1447 = vmatpush2.bf16.msra.mxu0 0
      %1448 = vmatprep.subr.bf16.mxu0 0
      %1449 = vmatpush2.bf16.msra.mxu0 0
      %1450 = vmatprep.subr.bf16.mxu0 0
      %1451 = vmatpush2.bf16.msra.mxu0 0
      %1452 = vmatprep.subr.bf16.mxu0 0
      %1453 = vmatpush2.bf16.msra.mxu0 0
      %1454 = vmatprep.subr.bf16.mxu0 0
      %1455 = vmatpush2.bf16.msra.mxu0 0
      %1456 = vmatprep.subr.bf16.mxu0 0
      %1457 = vmatpush2.bf16.msra.mxu0 0
      %1458 = vmatprep.subr.bf16.mxu0 0
      %1459 = vmatpush2.bf16.msra.mxu0 0
      %1460 = vmatprep.mubr.bf16.mxu0 0
      %1461 = vmatmul.mubr.bf16.gmra.mxu0 %v836
      %v1462 = vpop.f32.mrf.mxu0
      %v1463 = vadd.f32 0.0, %v1462
      %v1464 = vpop.f32.mrf.mxu0
      %v1465 = vpop.f32.mrf.mxu0
      %v1466 = vadd.f32 0.0, %v1465
      %v1467 = vpop.f32.mrf.mxu0
      %1468 = vmatprep.mubr.bf16.mxu0 0
      %1469 = vmatmul.mubr.bf16.gmra.mxu0 %v839
      %v1470 = vpop.f32.mrf.mxu0
      %v1471 = vadd.f32 0.0, %v1470
      %v1472 = vpop.f32.mrf.mxu0
      %v1473 = vpop.f32.mrf.mxu0
      %v1474 = vadd.f32 0.0, %v1473
      %v1475 = vpop.f32.mrf.mxu0
      %1476 = vmatprep.mubr.bf16.mxu0 0
      %1477 = vmatmul.mubr.bf16.gmra.mxu0 %v842
      %v1478 = vpop.f32.mrf.mxu0
      %v1479 = vadd.f32 0.0, %v1478
      %v1480 = vpop.f32.mrf.mxu0
      %v1481 = vpop.f32.mrf.mxu0
      %v1482 = vadd.f32 0.0, %v1481
      %v1483 = vpop.f32.mrf.mxu0
      %1484 = vmatprep.mubr.bf16.mxu0 0
      %1485 = vmatmul.mubr.bf16.gmra.mxu0 %v845
      %v1486 = vpop.f32.mrf.mxu0
      %v1487 = vadd.f32 0.0, %v1486
      %v1488 = vpop.f32.mrf.mxu0
      %v1489 = vpop.f32.mrf.mxu0
      %v1490 = vadd.f32 0.0, %v1489
      %v1491 = vpop.f32.mrf.mxu0
      %1492 = vmatprep.mubr.bf16.mxu0 0
      %1493 = vmatmul.mubr.bf16.gmra.mxu0 %v848
      %v1494 = vpop.f32.mrf.mxu0
      %v1495 = vadd.f32 0.0, %v1494
      %v1496 = vpop.f32.mrf.mxu0
      %v1497 = vpop.f32.mrf.mxu0
      %v1498 = vadd.f32 0.0, %v1497
      %v1499 = vpop.f32.mrf.mxu0
      %1500 = vmatprep.mubr.bf16.mxu0 0
      %1501 = vmatmul.mubr.bf16.gmra.mxu0 %v851
      %v1502 = vpop.f32.mrf.mxu0
      %v1503 = vadd.f32 0.0, %v1502
      %v1504 = vpop.f32.mrf.mxu0
      %v1505 = vpop.f32.mrf.mxu0
      %v1506 = vadd.f32 0.0, %v1505
      %v1507 = vpop.f32.mrf.mxu0
      %1508 = vmatprep.mubr.bf16.mxu0 0
      %1509 = vmatmul.mubr.bf16.gmra.mxu0 %v854
      %v1510 = vpop.f32.mrf.mxu0
      %v1511 = vadd.f32 0.0, %v1510
      %v1512 = vpop.f32.mrf.mxu0
      %v1513 = vpop.f32.mrf.mxu0
      %v1514 = vadd.f32 0.0, %v1513
      %v1515 = vpop.f32.mrf.mxu0
      %1516 = vmatprep.mubr.bf16.mxu0 0
      %1517 = vmatmul.mubr.bf16.gmra.mxu0 %v857
      %v1518 = vpop.f32.mrf.mxu0
      %v1519 = vadd.f32 0.0, %v1518
      %v1520 = vpop.f32.mrf.mxu0
      %v1521 = vpop.f32.mrf.mxu0
      %v1522 = vadd.f32 0.0, %v1521
      %v1523 = vpop.f32.mrf.mxu0
      %1524 = vmatprep.mubr.bf16.mxu0 0
      %1525 = vmatmul.mubr.bf16.gmra.mxu0 %v860
      %v1526 = vpop.f32.mrf.mxu0
      %v1527 = vadd.f32 0.0, %v1526
      %v1528 = vpop.f32.mrf.mxu0
      %v1529 = vpop.f32.mrf.mxu0
      %v1530 = vadd.f32 0.0, %v1529
      %v1531 = vpop.f32.mrf.mxu0
      %1532 = vmatprep.mubr.bf16.mxu0 0
      %1533 = vmatmul.mubr.bf16.gmra.mxu0 %v863
      %v1534 = vpop.f32.mrf.mxu0
      %v1535 = vadd.f32 0.0, %v1534
      %v1536 = vpop.f32.mrf.mxu0
      %v1537 = vpop.f32.mrf.mxu0
      %v1538 = vadd.f32 0.0, %v1537
      %v1539 = vpop.f32.mrf.mxu0
      %1540 = vmatprep.mubr.bf16.mxu0 0
      %1541 = vmatmul.mubr.bf16.gmra.mxu0 %v866
      %v1542 = vpop.f32.mrf.mxu0
      %v1543 = vadd.f32 0.0, %v1542
      %v1544 = vpop.f32.mrf.mxu0
      %v1545 = vpop.f32.mrf.mxu0
      %v1546 = vadd.f32 0.0, %v1545
      %v1547 = vpop.f32.mrf.mxu0
      %1548 = vmatprep.mubr.bf16.mxu0 0
      %1549 = vmatmul.mubr.bf16.gmra.mxu0 %v869
      %v1550 = vpop.f32.mrf.mxu0
      %v1551 = vadd.f32 0.0, %v1550
      %v1552 = vpop.f32.mrf.mxu0
      %v1553 = vpop.f32.mrf.mxu0
      %v1554 = vadd.f32 0.0, %v1553
      %v1555 = vpop.f32.mrf.mxu0
      %1556 = vmatprep.mubr.bf16.mxu0 0
      %1557 = vmatmul.mubr.bf16.gmra.mxu0 %v872
      %v1558 = vpop.f32.mrf.mxu0
      %v1559 = vadd.f32 0.0, %v1558
      %v1560 = vpop.f32.mrf.mxu0
      %v1561 = vpop.f32.mrf.mxu0
      %v1562 = vadd.f32 0.0, %v1561
      %v1563 = vpop.f32.mrf.mxu0
      %1564 = vmatprep.mubr.bf16.mxu0 0
      %1565 = vmatmul.mubr.bf16.gmra.mxu0 %v875
      %v1566 = vpop.f32.mrf.mxu0
      %v1567 = vadd.f32 0.0, %v1566
      %v1568 = vpop.f32.mrf.mxu0
      %v1569 = vpop.f32.mrf.mxu0
      %v1570 = vadd.f32 0.0, %v1569
      %v1571 = vpop.f32.mrf.mxu0
      %1572 = vmatprep.mubr.bf16.mxu0 0
      %1573 = vmatmul.mubr.bf16.gmra.mxu0 %v878
      %v1574 = vpop.f32.mrf.mxu0
      %v1575 = vadd.f32 0.0, %v1574
      %v1576 = vpop.f32.mrf.mxu0
      %v1577 = vpop.f32.mrf.mxu0
      %v1578 = vadd.f32 0.0, %v1577
      %v1579 = vpop.f32.mrf.mxu0
      %1580 = vmatprep.mubr.bf16.mxu0 0
      %1581 = vmatmul.mubr.bf16.gmra.mxu0 %v1423
      %v1582 = vpop.f32.mrf.mxu0
      %v1583 = vadd.f32 0.0, %v1582
      %v1584 = vpop.f32.mrf.mxu0
      %v1585 = vpop.f32.mrf.mxu0
      %v1586 = vadd.f32 0.0, %v1585
      %v1587 = vpop.f32.mrf.mxu0
      %1588 = vdwg.mxu0
      %v1589 = vadd.f32 %v1387, %v1463
      %v1590 = vadd.f32 %v1388, %v1466
      %v1591 = vadd.f32 %v1389, %v1471
      %v1592 = vadd.f32 %v1390, %v1474
      %v1593 = vadd.f32 %v1391, %v1479
      %v1594 = vadd.f32 %v1392, %v1482
      %v1595 = vadd.f32 %v1393, %v1487
      %v1596 = vadd.f32 %v1394, %v1490
      %v1597 = vadd.f32 %v1395, %v1495
      %v1598 = vadd.f32 %v1396, %v1498
      %v1599 = vadd.f32 %v1397, %v1503
      %v1600 = vadd.f32 %v1398, %v1506
      %v1601 = vadd.f32 %v1399, %v1511
      %v1602 = vadd.f32 %v1400, %v1514
      %v1603 = vadd.f32 %v1401, %v1519
      %v1604 = vadd.f32 %v1402, %v1522
      %v1605 = vadd.f32 %v1403, %v1527
      %v1606 = vadd.f32 %v1404, %v1530
      %v1607 = vadd.f32 %v1405, %v1535
      %v1608 = vadd.f32 %v1406, %v1538
      %v1609 = vadd.f32 %v1407, %v1543
      %v1610 = vadd.f32 %v1408, %v1546
      %v1611 = vadd.f32 %v1409, %v1551
      %v1612 = vadd.f32 %v1410, %v1554
      %v1613 = vadd.f32 %v1411, %v1559
      %v1614 = vadd.f32 %v1412, %v1562
      %v1615 = vadd.f32 %v1413, %v1567
      %v1616 = vadd.f32 %v1414, %v1570
      %v1617 = vadd.f32 %v1415, %v1575
      %v1618 = vadd.f32 %v1416, %v1578
      %v1619 = vadd.f32 %v1417, %v1583
      %v1620 = vadd.f32 %v1418, %v1586
      %v1624 = vrot.slane %v416, 1
      %v1625 = vrot.slane %v417, 1
      %v1626 = vsel %vm487, %v1624, %v1625
      %v1627 = vrot.slane %v418, 1
      %v1628 = vsel %vm487, %v1625, %v1627
      %v1631 = vpack.c.bf16 %v1628, %v1626
      %s1632 = scalar_lea.vmem %s3, 8
      %v1633 = vld [vmem:[%s1632] sm:$0x3]
      %v1635 = vsel %vm618, %v1631, 0
      %v1638 = vsel %vm667, %v1633, 0
      %1640 = vmatprep.subr.bf16.mxu0 0
      %1641 = vmatpush1.bf16.msra.mxu0 0
      %1642 = vmatprep.subr.bf16.mxu0 0
      %1643 = vmatpush1.bf16.msra.mxu0 0
      %1644 = vmatprep.subr.bf16.mxu0 0
      %1645 = vmatpush1.bf16.msra.mxu0 0
      %1646 = vmatprep.subr.bf16.mxu0 0
      %1647 = vmatpush1.bf16.msra.mxu0 0
      %1648 = vmatprep.subr.bf16.mxu0 0
      %1649 = vmatpush1.bf16.msra.mxu0 0
      %1650 = vmatprep.subr.bf16.mxu0 0
      %1651 = vmatpush1.bf16.msra.mxu0 0
      %1652 = vmatprep.subr.bf16.mxu0 0
      %1653 = vmatpush1.bf16.msra.mxu0 0
      %1654 = vmatprep.subr.bf16.mxu0 0
      %1655 = vmatpush1.bf16.msra.mxu0 %v1638
      %1656 = vmatprep.subr.bf16.mxu0 0
      %1657 = vmatpush2.bf16.msra.mxu0 0
      %1658 = vmatprep.subr.bf16.mxu0 0
      %1659 = vmatpush2.bf16.msra.mxu0 0
      %1660 = vmatprep.subr.bf16.mxu0 0
      %1661 = vmatpush2.bf16.msra.mxu0 0
      %1662 = vmatprep.subr.bf16.mxu0 0
      %1663 = vmatpush2.bf16.msra.mxu0 0
      %1664 = vmatprep.subr.bf16.mxu0 0
      %1665 = vmatpush2.bf16.msra.mxu0 0
      %1666 = vmatprep.subr.bf16.mxu0 0
      %1667 = vmatpush2.bf16.msra.mxu0 0
      %1668 = vmatprep.subr.bf16.mxu0 0
      %1669 = vmatpush2.bf16.msra.mxu0 0
      %1670 = vmatprep.subr.bf16.mxu0 0
      %1671 = vmatpush2.bf16.msra.mxu0 0
      %1672 = vmatprep.mubr.bf16.mxu0 0
      %1673 = vmatmul.mubr.bf16.gmra.mxu0 %v623
      %v1674 = vpop.f32.mrf.mxu0
      %v1675 = vadd.f32 0.0, %v1674
      %v1676 = vpop.f32.mrf.mxu0
      %v1677 = vpop.f32.mrf.mxu0
      %v1678 = vadd.f32 0.0, %v1677
      %v1679 = vpop.f32.mrf.mxu0
      %1680 = vmatprep.mubr.bf16.mxu0 0
      %1681 = vmatmul.mubr.bf16.gmra.mxu0 %v626
      %v1682 = vpop.f32.mrf.mxu0
      %v1683 = vadd.f32 0.0, %v1682
      %v1684 = vpop.f32.mrf.mxu0
      %v1685 = vpop.f32.mrf.mxu0
      %v1686 = vadd.f32 0.0, %v1685
      %v1687 = vpop.f32.mrf.mxu0
      %1688 = vmatprep.mubr.bf16.mxu0 0
      %1689 = vmatmul.mubr.bf16.gmra.mxu0 %v629
      %v1690 = vpop.f32.mrf.mxu0
      %v1691 = vadd.f32 0.0, %v1690
      %v1692 = vpop.f32.mrf.mxu0
      %v1693 = vpop.f32.mrf.mxu0
      %v1694 = vadd.f32 0.0, %v1693
      %v1695 = vpop.f32.mrf.mxu0
      %1696 = vmatprep.mubr.bf16.mxu0 0
      %1697 = vmatmul.mubr.bf16.gmra.mxu0 %v632
      %v1698 = vpop.f32.mrf.mxu0
      %v1699 = vadd.f32 0.0, %v1698
      %v1700 = vpop.f32.mrf.mxu0
      %v1701 = vpop.f32.mrf.mxu0
      %v1702 = vadd.f32 0.0, %v1701
      %v1703 = vpop.f32.mrf.mxu0
      %1704 = vmatprep.mubr.bf16.mxu0 0
      %1705 = vmatmul.mubr.bf16.gmra.mxu0 %v635
      %v1706 = vpop.f32.mrf.mxu0
      %v1707 = vadd.f32 0.0, %v1706
      %v1708 = vpop.f32.mrf.mxu0
      %v1709 = vpop.f32.mrf.mxu0
      %v1710 = vadd.f32 0.0, %v1709
      %v1711 = vpop.f32.mrf.mxu0
      %1712 = vmatprep.mubr.bf16.mxu0 0
      %1713 = vmatmul.mubr.bf16.gmra.mxu0 %v638
      %v1714 = vpop.f32.mrf.mxu0
      %v1715 = vadd.f32 0.0, %v1714
      %v1716 = vpop.f32.mrf.mxu0
      %v1717 = vpop.f32.mrf.mxu0
      %v1718 = vadd.f32 0.0, %v1717
      %v1719 = vpop.f32.mrf.mxu0
      %1720 = vmatprep.mubr.bf16.mxu0 0
      %1721 = vmatmul.mubr.bf16.gmra.mxu0 %v641
      %v1722 = vpop.f32.mrf.mxu0
      %v1723 = vadd.f32 0.0, %v1722
      %v1724 = vpop.f32.mrf.mxu0
      %v1725 = vpop.f32.mrf.mxu0
      %v1726 = vadd.f32 0.0, %v1725
      %v1727 = vpop.f32.mrf.mxu0
      %1728 = vmatprep.mubr.bf16.mxu0 0
      %1729 = vmatmul.mubr.bf16.gmra.mxu0 %v644
      %v1730 = vpop.f32.mrf.mxu0
      %v1731 = vadd.f32 0.0, %v1730
      %v1732 = vpop.f32.mrf.mxu0
      %v1733 = vpop.f32.mrf.mxu0
      %v1734 = vadd.f32 0.0, %v1733
      %v1735 = vpop.f32.mrf.mxu0
      %1736 = vmatprep.mubr.bf16.mxu0 0
      %1737 = vmatmul.mubr.bf16.gmra.mxu0 %v647
      %v1738 = vpop.f32.mrf.mxu0
      %v1739 = vadd.f32 0.0, %v1738
      %v1740 = vpop.f32.mrf.mxu0
      %v1741 = vpop.f32.mrf.mxu0
      %v1742 = vadd.f32 0.0, %v1741
      %v1743 = vpop.f32.mrf.mxu0
      %1744 = vmatprep.mubr.bf16.mxu0 0
      %1745 = vmatmul.mubr.bf16.gmra.mxu0 %v650
      %v1746 = vpop.f32.mrf.mxu0
      %v1747 = vadd.f32 0.0, %v1746
      %v1748 = vpop.f32.mrf.mxu0
      %v1749 = vpop.f32.mrf.mxu0
      %v1750 = vadd.f32 0.0, %v1749
      %v1751 = vpop.f32.mrf.mxu0
      %1752 = vmatprep.mubr.bf16.mxu0 0
      %1753 = vmatmul.mubr.bf16.gmra.mxu0 %v653
      %v1754 = vpop.f32.mrf.mxu0
      %v1755 = vadd.f32 0.0, %v1754
      %v1756 = vpop.f32.mrf.mxu0
      %v1757 = vpop.f32.mrf.mxu0
      %v1758 = vadd.f32 0.0, %v1757
      %v1759 = vpop.f32.mrf.mxu0
      %1760 = vmatprep.mubr.bf16.mxu0 0
      %1761 = vmatmul.mubr.bf16.gmra.mxu0 %v656
      %v1762 = vpop.f32.mrf.mxu0
      %v1763 = vadd.f32 0.0, %v1762
      %v1764 = vpop.f32.mrf.mxu0
      %v1765 = vpop.f32.mrf.mxu0
      %v1766 = vadd.f32 0.0, %v1765
      %v1767 = vpop.f32.mrf.mxu0
      %1768 = vmatprep.mubr.bf16.mxu0 0
      %1769 = vmatmul.mubr.bf16.gmra.mxu0 %v659
      %v1770 = vpop.f32.mrf.mxu0
      %v1771 = vadd.f32 0.0, %v1770
      %v1772 = vpop.f32.mrf.mxu0
      %v1773 = vpop.f32.mrf.mxu0
      %v1774 = vadd.f32 0.0, %v1773
      %v1775 = vpop.f32.mrf.mxu0
      %1776 = vmatprep.mubr.bf16.mxu0 0
      %1777 = vmatmul.mubr.bf16.gmra.mxu0 %v662
      %v1778 = vpop.f32.mrf.mxu0
      %v1779 = vadd.f32 0.0, %v1778
      %v1780 = vpop.f32.mrf.mxu0
      %v1781 = vpop.f32.mrf.mxu0
      %v1782 = vadd.f32 0.0, %v1781
      %v1783 = vpop.f32.mrf.mxu0
      %1784 = vmatprep.mubr.bf16.mxu0 0
      %1785 = vmatmul.mubr.bf16.gmra.mxu0 %v665
      %v1786 = vpop.f32.mrf.mxu0
      %v1787 = vadd.f32 0.0, %v1786
      %v1788 = vpop.f32.mrf.mxu0
      %v1789 = vpop.f32.mrf.mxu0
      %v1790 = vadd.f32 0.0, %v1789
      %v1791 = vpop.f32.mrf.mxu0
      %1792 = vmatprep.mubr.bf16.mxu0 0
      %1793 = vmatmul.mubr.bf16.gmra.mxu0 %v1635
      %v1794 = vpop.f32.mrf.mxu0
      %v1795 = vadd.f32 0.0, %v1794
      %v1796 = vpop.f32.mrf.mxu0
      %v1797 = vpop.f32.mrf.mxu0
      %v1798 = vadd.f32 0.0, %v1797
      %v1799 = vpop.f32.mrf.mxu0
      %1800 = vdwg.mxu0
      %v1801 = vadd.f32 %v1589, %v1675
      %v1802 = vadd.f32 %v1590, %v1678
      %v1803 = vadd.f32 %v1591, %v1683
      %v1804 = vadd.f32 %v1592, %v1686
      %v1805 = vadd.f32 %v1593, %v1691
      %v1806 = vadd.f32 %v1594, %v1694
      %v1807 = vadd.f32 %v1595, %v1699
      %v1808 = vadd.f32 %v1596, %v1702
      %v1809 = vadd.f32 %v1597, %v1707
      %v1810 = vadd.f32 %v1598, %v1710
      %v1811 = vadd.f32 %v1599, %v1715
      %v1812 = vadd.f32 %v1600, %v1718
      %v1813 = vadd.f32 %v1601, %v1723
      %v1814 = vadd.f32 %v1602, %v1726
      %v1815 = vadd.f32 %v1603, %v1731
      %v1816 = vadd.f32 %v1604, %v1734
      %v1817 = vadd.f32 %v1605, %v1739
      %v1818 = vadd.f32 %v1606, %v1742
      %v1819 = vadd.f32 %v1607, %v1747
      %v1820 = vadd.f32 %v1608, %v1750
      %v1821 = vadd.f32 %v1609, %v1755
      %v1822 = vadd.f32 %v1610, %v1758
      %v1823 = vadd.f32 %v1611, %v1763
      %v1824 = vadd.f32 %v1612, %v1766
      %v1825 = vadd.f32 %v1613, %v1771
      %v1826 = vadd.f32 %v1614, %v1774
      %v1827 = vadd.f32 %v1615, %v1779
      %v1828 = vadd.f32 %v1616, %v1782
      %v1829 = vadd.f32 %v1617, %v1787
      %v1830 = vadd.f32 %v1618, %v1790
      %v1831 = vadd.f32 %v1619, %v1795
      %v1832 = vadd.f32 %v1620, %v1798
      %v1833 = vrot.slane %v416, 2
      %v1834 = vrot.slane %v417, 2
      %v1835 = vsel %vm1044, %v1833, %v1834
      %v1836 = vrot.slane %v418, 2
      %v1837 = vsel %vm1044, %v1834, %v1836
      %v1840 = vpack.c.bf16 %v1837, %v1835
      %s1841 = scalar_lea.vmem %s3, 10
      %v1842 = vld [vmem:[%s1841] sm:$0x3]
      %v1844 = vsel %vm618, %v1840, 0
      %v1847 = vsel %vm667, %v1842, 0
      %1849 = vmatprep.subr.bf16.mxu0 0
      %1850 = vmatpush1.bf16.msra.mxu0 0
      %1851 = vmatprep.subr.bf16.mxu0 0
      %1852 = vmatpush1.bf16.msra.mxu0 0
      %1853 = vmatprep.subr.bf16.mxu0 0
      %1854 = vmatpush1.bf16.msra.mxu0 0
      %1855 = vmatprep.subr.bf16.mxu0 0
      %1856 = vmatpush1.bf16.msra.mxu0 0
      %1857 = vmatprep.subr.bf16.mxu0 0
      %1858 = vmatpush1.bf16.msra.mxu0 0
      %1859 = vmatprep.subr.bf16.mxu0 0
      %1860 = vmatpush1.bf16.msra.mxu0 0
      %1861 = vmatprep.subr.bf16.mxu0 0
      %1862 = vmatpush1.bf16.msra.mxu0 0
      %1863 = vmatprep.subr.bf16.mxu0 0
      %1864 = vmatpush1.bf16.msra.mxu0 %v1847
      %1865 = vmatprep.subr.bf16.mxu0 0
      %1866 = vmatpush2.bf16.msra.mxu0 0
      %1867 = vmatprep.subr.bf16.mxu0 0
      %1868 = vmatpush2.bf16.msra.mxu0 0
      %1869 = vmatprep.subr.bf16.mxu0 0
      %1870 = vmatpush2.bf16.msra.mxu0 0
      %1871 = vmatprep.subr.bf16.mxu0 0
      %1872 = vmatpush2.bf16.msra.mxu0 0
      %1873 = vmatprep.subr.bf16.mxu0 0
      %1874 = vmatpush2.bf16.msra.mxu0 0
      %1875 = vmatprep.subr.bf16.mxu0 0
      %1876 = vmatpush2.bf16.msra.mxu0 0
      %1877 = vmatprep.subr.bf16.mxu0 0
      %1878 = vmatpush2.bf16.msra.mxu0 0
      %1879 = vmatprep.subr.bf16.mxu0 0
      %1880 = vmatpush2.bf16.msra.mxu0 0
      %1881 = vmatprep.mubr.bf16.mxu0 0
      %1882 = vmatmul.mubr.bf16.gmra.mxu0 %v1179
      %v1883 = vpop.f32.mrf.mxu0
      %v1884 = vadd.f32 0.0, %v1883
      %v1885 = vpop.f32.mrf.mxu0
      %v1886 = vpop.f32.mrf.mxu0
      %v1887 = vadd.f32 0.0, %v1886
      %v1888 = vpop.f32.mrf.mxu0
      %1889 = vmatprep.mubr.bf16.mxu0 0
      %1890 = vmatmul.mubr.bf16.gmra.mxu0 %v1182
      %v1891 = vpop.f32.mrf.mxu0
      %v1892 = vadd.f32 0.0, %v1891
      %v1893 = vpop.f32.mrf.mxu0
      %v1894 = vpop.f32.mrf.mxu0
      %v1895 = vadd.f32 0.0, %v1894
      %v1896 = vpop.f32.mrf.mxu0
      %1897 = vmatprep.mubr.bf16.mxu0 0
      %1898 = vmatmul.mubr.bf16.gmra.mxu0 %v1185
      %v1899 = vpop.f32.mrf.mxu0
      %v1900 = vadd.f32 0.0, %v1899
      %v1901 = vpop.f32.mrf.mxu0
      %v1902 = vpop.f32.mrf.mxu0
      %v1903 = vadd.f32 0.0, %v1902
      %v1904 = vpop.f32.mrf.mxu0
      %1905 = vmatprep.mubr.bf16.mxu0 0
      %1906 = vmatmul.mubr.bf16.gmra.mxu0 %v1188
      %v1907 = vpop.f32.mrf.mxu0
      %v1908 = vadd.f32 0.0, %v1907
      %v1909 = vpop.f32.mrf.mxu0
      %v1910 = vpop.f32.mrf.mxu0
      %v1911 = vadd.f32 0.0, %v1910
      %v1912 = vpop.f32.mrf.mxu0
      %1913 = vmatprep.mubr.bf16.mxu0 0
      %1914 = vmatmul.mubr.bf16.gmra.mxu0 %v1191
      %v1915 = vpop.f32.mrf.mxu0
      %v1916 = vadd.f32 0.0, %v1915
      %v1917 = vpop.f32.mrf.mxu0
      %v1918 = vpop.f32.mrf.mxu0
      %v1919 = vadd.f32 0.0, %v1918
      %v1920 = vpop.f32.mrf.mxu0
      %1921 = vmatprep.mubr.bf16.mxu0 0
      %1922 = vmatmul.mubr.bf16.gmra.mxu0 %v1194
      %v1923 = vpop.f32.mrf.mxu0
      %v1924 = vadd.f32 0.0, %v1923
      %v1925 = vpop.f32.mrf.mxu0
      %v1926 = vpop.f32.mrf.mxu0
      %v1927 = vadd.f32 0.0, %v1926
      %v1928 = vpop.f32.mrf.mxu0
      %1929 = vmatprep.mubr.bf16.mxu0 0
      %1930 = vmatmul.mubr.bf16.gmra.mxu0 %v1197
      %v1931 = vpop.f32.mrf.mxu0
      %v1932 = vadd.f32 0.0, %v1931
      %v1933 = vpop.f32.mrf.mxu0
      %v1934 = vpop.f32.mrf.mxu0
      %v1935 = vadd.f32 0.0, %v1934
      %v1936 = vpop.f32.mrf.mxu0
      %1937 = vmatprep.mubr.bf16.mxu0 0
      %1938 = vmatmul.mubr.bf16.gmra.mxu0 %v1200
      %v1939 = vpop.f32.mrf.mxu0
      %v1940 = vadd.f32 0.0, %v1939
      %v1941 = vpop.f32.mrf.mxu0
      %v1942 = vpop.f32.mrf.mxu0
      %v1943 = vadd.f32 0.0, %v1942
      %v1944 = vpop.f32.mrf.mxu0
      %1945 = vmatprep.mubr.bf16.mxu0 0
      %1946 = vmatmul.mubr.bf16.gmra.mxu0 %v1203
      %v1947 = vpop.f32.mrf.mxu0
      %v1948 = vadd.f32 0.0, %v1947
      %v1949 = vpop.f32.mrf.mxu0
      %v1950 = vpop.f32.mrf.mxu0
      %v1951 = vadd.f32 0.0, %v1950
      %v1952 = vpop.f32.mrf.mxu0
      %1953 = vmatprep.mubr.bf16.mxu0 0
      %1954 = vmatmul.mubr.bf16.gmra.mxu0 %v1206
      %v1955 = vpop.f32.mrf.mxu0
      %v1956 = vadd.f32 0.0, %v1955
      %v1957 = vpop.f32.mrf.mxu0
      %v1958 = vpop.f32.mrf.mxu0
      %v1959 = vadd.f32 0.0, %v1958
      %v1960 = vpop.f32.mrf.mxu0
      %1961 = vmatprep.mubr.bf16.mxu0 0
      %1962 = vmatmul.mubr.bf16.gmra.mxu0 %v1209
      %v1963 = vpop.f32.mrf.mxu0
      %v1964 = vadd.f32 0.0, %v1963
      %v1965 = vpop.f32.mrf.mxu0
      %v1966 = vpop.f32.mrf.mxu0
      %v1967 = vadd.f32 0.0, %v1966
      %v1968 = vpop.f32.mrf.mxu0
      %1969 = vmatprep.mubr.bf16.mxu0 0
      %1970 = vmatmul.mubr.bf16.gmra.mxu0 %v1212
      %v1971 = vpop.f32.mrf.mxu0
      %v1972 = vadd.f32 0.0, %v1971
      %v1973 = vpop.f32.mrf.mxu0
      %v1974 = vpop.f32.mrf.mxu0
      %v1975 = vadd.f32 0.0, %v1974
      %v1976 = vpop.f32.mrf.mxu0
      %1977 = vmatprep.mubr.bf16.mxu0 0
      %1978 = vmatmul.mubr.bf16.gmra.mxu0 %v1215
      %v1979 = vpop.f32.mrf.mxu0
      %v1980 = vadd.f32 0.0, %v1979
      %v1981 = vpop.f32.mrf.mxu0
      %v1982 = vpop.f32.mrf.mxu0
      %v1983 = vadd.f32 0.0, %v1982
      %v1984 = vpop.f32.mrf.mxu0
      %1985 = vmatprep.mubr.bf16.mxu0 0
      %1986 = vmatmul.mubr.bf16.gmra.mxu0 %v1218
      %v1987 = vpop.f32.mrf.mxu0
      %v1988 = vadd.f32 0.0, %v1987
      %v1989 = vpop.f32.mrf.mxu0
      %v1990 = vpop.f32.mrf.mxu0
      %v1991 = vadd.f32 0.0, %v1990
      %v1992 = vpop.f32.mrf.mxu0
      %1993 = vmatprep.mubr.bf16.mxu0 0
      %1994 = vmatmul.mubr.bf16.gmra.mxu0 %v1221
      %v1995 = vpop.f32.mrf.mxu0
      %v1996 = vadd.f32 0.0, %v1995
      %v1997 = vpop.f32.mrf.mxu0
      %v1998 = vpop.f32.mrf.mxu0
      %v1999 = vadd.f32 0.0, %v1998
      %v2000 = vpop.f32.mrf.mxu0
      %2001 = vmatprep.mubr.bf16.mxu0 0
      %2002 = vmatmul.mubr.bf16.gmra.mxu0 %v1844
      %v2003 = vpop.f32.mrf.mxu0
      %v2004 = vadd.f32 0.0, %v2003
      %v2005 = vpop.f32.mrf.mxu0
      %v2006 = vpop.f32.mrf.mxu0
      %v2007 = vadd.f32 0.0, %v2006
      %v2008 = vpop.f32.mrf.mxu0
      %2009 = vdwg.mxu0
      %v2010 = vadd.f32 %v1801, %v1884
      %v2011 = vadd.f32 %v1802, %v1887
      %v2012 = vadd.f32 %v1803, %v1892
      %v2013 = vadd.f32 %v1804, %v1895
      %v2014 = vadd.f32 %v1805, %v1900
      %v2015 = vadd.f32 %v1806, %v1903
      %v2016 = vadd.f32 %v1807, %v1908
      %v2017 = vadd.f32 %v1808, %v1911
      %v2018 = vadd.f32 %v1809, %v1916
      %v2019 = vadd.f32 %v1810, %v1919
      %v2020 = vadd.f32 %v1811, %v1924
      %v2021 = vadd.f32 %v1812, %v1927
      %v2022 = vadd.f32 %v1813, %v1932
      %v2023 = vadd.f32 %v1814, %v1935
      %v2024 = vadd.f32 %v1815, %v1940
      %v2025 = vadd.f32 %v1816, %v1943
      %v2026 = vadd.f32 %v1817, %v1948
      %v2027 = vadd.f32 %v1818, %v1951
      %v2028 = vadd.f32 %v1819, %v1956
      %v2029 = vadd.f32 %v1820, %v1959
      %v2030 = vadd.f32 %v1821, %v1964
      %v2031 = vadd.f32 %v1822, %v1967
      %v2032 = vadd.f32 %v1823, %v1972
      %v2033 = vadd.f32 %v1824, %v1975
      %v2034 = vadd.f32 %v1825, %v1980
      %v2035 = vadd.f32 %v1826, %v1983
      %v2036 = vadd.f32 %v1827, %v1988
      %v2037 = vadd.f32 %v1828, %v1991
      %v2038 = vadd.f32 %v1829, %v1996
      %v2039 = vadd.f32 %v1830, %v1999
      %v2040 = vadd.f32 %v1831, %v2004
      %v2041 = vadd.f32 %v1832, %v2007
      %v2042 = vpack.c.bf16 %v420, %v419
      %s2043 = scalar_lea.vmem %s3, 12
      %v2044 = vld [vmem:[%s2043] sm:$0x3]
      %v2046 = vsel %vm618, %v2042, 0
      %v2049 = vsel %vm667, %v2044, 0
      %2051 = vmatprep.subr.bf16.mxu0 0
      %2052 = vmatpush1.bf16.msra.mxu0 0
      %2053 = vmatprep.subr.bf16.mxu0 0
      %2054 = vmatpush1.bf16.msra.mxu0 0
      %2055 = vmatprep.subr.bf16.mxu0 0
      %2056 = vmatpush1.bf16.msra.mxu0 0
      %2057 = vmatprep.subr.bf16.mxu0 0
      %2058 = vmatpush1.bf16.msra.mxu0 0
      %2059 = vmatprep.subr.bf16.mxu0 0
      %2060 = vmatpush1.bf16.msra.mxu0 0
      %2061 = vmatprep.subr.bf16.mxu0 0
      %2062 = vmatpush1.bf16.msra.mxu0 0
      %2063 = vmatprep.subr.bf16.mxu0 0
      %2064 = vmatpush1.bf16.msra.mxu0 0
      %2065 = vmatprep.subr.bf16.mxu0 0
      %2066 = vmatpush1.bf16.msra.mxu0 %v2049
      %2067 = vmatprep.subr.bf16.mxu0 0
      %2068 = vmatpush2.bf16.msra.mxu0 0
      %2069 = vmatprep.subr.bf16.mxu0 0
      %2070 = vmatpush2.bf16.msra.mxu0 0
      %2071 = vmatprep.subr.bf16.mxu0 0
      %2072 = vmatpush2.bf16.msra.mxu0 0
      %2073 = vmatprep.subr.bf16.mxu0 0
      %2074 = vmatpush2.bf16.msra.mxu0 0
      %2075 = vmatprep.subr.bf16.mxu0 0
      %2076 = vmatpush2.bf16.msra.mxu0 0
      %2077 = vmatprep.subr.bf16.mxu0 0
      %2078 = vmatpush2.bf16.msra.mxu0 0
      %2079 = vmatprep.subr.bf16.mxu0 0
      %2080 = vmatpush2.bf16.msra.mxu0 0
      %2081 = vmatprep.subr.bf16.mxu0 0
      %2082 = vmatpush2.bf16.msra.mxu0 0
      %2083 = vmatprep.mubr.bf16.mxu0 0
      %2084 = vmatmul.mubr.bf16.gmra.mxu0 %v839
      %v2085 = vpop.f32.mrf.mxu0
      %v2086 = vadd.f32 0.0, %v2085
      %v2087 = vpop.f32.mrf.mxu0
      %v2088 = vpop.f32.mrf.mxu0
      %v2089 = vadd.f32 0.0, %v2088
      %v2090 = vpop.f32.mrf.mxu0
      %2091 = vmatprep.mubr.bf16.mxu0 0
      %2092 = vmatmul.mubr.bf16.gmra.mxu0 %v842
      %v2093 = vpop.f32.mrf.mxu0
      %v2094 = vadd.f32 0.0, %v2093
      %v2095 = vpop.f32.mrf.mxu0
      %v2096 = vpop.f32.mrf.mxu0
      %v2097 = vadd.f32 0.0, %v2096
      %v2098 = vpop.f32.mrf.mxu0
      %2099 = vmatprep.mubr.bf16.mxu0 0
      %2100 = vmatmul.mubr.bf16.gmra.mxu0 %v845
      %v2101 = vpop.f32.mrf.mxu0
      %v2102 = vadd.f32 0.0, %v2101
      %v2103 = vpop.f32.mrf.mxu0
      %v2104 = vpop.f32.mrf.mxu0
      %v2105 = vadd.f32 0.0, %v2104
      %v2106 = vpop.f32.mrf.mxu0
      %2107 = vmatprep.mubr.bf16.mxu0 0
      %2108 = vmatmul.mubr.bf16.gmra.mxu0 %v848
      %v2109 = vpop.f32.mrf.mxu0
      %v2110 = vadd.f32 0.0, %v2109
      %v2111 = vpop.f32.mrf.mxu0
      %v2112 = vpop.f32.mrf.mxu0
      %v2113 = vadd.f32 0.0, %v2112
      %v2114 = vpop.f32.mrf.mxu0
      %2115 = vmatprep.mubr.bf16.mxu0 0
      %2116 = vmatmul.mubr.bf16.gmra.mxu0 %v851
      %v2117 = vpop.f32.mrf.mxu0
      %v2118 = vadd.f32 0.0, %v2117
      %v2119 = vpop.f32.mrf.mxu0
      %v2120 = vpop.f32.mrf.mxu0
      %v2121 = vadd.f32 0.0, %v2120
      %v2122 = vpop.f32.mrf.mxu0
      %2123 = vmatprep.mubr.bf16.mxu0 0
      %2124 = vmatmul.mubr.bf16.gmra.mxu0 %v854
      %v2125 = vpop.f32.mrf.mxu0
      %v2126 = vadd.f32 0.0, %v2125
      %v2127 = vpop.f32.mrf.mxu0
      %v2128 = vpop.f32.mrf.mxu0
      %v2129 = vadd.f32 0.0, %v2128
      %v2130 = vpop.f32.mrf.mxu0
      %2131 = vmatprep.mubr.bf16.mxu0 0
      %2132 = vmatmul.mubr.bf16.gmra.mxu0 %v857
      %v2133 = vpop.f32.mrf.mxu0
      %v2134 = vadd.f32 0.0, %v2133
      %v2135 = vpop.f32.mrf.mxu0
      %v2136 = vpop.f32.mrf.mxu0
      %v2137 = vadd.f32 0.0, %v2136
      %v2138 = vpop.f32.mrf.mxu0
      %2139 = vmatprep.mubr.bf16.mxu0 0
      %2140 = vmatmul.mubr.bf16.gmra.mxu0 %v860
      %v2141 = vpop.f32.mrf.mxu0
      %v2142 = vadd.f32 0.0, %v2141
      %v2143 = vpop.f32.mrf.mxu0
      %v2144 = vpop.f32.mrf.mxu0
      %v2145 = vadd.f32 0.0, %v2144
      %v2146 = vpop.f32.mrf.mxu0
      %2147 = vmatprep.mubr.bf16.mxu0 0
      %2148 = vmatmul.mubr.bf16.gmra.mxu0 %v863
      %v2149 = vpop.f32.mrf.mxu0
      %v2150 = vadd.f32 0.0, %v2149
      %v2151 = vpop.f32.mrf.mxu0
      %v2152 = vpop.f32.mrf.mxu0
      %v2153 = vadd.f32 0.0, %v2152
      %v2154 = vpop.f32.mrf.mxu0
      %2155 = vmatprep.mubr.bf16.mxu0 0
      %2156 = vmatmul.mubr.bf16.gmra.mxu0 %v866
      %v2157 = vpop.f32.mrf.mxu0
      %v2158 = vadd.f32 0.0, %v2157
      %v2159 = vpop.f32.mrf.mxu0
      %v2160 = vpop.f32.mrf.mxu0
      %v2161 = vadd.f32 0.0, %v2160
      %v2162 = vpop.f32.mrf.mxu0
      %2163 = vmatprep.mubr.bf16.mxu0 0
      %2164 = vmatmul.mubr.bf16.gmra.mxu0 %v869
      %v2165 = vpop.f32.mrf.mxu0
      %v2166 = vadd.f32 0.0, %v2165
      %v2167 = vpop.f32.mrf.mxu0
      %v2168 = vpop.f32.mrf.mxu0
      %v2169 = vadd.f32 0.0, %v2168
      %v2170 = vpop.f32.mrf.mxu0
      %2171 = vmatprep.mubr.bf16.mxu0 0
      %2172 = vmatmul.mubr.bf16.gmra.mxu0 %v872
      %v2173 = vpop.f32.mrf.mxu0
      %v2174 = vadd.f32 0.0, %v2173
      %v2175 = vpop.f32.mrf.mxu0
      %v2176 = vpop.f32.mrf.mxu0
      %v2177 = vadd.f32 0.0, %v2176
      %v2178 = vpop.f32.mrf.mxu0
      %2179 = vmatprep.mubr.bf16.mxu0 0
      %2180 = vmatmul.mubr.bf16.gmra.mxu0 %v875
      %v2181 = vpop.f32.mrf.mxu0
      %v2182 = vadd.f32 0.0, %v2181
      %v2183 = vpop.f32.mrf.mxu0
      %v2184 = vpop.f32.mrf.mxu0
      %v2185 = vadd.f32 0.0, %v2184
      %v2186 = vpop.f32.mrf.mxu0
      %2187 = vmatprep.mubr.bf16.mxu0 0
      %2188 = vmatmul.mubr.bf16.gmra.mxu0 %v878
      %v2189 = vpop.f32.mrf.mxu0
      %v2190 = vadd.f32 0.0, %v2189
      %v2191 = vpop.f32.mrf.mxu0
      %v2192 = vpop.f32.mrf.mxu0
      %v2193 = vadd.f32 0.0, %v2192
      %v2194 = vpop.f32.mrf.mxu0
      %2195 = vmatprep.mubr.bf16.mxu0 0
      %2196 = vmatmul.mubr.bf16.gmra.mxu0 %v1423
      %v2197 = vpop.f32.mrf.mxu0
      %v2198 = vadd.f32 0.0, %v2197
      %v2199 = vpop.f32.mrf.mxu0
      %v2200 = vpop.f32.mrf.mxu0
      %v2201 = vadd.f32 0.0, %v2200
      %v2202 = vpop.f32.mrf.mxu0
      %2203 = vmatprep.mubr.bf16.mxu0 0
      %2204 = vmatmul.mubr.bf16.gmra.mxu0 %v2046
      %v2205 = vpop.f32.mrf.mxu0
      %v2206 = vadd.f32 0.0, %v2205
      %v2207 = vpop.f32.mrf.mxu0
      %v2208 = vpop.f32.mrf.mxu0
      %v2209 = vadd.f32 0.0, %v2208
      %v2210 = vpop.f32.mrf.mxu0
      %2211 = vdwg.mxu0
      %v2212 = vadd.f32 %v2010, %v2086
      %v2213 = vadd.f32 %v2011, %v2089
      %v2214 = vadd.f32 %v2012, %v2094
      %v2215 = vadd.f32 %v2013, %v2097
      %v2216 = vadd.f32 %v2014, %v2102
      %v2217 = vadd.f32 %v2015, %v2105
      %v2218 = vadd.f32 %v2016, %v2110
      %v2219 = vadd.f32 %v2017, %v2113
      %v2220 = vadd.f32 %v2018, %v2118
      %v2221 = vadd.f32 %v2019, %v2121
      %v2222 = vadd.f32 %v2020, %v2126
      %v2223 = vadd.f32 %v2021, %v2129
      %v2224 = vadd.f32 %v2022, %v2134
      %v2225 = vadd.f32 %v2023, %v2137
      %v2226 = vadd.f32 %v2024, %v2142
      %v2227 = vadd.f32 %v2025, %v2145
      %v2228 = vadd.f32 %v2026, %v2150
      %v2229 = vadd.f32 %v2027, %v2153
      %v2230 = vadd.f32 %v2028, %v2158
      %v2231 = vadd.f32 %v2029, %v2161
      %v2232 = vadd.f32 %v2030, %v2166
      %v2233 = vadd.f32 %v2031, %v2169
      %v2234 = vadd.f32 %v2032, %v2174
      %v2235 = vadd.f32 %v2033, %v2177
      %v2236 = vadd.f32 %v2034, %v2182
      %v2237 = vadd.f32 %v2035, %v2185
      %v2238 = vadd.f32 %v2036, %v2190
      %v2239 = vadd.f32 %v2037, %v2193
      %v2240 = vadd.f32 %v2038, %v2198
      %v2241 = vadd.f32 %v2039, %v2201
      %v2242 = vadd.f32 %v2040, %v2206
      %v2243 = vadd.f32 %v2041, %v2209
      %v2247 = vrot.slane %v419, 1
      %v2248 = vrot.slane %v420, 1
      %v2249 = vsel %vm487, %v2247, %v2248
      %v2250 = vrot.slane %v421, 1
      %v2251 = vsel %vm487, %v2248, %v2250
      %v2254 = vpack.c.bf16 %v2251, %v2249
      %s2255 = scalar_lea.vmem %s3, 14
      %v2256 = vld [vmem:[%s2255] sm:$0x3]
      %v2258 = vsel %vm618, %v2254, 0
      %v2261 = vsel %vm667, %v2256, 0
      %2263 = vmatprep.subr.bf16.mxu0 0
      %2264 = vmatpush1.bf16.msra.mxu0 0
      %2265 = vmatprep.subr.bf16.mxu0 0
      %2266 = vmatpush1.bf16.msra.mxu0 0
      %2267 = vmatprep.subr.bf16.mxu0 0
      %2268 = vmatpush1.bf16.msra.mxu0 0
      %2269 = vmatprep.subr.bf16.mxu0 0
      %2270 = vmatpush1.bf16.msra.mxu0 0
      %2271 = vmatprep.subr.bf16.mxu0 0
      %2272 = vmatpush1.bf16.msra.mxu0 0
      %2273 = vmatprep.subr.bf16.mxu0 0
      %2274 = vmatpush1.bf16.msra.mxu0 0
      %2275 = vmatprep.subr.bf16.mxu0 0
      %2276 = vmatpush1.bf16.msra.mxu0 0
      %2277 = vmatprep.subr.bf16.mxu0 0
      %2278 = vmatpush1.bf16.msra.mxu0 %v2261
      %2279 = vmatprep.subr.bf16.mxu0 0
      %2280 = vmatpush2.bf16.msra.mxu0 0
      %2281 = vmatprep.subr.bf16.mxu0 0
      %2282 = vmatpush2.bf16.msra.mxu0 0
      %2283 = vmatprep.subr.bf16.mxu0 0
      %2284 = vmatpush2.bf16.msra.mxu0 0
      %2285 = vmatprep.subr.bf16.mxu0 0
      %2286 = vmatpush2.bf16.msra.mxu0 0
      %2287 = vmatprep.subr.bf16.mxu0 0
      %2288 = vmatpush2.bf16.msra.mxu0 0
      %2289 = vmatprep.subr.bf16.mxu0 0
      %2290 = vmatpush2.bf16.msra.mxu0 0
      %2291 = vmatprep.subr.bf16.mxu0 0
      %2292 = vmatpush2.bf16.msra.mxu0 0
      %2293 = vmatprep.subr.bf16.mxu0 0
      %2294 = vmatpush2.bf16.msra.mxu0 0
      %2295 = vmatprep.mubr.bf16.mxu0 0
      %2296 = vmatmul.mubr.bf16.gmra.mxu0 %v626
      %v2297 = vpop.f32.mrf.mxu0
      %v2298 = vadd.f32 0.0, %v2297
      %v2299 = vpop.f32.mrf.mxu0
      %v2300 = vpop.f32.mrf.mxu0
      %v2301 = vadd.f32 0.0, %v2300
      %v2302 = vpop.f32.mrf.mxu0
      %2303 = vmatprep.mubr.bf16.mxu0 0
      %2304 = vmatmul.mubr.bf16.gmra.mxu0 %v629
      %v2305 = vpop.f32.mrf.mxu0
      %v2306 = vadd.f32 0.0, %v2305
      %v2307 = vpop.f32.mrf.mxu0
      %v2308 = vpop.f32.mrf.mxu0
      %v2309 = vadd.f32 0.0, %v2308
      %v2310 = vpop.f32.mrf.mxu0
      %2311 = vmatprep.mubr.bf16.mxu0 0
      %2312 = vmatmul.mubr.bf16.gmra.mxu0 %v632
      %v2313 = vpop.f32.mrf.mxu0
      %v2314 = vadd.f32 0.0, %v2313
      %v2315 = vpop.f32.mrf.mxu0
      %v2316 = vpop.f32.mrf.mxu0
      %v2317 = vadd.f32 0.0, %v2316
      %v2318 = vpop.f32.mrf.mxu0
      %2319 = vmatprep.mubr.bf16.mxu0 0
      %2320 = vmatmul.mubr.bf16.gmra.mxu0 %v635
      %v2321 = vpop.f32.mrf.mxu0
      %v2322 = vadd.f32 0.0, %v2321
      %v2323 = vpop.f32.mrf.mxu0
      %v2324 = vpop.f32.mrf.mxu0
      %v2325 = vadd.f32 0.0, %v2324
      %v2326 = vpop.f32.mrf.mxu0
      %2327 = vmatprep.mubr.bf16.mxu0 0
      %2328 = vmatmul.mubr.bf16.gmra.mxu0 %v638
      %v2329 = vpop.f32.mrf.mxu0
      %v2330 = vadd.f32 0.0, %v2329
      %v2331 = vpop.f32.mrf.mxu0
      %v2332 = vpop.f32.mrf.mxu0
      %v2333 = vadd.f32 0.0, %v2332
      %v2334 = vpop.f32.mrf.mxu0
      %2335 = vmatprep.mubr.bf16.mxu0 0
      %2336 = vmatmul.mubr.bf16.gmra.mxu0 %v641
      %v2337 = vpop.f32.mrf.mxu0
      %v2338 = vadd.f32 0.0, %v2337
      %v2339 = vpop.f32.mrf.mxu0
      %v2340 = vpop.f32.mrf.mxu0
      %v2341 = vadd.f32 0.0, %v2340
      %v2342 = vpop.f32.mrf.mxu0
      %2343 = vmatprep.mubr.bf16.mxu0 0
      %2344 = vmatmul.mubr.bf16.gmra.mxu0 %v644
      %v2345 = vpop.f32.mrf.mxu0
      %v2346 = vadd.f32 0.0, %v2345
      %v2347 = vpop.f32.mrf.mxu0
      %v2348 = vpop.f32.mrf.mxu0
      %v2349 = vadd.f32 0.0, %v2348
      %v2350 = vpop.f32.mrf.mxu0
      %2351 = vmatprep.mubr.bf16.mxu0 0
      %2352 = vmatmul.mubr.bf16.gmra.mxu0 %v647
      %v2353 = vpop.f32.mrf.mxu0
      %v2354 = vadd.f32 0.0, %v2353
      %v2355 = vpop.f32.mrf.mxu0
      %v2356 = vpop.f32.mrf.mxu0
      %v2357 = vadd.f32 0.0, %v2356
      %v2358 = vpop.f32.mrf.mxu0
      %2359 = vmatprep.mubr.bf16.mxu0 0
      %2360 = vmatmul.mubr.bf16.gmra.mxu0 %v650
      %v2361 = vpop.f32.mrf.mxu0
      %v2362 = vadd.f32 0.0, %v2361
      %v2363 = vpop.f32.mrf.mxu0
      %v2364 = vpop.f32.mrf.mxu0
      %v2365 = vadd.f32 0.0, %v2364
      %v2366 = vpop.f32.mrf.mxu0
      %2367 = vmatprep.mubr.bf16.mxu0 0
      %2368 = vmatmul.mubr.bf16.gmra.mxu0 %v653
      %v2369 = vpop.f32.mrf.mxu0
      %v2370 = vadd.f32 0.0, %v2369
      %v2371 = vpop.f32.mrf.mxu0
      %v2372 = vpop.f32.mrf.mxu0
      %v2373 = vadd.f32 0.0, %v2372
      %v2374 = vpop.f32.mrf.mxu0
      %2375 = vmatprep.mubr.bf16.mxu0 0
      %2376 = vmatmul.mubr.bf16.gmra.mxu0 %v656
      %v2377 = vpop.f32.mrf.mxu0
      %v2378 = vadd.f32 0.0, %v2377
      %v2379 = vpop.f32.mrf.mxu0
      %v2380 = vpop.f32.mrf.mxu0
      %v2381 = vadd.f32 0.0, %v2380
      %v2382 = vpop.f32.mrf.mxu0
      %2383 = vmatprep.mubr.bf16.mxu0 0
      %2384 = vmatmul.mubr.bf16.gmra.mxu0 %v659
      %v2385 = vpop.f32.mrf.mxu0
      %v2386 = vadd.f32 0.0, %v2385
      %v2387 = vpop.f32.mrf.mxu0
      %v2388 = vpop.f32.mrf.mxu0
      %v2389 = vadd.f32 0.0, %v2388
      %v2390 = vpop.f32.mrf.mxu0
      %2391 = vmatprep.mubr.bf16.mxu0 0
      %2392 = vmatmul.mubr.bf16.gmra.mxu0 %v662
      %v2393 = vpop.f32.mrf.mxu0
      %v2394 = vadd.f32 0.0, %v2393
      %v2395 = vpop.f32.mrf.mxu0
      %v2396 = vpop.f32.mrf.mxu0
      %v2397 = vadd.f32 0.0, %v2396
      %v2398 = vpop.f32.mrf.mxu0
      %2399 = vmatprep.mubr.bf16.mxu0 0
      %2400 = vmatmul.mubr.bf16.gmra.mxu0 %v665
      %v2401 = vpop.f32.mrf.mxu0
      %v2402 = vadd.f32 0.0, %v2401
      %v2403 = vpop.f32.mrf.mxu0
      %v2404 = vpop.f32.mrf.mxu0
      %v2405 = vadd.f32 0.0, %v2404
      %v2406 = vpop.f32.mrf.mxu0
      %2407 = vmatprep.mubr.bf16.mxu0 0
      %2408 = vmatmul.mubr.bf16.gmra.mxu0 %v1635
      %v2409 = vpop.f32.mrf.mxu0
      %v2410 = vadd.f32 0.0, %v2409
      %v2411 = vpop.f32.mrf.mxu0
      %v2412 = vpop.f32.mrf.mxu0
      %v2413 = vadd.f32 0.0, %v2412
      %v2414 = vpop.f32.mrf.mxu0
      %2415 = vmatprep.mubr.bf16.mxu0 0
      %2416 = vmatmul.mubr.bf16.gmra.mxu0 %v2258
      %v2417 = vpop.f32.mrf.mxu0
      %v2418 = vadd.f32 0.0, %v2417
      %v2419 = vpop.f32.mrf.mxu0
      %v2420 = vpop.f32.mrf.mxu0
      %v2421 = vadd.f32 0.0, %v2420
      %v2422 = vpop.f32.mrf.mxu0
      %2423 = vdwg.mxu0
      %v2424 = vadd.f32 %v2212, %v2298
      %v2425 = vadd.f32 %v2213, %v2301
      %v2426 = vadd.f32 %v2214, %v2306
      %v2427 = vadd.f32 %v2215, %v2309
      %v2428 = vadd.f32 %v2216, %v2314
      %v2429 = vadd.f32 %v2217, %v2317
      %v2430 = vadd.f32 %v2218, %v2322
      %v2431 = vadd.f32 %v2219, %v2325
      %v2432 = vadd.f32 %v2220, %v2330
      %v2433 = vadd.f32 %v2221, %v2333
      %v2434 = vadd.f32 %v2222, %v2338
      %v2435 = vadd.f32 %v2223, %v2341
      %v2436 = vadd.f32 %v2224, %v2346
      %v2437 = vadd.f32 %v2225, %v2349
      %v2438 = vadd.f32 %v2226, %v2354
      %v2439 = vadd.f32 %v2227, %v2357
      %v2440 = vadd.f32 %v2228, %v2362
      %v2441 = vadd.f32 %v2229, %v2365
      %v2442 = vadd.f32 %v2230, %v2370
      %v2443 = vadd.f32 %v2231, %v2373
      %v2444 = vadd.f32 %v2232, %v2378
      %v2445 = vadd.f32 %v2233, %v2381
      %v2446 = vadd.f32 %v2234, %v2386
      %v2447 = vadd.f32 %v2235, %v2389
      %v2448 = vadd.f32 %v2236, %v2394
      %v2449 = vadd.f32 %v2237, %v2397
      %v2450 = vadd.f32 %v2238, %v2402
      %v2451 = vadd.f32 %v2239, %v2405
      %v2452 = vadd.f32 %v2240, %v2410
      %v2453 = vadd.f32 %v2241, %v2413
      %v2454 = vadd.f32 %v2242, %v2418
      %v2455 = vadd.f32 %v2243, %v2421
      %v2456 = vrot.slane %v419, 2
      %v2457 = vrot.slane %v420, 2
      %v2458 = vsel %vm1044, %v2456, %v2457
      %v2459 = vrot.slane %v421, 2
      %v2460 = vsel %vm1044, %v2457, %v2459
      %v2463 = vpack.c.bf16 %v2460, %v2458
      %s2464 = scalar_lea.vmem %s3, 16
      %v2465 = vld [vmem:[%s2464] sm:$0x3]
      %v2467 = vsel %vm618, %v2463, 0
      %v2470 = vsel %vm667, %v2465, 0
      %2472 = vmatprep.subr.bf16.mxu0 0
      %2473 = vmatpush1.bf16.msra.mxu0 0
      %2474 = vmatprep.subr.bf16.mxu0 0
      %2475 = vmatpush1.bf16.msra.mxu0 0
      %2476 = vmatprep.subr.bf16.mxu0 0
      %2477 = vmatpush1.bf16.msra.mxu0 0
      %2478 = vmatprep.subr.bf16.mxu0 0
      %2479 = vmatpush1.bf16.msra.mxu0 0
      %2480 = vmatprep.subr.bf16.mxu0 0
      %2481 = vmatpush1.bf16.msra.mxu0 0
      %2482 = vmatprep.subr.bf16.mxu0 0
      %2483 = vmatpush1.bf16.msra.mxu0 0
      %2484 = vmatprep.subr.bf16.mxu0 0
      %2485 = vmatpush1.bf16.msra.mxu0 0
      %2486 = vmatprep.subr.bf16.mxu0 0
      %2487 = vmatpush1.bf16.msra.mxu0 %v2470
      %2488 = vmatprep.subr.bf16.mxu0 0
      %2489 = vmatpush2.bf16.msra.mxu0 0
      %2490 = vmatprep.subr.bf16.mxu0 0
      %2491 = vmatpush2.bf16.msra.mxu0 0
      %2492 = vmatprep.subr.bf16.mxu0 0
      %2493 = vmatpush2.bf16.msra.mxu0 0
      %2494 = vmatprep.subr.bf16.mxu0 0
      %2495 = vmatpush2.bf16.msra.mxu0 0
      %2496 = vmatprep.subr.bf16.mxu0 0
      %2497 = vmatpush2.bf16.msra.mxu0 0
      %2498 = vmatprep.subr.bf16.mxu0 0
      %2499 = vmatpush2.bf16.msra.mxu0 0
      %2500 = vmatprep.subr.bf16.mxu0 0
      %2501 = vmatpush2.bf16.msra.mxu0 0
      %2502 = vmatprep.subr.bf16.mxu0 0
      %2503 = vmatpush2.bf16.msra.mxu0 0
      %2504 = vmatprep.mubr.bf16.mxu0 0
      %2505 = vmatmul.mubr.bf16.gmra.mxu0 %v1182
      %v2506 = vpop.f32.mrf.mxu0
      %v2507 = vadd.f32 0.0, %v2506
      %v2508 = vpop.f32.mrf.mxu0
      %v2509 = vpop.f32.mrf.mxu0
      %v2510 = vadd.f32 0.0, %v2509
      %v2511 = vpop.f32.mrf.mxu0
      %2512 = vmatprep.mubr.bf16.mxu0 0
      %2513 = vmatmul.mubr.bf16.gmra.mxu0 %v1185
      %v2514 = vpop.f32.mrf.mxu0
      %v2515 = vadd.f32 0.0, %v2514
      %v2516 = vpop.f32.mrf.mxu0
      %v2517 = vpop.f32.mrf.mxu0
      %v2518 = vadd.f32 0.0, %v2517
      %v2519 = vpop.f32.mrf.mxu0
      %2520 = vmatprep.mubr.bf16.mxu0 0
      %2521 = vmatmul.mubr.bf16.gmra.mxu0 %v1188
      %v2522 = vpop.f32.mrf.mxu0
      %v2523 = vadd.f32 0.0, %v2522
      %v2524 = vpop.f32.mrf.mxu0
      %v2525 = vpop.f32.mrf.mxu0
      %v2526 = vadd.f32 0.0, %v2525
      %v2527 = vpop.f32.mrf.mxu0
      %2528 = vmatprep.mubr.bf16.mxu0 0
      %2529 = vmatmul.mubr.bf16.gmra.mxu0 %v1191
      %v2530 = vpop.f32.mrf.mxu0
      %v2531 = vadd.f32 0.0, %v2530
      %v2532 = vpop.f32.mrf.mxu0
      %v2533 = vpop.f32.mrf.mxu0
      %v2534 = vadd.f32 0.0, %v2533
      %v2535 = vpop.f32.mrf.mxu0
      %2536 = vmatprep.mubr.bf16.mxu0 0
      %2537 = vmatmul.mubr.bf16.gmra.mxu0 %v1194
      %v2538 = vpop.f32.mrf.mxu0
      %v2539 = vadd.f32 0.0, %v2538
      %v2540 = vpop.f32.mrf.mxu0
      %v2541 = vpop.f32.mrf.mxu0
      %v2542 = vadd.f32 0.0, %v2541
      %v2543 = vpop.f32.mrf.mxu0
      %2544 = vmatprep.mubr.bf16.mxu0 0
      %2545 = vmatmul.mubr.bf16.gmra.mxu0 %v1197
      %v2546 = vpop.f32.mrf.mxu0
      %v2547 = vadd.f32 0.0, %v2546
      %v2548 = vpop.f32.mrf.mxu0
      %v2549 = vpop.f32.mrf.mxu0
      %v2550 = vadd.f32 0.0, %v2549
      %v2551 = vpop.f32.mrf.mxu0
      %2552 = vmatprep.mubr.bf16.mxu0 0
      %2553 = vmatmul.mubr.bf16.gmra.mxu0 %v1200
      %v2554 = vpop.f32.mrf.mxu0
      %v2555 = vadd.f32 0.0, %v2554
      %v2556 = vpop.f32.mrf.mxu0
      %v2557 = vpop.f32.mrf.mxu0
      %v2558 = vadd.f32 0.0, %v2557
      %v2559 = vpop.f32.mrf.mxu0
      %2560 = vmatprep.mubr.bf16.mxu0 0
      %2561 = vmatmul.mubr.bf16.gmra.mxu0 %v1203
      %v2562 = vpop.f32.mrf.mxu0
      %v2563 = vadd.f32 0.0, %v2562
      %v2564 = vpop.f32.mrf.mxu0
      %v2565 = vpop.f32.mrf.mxu0
      %v2566 = vadd.f32 0.0, %v2565
      %v2567 = vpop.f32.mrf.mxu0
      %2568 = vmatprep.mubr.bf16.mxu0 0
      %2569 = vmatmul.mubr.bf16.gmra.mxu0 %v1206
      %v2570 = vpop.f32.mrf.mxu0
      %v2571 = vadd.f32 0.0, %v2570
      %v2572 = vpop.f32.mrf.mxu0
      %v2573 = vpop.f32.mrf.mxu0
      %v2574 = vadd.f32 0.0, %v2573
      %v2575 = vpop.f32.mrf.mxu0
      %2576 = vmatprep.mubr.bf16.mxu0 0
      %2577 = vmatmul.mubr.bf16.gmra.mxu0 %v1209
      %v2578 = vpop.f32.mrf.mxu0
      %v2579 = vadd.f32 0.0, %v2578
      %v2580 = vpop.f32.mrf.mxu0
      %v2581 = vpop.f32.mrf.mxu0
      %v2582 = vadd.f32 0.0, %v2581
      %v2583 = vpop.f32.mrf.mxu0
      %2584 = vmatprep.mubr.bf16.mxu0 0
      %2585 = vmatmul.mubr.bf16.gmra.mxu0 %v1212
      %v2586 = vpop.f32.mrf.mxu0
      %v2587 = vadd.f32 0.0, %v2586
      %v2588 = vpop.f32.mrf.mxu0
      %v2589 = vpop.f32.mrf.mxu0
      %v2590 = vadd.f32 0.0, %v2589
      %v2591 = vpop.f32.mrf.mxu0
      %2592 = vmatprep.mubr.bf16.mxu0 0
      %2593 = vmatmul.mubr.bf16.gmra.mxu0 %v1215
      %v2594 = vpop.f32.mrf.mxu0
      %v2595 = vadd.f32 0.0, %v2594
      %v2596 = vpop.f32.mrf.mxu0
      %v2597 = vpop.f32.mrf.mxu0
      %v2598 = vadd.f32 0.0, %v2597
      %v2599 = vpop.f32.mrf.mxu0
      %2600 = vmatprep.mubr.bf16.mxu0 0
      %2601 = vmatmul.mubr.bf16.gmra.mxu0 %v1218
      %v2602 = vpop.f32.mrf.mxu0
      %v2603 = vadd.f32 0.0, %v2602
      %v2604 = vpop.f32.mrf.mxu0
      %v2605 = vpop.f32.mrf.mxu0
      %v2606 = vadd.f32 0.0, %v2605
      %v2607 = vpop.f32.mrf.mxu0
      %2608 = vmatprep.mubr.bf16.mxu0 0
      %2609 = vmatmul.mubr.bf16.gmra.mxu0 %v1221
      %v2610 = vpop.f32.mrf.mxu0
      %v2611 = vadd.f32 0.0, %v2610
      %v2612 = vpop.f32.mrf.mxu0
      %v2613 = vpop.f32.mrf.mxu0
      %v2614 = vadd.f32 0.0, %v2613
      %v2615 = vpop.f32.mrf.mxu0
      %2616 = vmatprep.mubr.bf16.mxu0 0
      %2617 = vmatmul.mubr.bf16.gmra.mxu0 %v1844
      %v2618 = vpop.f32.mrf.mxu0
      %v2619 = vadd.f32 0.0, %v2618
      %v2620 = vpop.f32.mrf.mxu0
      %v2621 = vpop.f32.mrf.mxu0
      %v2622 = vadd.f32 0.0, %v2621
      %v2623 = vpop.f32.mrf.mxu0
      %2624 = vmatprep.mubr.bf16.mxu0 0
      %2625 = vmatmul.mubr.bf16.gmra.mxu0 %v2467
      %v2626 = vpop.f32.mrf.mxu0
      %v2627 = vadd.f32 0.0, %v2626
      %v2628 = vpop.f32.mrf.mxu0
      %v2629 = vpop.f32.mrf.mxu0
      %v2630 = vadd.f32 0.0, %v2629
      %v2631 = vpop.f32.mrf.mxu0
      %2632 = vdwg.mxu0
      %v2633 = vadd.f32 %v2424, %v2507
      %v2634 = vadd.f32 %v2425, %v2510
      %v2635 = vadd.f32 %v2426, %v2515
      %v2636 = vadd.f32 %v2427, %v2518
      %v2637 = vadd.f32 %v2428, %v2523
      %v2638 = vadd.f32 %v2429, %v2526
      %v2639 = vadd.f32 %v2430, %v2531
      %v2640 = vadd.f32 %v2431, %v2534
      %v2641 = vadd.f32 %v2432, %v2539
      %v2642 = vadd.f32 %v2433, %v2542
      %v2643 = vadd.f32 %v2434, %v2547
      %v2644 = vadd.f32 %v2435, %v2550
      %v2645 = vadd.f32 %v2436, %v2555
      %v2646 = vadd.f32 %v2437, %v2558
      %v2647 = vadd.f32 %v2438, %v2563
      %v2648 = vadd.f32 %v2439, %v2566
      %v2649 = vadd.f32 %v2440, %v2571
      %v2650 = vadd.f32 %v2441, %v2574
      %v2651 = vadd.f32 %v2442, %v2579
      %v2652 = vadd.f32 %v2443, %v2582
      %v2653 = vadd.f32 %v2444, %v2587
      %v2654 = vadd.f32 %v2445, %v2590
      %v2655 = vadd.f32 %v2446, %v2595
      %v2656 = vadd.f32 %v2447, %v2598
      %v2657 = vadd.f32 %v2448, %v2603
      %v2658 = vadd.f32 %v2449, %v2606
      %v2659 = vadd.f32 %v2450, %v2611
      %v2660 = vadd.f32 %v2451, %v2614
      %v2661 = vadd.f32 %v2452, %v2619
      %v2662 = vadd.f32 %v2453, %v2622
      %v2663 = vadd.f32 %v2454, %v2627
      %v2664 = vadd.f32 %v2455, %v2630
      %v2665 = vmax.f32 %v2633, 0.0
      %v2666 = vmax.f32 %v2634, 0.0
      %v2667 = vmax.f32 %v2635, 0.0
      %v2668 = vmax.f32 %v2636, 0.0
      %v2669 = vmax.f32 %v2637, 0.0
      %v2670 = vmax.f32 %v2638, 0.0
      %v2671 = vmax.f32 %v2639, 0.0
      %v2672 = vmax.f32 %v2640, 0.0
      %v2673 = vmax.f32 %v2641, 0.0
      %v2674 = vmax.f32 %v2642, 0.0
      %v2675 = vmax.f32 %v2643, 0.0
      %v2676 = vmax.f32 %v2644, 0.0
      %v2677 = vmax.f32 %v2645, 0.0
      %v2678 = vmax.f32 %v2646, 0.0
      %v2679 = vmax.f32 %v2647, 0.0
      %v2680 = vmax.f32 %v2648, 0.0
      %v2681 = vmax.f32 %v2649, 0.0
      %v2682 = vmax.f32 %v2650, 0.0
      %v2683 = vmax.f32 %v2651, 0.0
      %v2684 = vmax.f32 %v2652, 0.0
      %v2685 = vmax.f32 %v2653, 0.0
      %v2686 = vmax.f32 %v2654, 0.0
      %v2687 = vmax.f32 %v2655, 0.0
      %v2688 = vmax.f32 %v2656, 0.0
      %v2689 = vmax.f32 %v2657, 0.0
      %v2690 = vmax.f32 %v2658, 0.0
      %v2691 = vmax.f32 %v2659, 0.0
      %v2692 = vmax.f32 %v2660, 0.0
      %v2693 = vmax.f32 %v2661, 0.0
      %v2694 = vmax.f32 %v2662, 0.0
      %v2695 = vmax.f32 %v2663, 0.0
      %v2696 = vmax.f32 %v2664, 0.0
      %2697 = vst [vmem:[%s197] sm:$0xff] %v2665
      %2698 = vst [vmem:[%s197 + $0x8] sm:$0xff] %v2666
      %2699 = vst [vmem:[%s197 + $0x10] sm:$0xff] %v2667
      %2700 = vst [vmem:[%s197 + $0x18] sm:$0xff] %v2668
      %2701 = vst [vmem:[%s197 + $0x20] sm:$0xff] %v2669
      %2702 = vst [vmem:[%s197 + $0x28] sm:$0xff] %v2670
      %2703 = vst [vmem:[%s197 + $0x30] sm:$0xff] %v2671
      %2704 = vst [vmem:[%s197 + $0x38] sm:$0xff] %v2672
      %2705 = vst [vmem:[%s197 + $0x40] sm:$0xff] %v2673
      %2706 = vst [vmem:[%s197 + $0x48] sm:$0xff] %v2674
      %2707 = vst [vmem:[%s197 + $0x50] sm:$0xff] %v2675
      %2708 = vst [vmem:[%s197 + $0x58] sm:$0xff] %v2676
      %2709 = vst [vmem:[%s197 + $0x60] sm:$0xff] %v2677
      %2710 = vst [vmem:[%s197 + $0x68] sm:$0xff] %v2678
      %2711 = vst [vmem:[%s197 + $0x70] sm:$0xff] %v2679
      %2712 = vst [vmem:[%s197 + $0x78] sm:$0xff] %v2680
      %2713 = vst [vmem:[%s197 + $0x80] sm:$0xff] %v2681
      %2714 = vst [vmem:[%s197 + $0x88] sm:$0xff] %v2682
      %2715 = vst [vmem:[%s197 + $0x90] sm:$0xff] %v2683
      %2716 = vst [vmem:[%s197 + $0x98] sm:$0xff] %v2684
      %2717 = vst [vmem:[%s197 + $0xa0] sm:$0xff] %v2685
      %2718 = vst [vmem:[%s197 + $0xa8] sm:$0xff] %v2686
      %2719 = vst [vmem:[%s197 + $0xb0] sm:$0xff] %v2687
      %2720 = vst [vmem:[%s197 + $0xb8] sm:$0xff] %v2688
      %2721 = vst [vmem:[%s197 + $0xc0] sm:$0xff] %v2689
      %2722 = vst [vmem:[%s197 + $0xc8] sm:$0xff] %v2690
      %2723 = vst [vmem:[%s197 + $0xd0] sm:$0xff] %v2691
      %2724 = vst [vmem:[%s197 + $0xd8] sm:$0xff] %v2692
      %2725 = vst [vmem:[%s197 + $0xe0] sm:$0xff] %v2693
      %2726 = vst [vmem:[%s197 + $0xe8] sm:$0xff] %v2694
      %2727 = vst [vmem:[%s197 + $0xf0] sm:$0xff] %v2695
      %2728 = vst [vmem:[%s197 + $0xf8] sm:$0xff] %v2696
      %p2729 = scmp.lt.s32.totalorder %s15, 1
      %s2730 = scalar_select %p2729, %s15, 1
      %s2731 = smul.addr %s2730, 32
      %s2732 = smul.addr %s2731, 8
      %s2733 = scalar_lea.vmem %s4, %s2732
      // Predicated region
      $region37: #{relu_conv_bn.3} parent=35 // pred_check
        %p2734 = pneg %p122
      $region38: #{relu_conv_bn.3} parent=35 // pred_check_branch
        %2736 = sbr.rel (%p2734) target = $region40
      $region39: #{relu_conv_bn.3} parent=35 // pred_region
        _
      $region40: #{relu_conv_bn.3} parent=35 // pred_fallthru
        _
    $region36: #{relu_conv_bn.3} parent=5 // pred_fallthru
      _
    %p2737 = scmp.le.s32.totalorder 2, %s10
    // Predicated region
    $region41: #{relu_conv_bn.3} parent=5 // pred_check
      %p2738 = pneg %p2737
    $region42: #{relu_conv_bn.3} parent=5 // pred_check_branch
      %2740 = sbr.rel (%p2738) target = $region44
    $region43: #{relu_conv_bn.3} parent=5 // pred_region
      %s2741 = ssub.s32 %s10, 2
      // Predicated region
      $region45: #{relu_conv_bn.3} parent=43 // pred_check
        %p2742 = pneg %p128
      $region46: #{relu_conv_bn.3} parent=43 // pred_check_branch
        %2744 = sbr.rel (%p2742) target = $region48
      $region47: #{relu_conv_bn.3} parent=43 // pred_region
        %p2745 = scmp.lt.s32.totalorder %s16, 1
        %s2746 = scalar_select %p2745, %s16, 1
        %s2747 = smul.addr %s2746, 32
        %s2748 = smul.addr %s2747, 8
        %s2749 = scalar_lea.vmem %s4, %s2748
      $region48: #{relu_conv_bn.3} parent=43 // pred_fallthru
        _
    $region44: #{relu_conv_bn.3} parent=5 // pred_fallthru
      _
  $region6: #{relu_conv_bn.3} parent=0 // loop_footer
    %s14 = sadd.s32 1, %s10
  $region7: #{relu_conv_bn.3} parent=0 // loop_footer_branch
    %9 = sbr.rel target = $region3
  $region8: #{relu_conv_bn.3} parent=0 // loop_exit
    _

</llo_original>
